<compile_context>
chip_gen: v7x
topology: tpu7x:2x2x1
jax: 0.10.0
libtpu: 0.0.40
codegen_flags: <defaults>
</compile_context>

<pallas_src>
import functools

import jax
import jax.numpy as jnp
from jax.experimental import pallas as pl
from jax.experimental.pallas import tpu as pltpu


def _round_up(x: int, m: int) -> int:
    return ((x + m - 1) // m) * m


def _matsens_kernel(x_ref, a_ref, y_ref):
    # x_ref: (1, n*n)  -- resident across grid steps (constant block index), f32
    # a_ref: (TM, n*n) -- streamed tile of flattened sensing matrices
    # y_ref: (1, TM)   -- lane-dense output row
    # y[0, m] = sum_k X_flat[0, k] * A_flat[m, k]   (MXU matvec, f32 accumulate)
    a = a_ref[...].astype(x_ref.dtype)  # no-op for f32 A; keeps X in f32 otherwise
    y_ref[...] = jax.lax.dot_general(
        x_ref[...], a,
        dimension_numbers=(((1,), (1,)), ((), ())),
        preferred_element_type=jnp.float32,
        precision=jax.lax.Precision.HIGHEST,
    ).astype(y_ref.dtype)


def _default_tm(n2: int, itemsize: int) -> int:
    """Per-generation default measurement tile (multiple of 128).

    One A tile is tm * n2 * itemsize bytes, double-buffered by the pipeline.
    v5e scoped-VMEM default is 16 MiB -> ~4 MiB per A buffer.
    v6e / v7x scoped default is 32 MiB -> ~8 MiB per A buffer.
    """
    try:
        kind = jax.devices()[0].device_kind.lower()
    except Exception:
        kind = ""
    is_v5e = ("v5" in kind) and ("lite" in kind or "5e" in kind)
    budget = (4 << 20) if is_v5e else (8 << 20)
    tm = (budget // (n2 * itemsize) // 128) * 128
    return max(128, tm)


def matrix_sensing_forward(U, A, *, tm: int | None = None):
    """U: (n, n), A: (M, n, n) -> y: (M,) float32."""
    M, n, n_b = A.shape
    assert n == n_b and U.shape == (n, n)
    n2 = n * n

    # --- Step 1: X = U @ U.T once, in the wrapper (no extra pallas_call). ---
    Uf = U.astype(jnp.float32)
    X = jax.lax.dot_general(
        Uf, Uf,
        dimension_numbers=(((1,), (1,)), ((), ())),  # contract last dims: U @ U.T
        preferred_element_type=jnp.float32,
        precision=jax.lax.Precision.HIGHEST,
    )
    x_flat = X.reshape(1, n2)  # kept in f32 regardless of A.dtype

    # --- Step 2: stream lane-dense A tiles and contract on the MXU. ---
    a_flat = A.reshape(M, n2)  # contiguous -> free lane-dense view (inside jit)

    if tm is None:
        tm = _default_tm(n2, jnp.dtype(A.dtype).itemsize)
    tm = max(128, _round_up(tm, 128))
    tm = min(tm, _round_up(M, 128))            # never over-tile past M
    if M > 128:
        # Keep >=2 grid tiles so v7x's two TensorCores both get work
        # (harmless on single-TC v5e/v6e).
        tm = min(tm, _round_up(pl.cdiv(M, 2), 128))

    num_tiles = pl.cdiv(M, tm)
    m_pad = num_tiles * tm  # pad only the tiny OUTPUT row; A itself is NOT padded:
                            # the last input block overhangs M and Pallas clamps
                            # the DMA (tail entries are garbage, sliced off below).

    y_row = pl.pallas_call(
        _matsens_kernel,
        out_shape=jax.ShapeDtypeStruct((1, m_pad), jnp.float32),
        grid=(num_tiles,),
        in_specs=[
            pl.BlockSpec((1, n2), lambda m: (0, 0)),    # X_flat: constant index -> resident
            pl.BlockSpec((tm, n2), lambda m: (m, 0)),   # A tile over measurements
        ],
        out_specs=pl.BlockSpec((1, tm), lambda m: (0, m)),  # lane-dense output row
        compiler_params=pltpu.CompilerParams(
            dimension_semantics=("parallel",)),
    )(x_flat, a_flat)

    # Entries >= M were computed from out-of-bounds A rows: drop them before
    # any downstream use.
    return y_row.reshape(m_pad)[:M]


if __name__ == "__main__":
    # Small shapes consistent with the module: n_dim = 32, M = 300 measurements
    # (not a multiple of the tile, exercising the clamped ragged tail; the
    # >=2-tile rule gives a 2-step pipelined grid here).
    n_dim = 32
    M = 300

    # Deterministic parameter init matching MatrixSensingModel.__init__:
    # U = eye(n) / ||eye(n)||_F
    U = jnp.eye(n_dim, dtype=jnp.float32)
    U = U / jnp.linalg.norm(U)

    # Deterministic example sensing matrices A.
    key = jax.random.PRNGKey(0)
    A = jax.random.normal(key, (M, n_dim, n_dim), dtype=jnp.float32)

    # One jit around reshape + pallas_call so the (M, n*n) view of A is free.
    fwd = jax.jit(matrix_sensing_forward, static_argnames=("tm",))
    y = fwd(U, A)
    y = jax.block_until_ready(y)

    # Pure-JAX reference check (full f32 precision).
    X_ref = jnp.dot(U, U.T, precision=jax.lax.Precision.HIGHEST)
    y_ref = jnp.einsum('mij,ij->m', A, X_ref, precision=jax.lax.Precision.HIGHEST)
    assert y.shape == (M,)
    assert jnp.allclose(y, y_ref, atol=1e-5, rtol=1e-5), (y, y_ref)

    print("KERNEL_OK")
</pallas_src>

<mosaic_0001>
module attributes {stable_mosaic.version = 11 : i64} {
  func.func @_matsens_kernel(%arg0: i32, %arg1: memref<1x1024xf32, #tpu.memory_space<vmem>>, %arg2: memref<256x1024xf32, #tpu.memory_space<vmem>>, %arg3: memref<1x256xf32, #tpu.memory_space<vmem>>) attributes {dimension_semantics = [#tpu.dimension_semantics<parallel>], iteration_bounds = array<i64: 2>, scalar_prefetch = 0 : i64, scratch_operands = 0 : i64, tpu.core_type = #tpu.core_type<tc>, window_params = [{pipeline_mode = #tpu.pipeline_mode<synchronous>, transform_indices = @transform_0, window_bounds = array<i64: 1, 1024>}, {transform_indices = @transform_1, window_bounds = array<i64: 256, 1024>}, {transform_indices = @transform_2, window_bounds = array<i64: 1, 256>}]} {
    %c0 = arith.constant 0 : index
    %c0_0 = arith.constant 0 : index
    %0 = vector.load %arg2[%c0, %c0_0] : memref<256x1024xf32, #tpu.memory_space<vmem>>, vector<256x1024xf32>
    %c0_1 = arith.constant 0 : index
    %c0_2 = arith.constant 0 : index
    %1 = vector.load %arg1[%c0_1, %c0_2] : memref<1x1024xf32, #tpu.memory_space<vmem>>, vector<1x1024xf32>
    %cst = arith.constant dense<0.000000e+00> : vector<1x256xf32>
    %2 = tpu.matmul %1, %0, %cst {dimension_numbers = #tpu.dot_dimension_numbers<[1], [1], [0], [0], [0, 0, 1, 0], [], []>, precision = #tpu.contract_precision<fp32>} : vector<1x1024xf32>, vector<256x1024xf32>, vector<1x256xf32> -> vector<1x256xf32>
    %c0_3 = arith.constant 0 : index
    %c0_4 = arith.constant 0 : index
    %3 = vector.load %arg3[%c0_3, %c0_4] : memref<1x256xf32, #tpu.memory_space<vmem>>, vector<1x256xf32>
    tpu.vector_store %arg3[%c0_3, %c0_4], %2 {strides = array<i32>} : memref<1x256xf32, #tpu.memory_space<vmem>>, vector<1x256xf32>,
    return
  }
  func.func @transform_0(%arg0: i32) -> (i32, i32) {
    %c0_i32 = arith.constant 0 : i32
    %c0_i32_0 = arith.constant 0 : i32
    %c0_i32_1 = arith.constant 0 : i32
    return %c0_i32, %c0_i32_0 : i32, i32
  }
  func.func @transform_1(%arg0: i32) -> (i32, i32) {
    %c0_i32 = arith.constant 0 : i32
    %c0_i32_0 = arith.constant 0 : i32
    return %arg0, %c0_i32 : i32, i32
  }
  func.func @transform_2(%arg0: i32) -> (i32, i32) {
    %c0_i32 = arith.constant 0 : i32
    %c0_i32_0 = arith.constant 0 : i32
    return %c0_i32, %arg0 : i32, i32
  }
}

</mosaic_0001>

<llo_original>
// kernel: matrix_sensing_forward.1
$region0: #{matrix_sensing_forward.1}
  #allocation0 [shape = 'u32[]', space=smem, size = 0x4, offset = 0x4, fixed_abs, tag = 'smem constant byte address 0x4 - core index']
  #allocation1 [shape = 'u32[144,128]{1,0:T(1,128)}', space=vmem, size = 0x12000, scoped, tag = 'internal scratch']
  %s0 = inlined_call_operand.vmem [shape: f32[1,1024], index: 0, kind: input, shape index: {}]
  %s1 = inlined_call_operand.vmem [shape: f32[300,1024], index: 1, kind: input, shape index: {}]
  %s2 = inlined_call_operand.vmem [shape: f32[1,512], index: 2, kind: output, shape index: {}]
  %s3 = sld [smem:[#allocation0]]
  $region41: #{matrix_sensing_forward.1} parent=0
    _
  %s5 = ssub.s32 1, %s3
  %s6 = scalar_select 0, %s5, %s3
  loop: start=0, step=1, limit=4
  $region2: #{matrix_sensing_forward.1} parent=0 // loop_pre_header
    _
  $region3: #{matrix_sensing_forward.1} parent=0 // loop_header
    %s8 = sphi 0, %s12
    %p9 = scmp.ge.s32.totalorder %s8, 4
    %s16 = sphi 0, %s16
    %s18 = sphi 0, %s16
    %s19 = sphi 0, %s18
    %s33 = sphi 0, %s19
    %s39 = sphi 0, %s41
    %s42 = sphi 0, %s39
    %s43 = sphi 0, %s42
    %s59 = sphi 0, %s43
    %s65 = sphi 0, %s67
    %s68 = sphi 0, %s65
    %s69 = sphi 0, %s68
    %s85 = sphi 0, %s69
  $region4: #{matrix_sensing_forward.1} parent=0 // loop_header_branch
    %11 = sbr.rel (%p9) target = $region8
  $region5: #{matrix_sensing_forward.1} parent=0 // loop_body
    %s13 = ssub.s32 %s8, 1
    %s14 = ssub.s32 %s8, 2
    %s15 = sadd.s32 %s8, 1
    %s17 = sadd.s32 %s16, 1
    %p20 = scmp.eq.s32.totalorder %s8, 1
    %p21 = scmp.ne.s32.totalorder %s16, %s18
    %p22 = scmp.eq.s32.totalorder %s8, 0
    %p23 = por %p21, %p22
    %p24 = scmp.ne.s32.totalorder %s16, %s18
    %p25 = scmp.eq.s32.totalorder %s13, 1
    %p26 = por %p24, %p25
    %p27 = scmp.ne.s32.totalorder %s18, %s19
    %p28 = scmp.eq.s32.totalorder %s13, 0
    %p29 = por %p27, %p28
    %p30 = scmp.ne.s32.totalorder %s18, %s19
    %p31 = scmp.eq.s32.totalorder %s14, 1
    %p32 = por %p30, %p31
    %p34 = scmp.ne.s32.totalorder %s19, %s33
    %p35 = scmp.eq.s32.totalorder %s14, 0
    %p36 = por %p34, %p35
    %s37 = ssub.s32 %s8, %s15
    %p38 = scmp.eq.s32.totalorder %s37, 0
    %s40 = sadd.s32 %s39, 1
    %s41 = scalar_select %p38, %s39, %s40
    %p44 = pneg %p38
    %p45 = scmp.eq.s32.totalorder %s8, 1
    %p46 = por %p44, %p45
    %p47 = scmp.ne.s32.totalorder %s39, %s42
    %p48 = scmp.eq.s32.totalorder %s8, 0
    %p49 = por %p47, %p48
    %p50 = scmp.ne.s32.totalorder %s39, %s42
    %p51 = scmp.eq.s32.totalorder %s13, 1
    %p52 = por %p50, %p51
    %p53 = scmp.ne.s32.totalorder %s42, %s43
    %p54 = scmp.eq.s32.totalorder %s13, 0
    %p55 = por %p53, %p54
    %p56 = scmp.ne.s32.totalorder %s42, %s43
    %p57 = scmp.eq.s32.totalorder %s14, 1
    %p58 = por %p56, %p57
    %p60 = scmp.ne.s32.totalorder %s43, %s59
    %p61 = scmp.eq.s32.totalorder %s14, 0
    %p62 = por %p60, %p61
    %s63 = ssub.s32 %s8, %s15
    %p64 = scmp.eq.s32.totalorder %s63, 0
    %s66 = sadd.s32 %s65, 1
    %s67 = scalar_select %p64, %s65, %s66
    %p70 = pneg %p64
    %p71 = scmp.eq.s32.totalorder %s8, 1
    %p72 = por %p70, %p71
    %p73 = scmp.ne.s32.totalorder %s65, %s68
    %p74 = scmp.eq.s32.totalorder %s8, 0
    %p75 = por %p73, %p74
    %p76 = scmp.ne.s32.totalorder %s65, %s68
    %p77 = scmp.eq.s32.totalorder %s13, 1
    %p78 = por %p76, %p77
    %p79 = scmp.ne.s32.totalorder %s68, %s69
    %p80 = scmp.eq.s32.totalorder %s13, 0
    %p81 = por %p79, %p80
    %p82 = scmp.ne.s32.totalorder %s68, %s69
    %p83 = scmp.eq.s32.totalorder %s14, 1
    %p84 = por %p82, %p83
    %p86 = scmp.ne.s32.totalorder %s69, %s85
    %p87 = scmp.eq.s32.totalorder %s14, 0
    %p88 = por %p86, %p87
    %p89 = scmp.le.s32.totalorder 1, %s8
    %p90 = scmp.lt.s32.totalorder %s8, 3
    %p91 = pnand %p89, %p90
    %p92 = pneg %p91
    // Predicated region
    $region9: #{matrix_sensing_forward.1} parent=5 // pred_check
      _
    $region10: #{matrix_sensing_forward.1} parent=5 // pred_check_branch
      %94 = sbr.rel (%p91) target = $region12
    $region11: #{matrix_sensing_forward.1} parent=5 // pred_region
      %s95 = ssub.s32 %s8, 1
      // Predicated region
      $region13: #{matrix_sensing_forward.1} parent=11 // pred_check
        %p96 = pneg %p29
      $region14: #{matrix_sensing_forward.1} parent=11 // pred_check_branch
        %98 = sbr.rel (%p96) target = $region16
      $region15: #{matrix_sensing_forward.1} parent=11 // pred_region
        _
      $region16: #{matrix_sensing_forward.1} parent=11 // pred_fallthru
        _
    $region12: #{matrix_sensing_forward.1} parent=5 // pred_fallthru
      _
    %p99 = scmp.lt.s32.totalorder %s8, 2
    // Predicated region
    $region17: #{matrix_sensing_forward.1} parent=5 // pred_check
      %p100 = pneg %p99
    $region18: #{matrix_sensing_forward.1} parent=5 // pred_check_branch
      %102 = sbr.rel (%p100) target = $region20
    $region19: #{matrix_sensing_forward.1} parent=5 // pred_region
      // Predicated region
      $region21: #{matrix_sensing_forward.1} parent=19 // pred_check
        %p103 = pneg %p49
      $region22: #{matrix_sensing_forward.1} parent=19 // pred_check_branch
        %105 = sbr.rel (%p103) target = $region24
      $region23: #{matrix_sensing_forward.1} parent=19 // pred_region
        %s106 = smul.u32 32, %s8
        %s107 = ssub.s32 38, %s106
        %p108 = scmp.lt.s32.totalorder %s107, 32
        %s109 = scalar_select %p108, %s107, 32
        %s110 = smul.u32 128, %s109
        %s111 = smul.u32 %s110, 8
        %p112 = scmp.lt.s32.totalorder %s106, 37
        %s113 = scalar_select %p112, %s106, 37
        %s114 = smul.addr %s113, 8
        %s115 = smul.addr %s114, 8
        %s116 = scalar_lea.vmem %s1, %s115
        %s117 = smul.u32 32, %s8
        %s118 = ssub.s32 38, %s117
        %p119 = scmp.lt.s32.totalorder %s118, 32
        %s120 = scalar_select %p119, %s118, 32
        %s121 = smul.u32 128, %s120
        %s122 = smul.u32 %s121, 8
      $region24: #{matrix_sensing_forward.1} parent=19 // pred_fallthru
        _
    $region20: #{matrix_sensing_forward.1} parent=5 // pred_fallthru
      _
    %p123 = scmp.le.s32.totalorder 1, %s8
    %p124 = scmp.lt.s32.totalorder %s8, 3
    %p125 = pnand %p123, %p124
    %p126 = pneg %p125
    // Predicated region
    $region25: #{matrix_sensing_forward.1} parent=5 // pred_check
      _
    $region26: #{matrix_sensing_forward.1} parent=5 // pred_check_branch
      %128 = sbr.rel (%p125) target = $region28
    $region27: #{matrix_sensing_forward.1} parent=5 // pred_region
      %s129 = ssub.s32 %s8, 1
      %p130 = pneg %p29
      %p131 = pneg %p26
      %s132 = smul.u32 32, %s13
      %s133 = ssub.s32 38, %s132
      %p134 = scmp.lt.s32.totalorder %s133, 32
      %s135 = scalar_select %p134, %s133, 32
      %s136 = smul.u32 128, %s135
      %s137 = smul.u32 %s136, 8
      %p138 = scmp.lt.s32.totalorder %s132, 37
      %s139 = scalar_select %p138, %s132, 37
      %s140 = smul.addr %s139, 8
      %s141 = smul.addr %s140, 8
      %s142 = scalar_lea.vmem %s1, %s141
      %p143 = pneg %p55
      %p144 = pneg %p52
      %p145 = pneg %p81
      %p146 = pneg %p78
      %s147 = smul.u32 2, %s13
      %p148 = scmp.lt.s32.totalorder %s147, 3
      %s149 = scalar_select %p148, %s147, 3
      %s150 = scalar_lea.vmem %s2, %s149
      %s151 = smul.u32 32, %s13
      %s152 = ssub.s32 38, %s151
      %p153 = scmp.lt.s32.totalorder %s152, 32
      %s154 = scalar_select %p153, %s152, 32
      %s155 = smul.u32 128, %s154
      %s156 = smul.u32 %s155, 8
      %p157 = scmp.lt.s32.totalorder %s151, 37
      %s158 = scalar_select %p157, %s151, 37
      %s159 = smul.addr %s158, 8
      %s160 = smul.addr %s159, 8
      %s161 = scalar_lea.vmem %s1, %s160
      %s162 = smul.u32 32, %s13
      %s163 = ssub.s32 38, %s162
      %p164 = scmp.lt.s32.totalorder %s163, 32
      %s165 = scalar_select %p164, %s163, 32
      %s166 = smul.u32 128, %s165
      %s167 = smul.u32 %s166, 8
      %s168 = smul.u32 2, %s13
      %p169 = scmp.lt.s32.totalorder %s168, 3
      %s170 = scalar_select %p169, %s168, 3
      %s171 = scalar_lea.vmem %s2, %s170
      %s172 = smul.u32 2, %s13
      %v173 = vld [vmem:[%s161] sm:$0xff]
      %v174 = vld [vmem:[%s161 + $0x8] sm:$0xff]
      %v175 = vld [vmem:[%s161 + $0x10] sm:$0xff]
      %v176 = vld [vmem:[%s161 + $0x18] sm:$0xff]
      %v177 = vld [vmem:[%s161 + $0x20] sm:$0xff]
      %v178 = vld [vmem:[%s161 + $0x28] sm:$0xff]
      %v179 = vld [vmem:[%s161 + $0x30] sm:$0xff]
      %v180 = vld [vmem:[%s161 + $0x38] sm:$0xff]
      %v181 = vld [vmem:[%s161 + $0x40] sm:$0xff]
      %v182 = vld [vmem:[%s161 + $0x48] sm:$0xff]
      %v183 = vld [vmem:[%s161 + $0x50] sm:$0xff]
      %v184 = vld [vmem:[%s161 + $0x58] sm:$0xff]
      %v185 = vld [vmem:[%s161 + $0x60] sm:$0xff]
      %v186 = vld [vmem:[%s161 + $0x68] sm:$0xff]
      %v187 = vld [vmem:[%s161 + $0x70] sm:$0xff]
      %v188 = vld [vmem:[%s161 + $0x78] sm:$0xff]
      %v189 = vld [vmem:[%s161 + $0x80] sm:$0xff]
      %v190 = vld [vmem:[%s161 + $0x88] sm:$0xff]
      %v191 = vld [vmem:[%s161 + $0x90] sm:$0xff]
      %v192 = vld [vmem:[%s161 + $0x98] sm:$0xff]
      %v193 = vld [vmem:[%s161 + $0xa0] sm:$0xff]
      %v194 = vld [vmem:[%s161 + $0xa8] sm:$0xff]
      %v195 = vld [vmem:[%s161 + $0xb0] sm:$0xff]
      %v196 = vld [vmem:[%s161 + $0xb8] sm:$0xff]
      %v197 = vld [vmem:[%s161 + $0xc0] sm:$0xff]
      %v198 = vld [vmem:[%s161 + $0xc8] sm:$0xff]
      %v199 = vld [vmem:[%s161 + $0xd0] sm:$0xff]
      %v200 = vld [vmem:[%s161 + $0xd8] sm:$0xff]
      %v201 = vld [vmem:[%s161 + $0xe0] sm:$0xff]
      %v202 = vld [vmem:[%s161 + $0xe8] sm:$0xff]
      %v203 = vld [vmem:[%s161 + $0xf0] sm:$0xff]
      %v204 = vld [vmem:[%s161 + $0xf8] sm:$0xff]
      %v205 = vld [vmem:[%s161 + $0x100] sm:$0xff]
      %v206 = vld [vmem:[%s161 + $0x108] sm:$0xff]
      %v207 = vld [vmem:[%s161 + $0x110] sm:$0xff]
      %v208 = vld [vmem:[%s161 + $0x118] sm:$0xff]
      %v209 = vld [vmem:[%s161 + $0x120] sm:$0xff]
      %v210 = vld [vmem:[%s161 + $0x128] sm:$0xff]
      %v211 = vld [vmem:[%s161 + $0x130] sm:$0xff]
      %v212 = vld [vmem:[%s161 + $0x138] sm:$0xff]
      %v213 = vld [vmem:[%s161 + $0x140] sm:$0xff]
      %v214 = vld [vmem:[%s161 + $0x148] sm:$0xff]
      %v215 = vld [vmem:[%s161 + $0x150] sm:$0xff]
      %v216 = vld [vmem:[%s161 + $0x158] sm:$0xff]
      %v217 = vld [vmem:[%s161 + $0x160] sm:$0xff]
      %v218 = vld [vmem:[%s161 + $0x168] sm:$0xff]
      %v219 = vld [vmem:[%s161 + $0x170] sm:$0xff]
      %v220 = vld [vmem:[%s161 + $0x178] sm:$0xff]
      %v221 = vld [vmem:[%s161 + $0x180] sm:$0xff]
      %v222 = vld [vmem:[%s161 + $0x188] sm:$0xff]
      %v223 = vld [vmem:[%s161 + $0x190] sm:$0xff]
      %v224 = vld [vmem:[%s161 + $0x198] sm:$0xff]
      %v225 = vld [vmem:[%s161 + $0x1a0] sm:$0xff]
      %v226 = vld [vmem:[%s161 + $0x1a8] sm:$0xff]
      %v227 = vld [vmem:[%s161 + $0x1b0] sm:$0xff]
      %v228 = vld [vmem:[%s161 + $0x1b8] sm:$0xff]
      %v229 = vld [vmem:[%s161 + $0x1c0] sm:$0xff]
      %v230 = vld [vmem:[%s161 + $0x1c8] sm:$0xff]
      %v231 = vld [vmem:[%s161 + $0x1d0] sm:$0xff]
      %v232 = vld [vmem:[%s161 + $0x1d8] sm:$0xff]
      %v233 = vld [vmem:[%s161 + $0x1e0] sm:$0xff]
      %v234 = vld [vmem:[%s161 + $0x1e8] sm:$0xff]
      %v235 = vld [vmem:[%s161 + $0x1f0] sm:$0xff]
      %v236 = vld [vmem:[%s161 + $0x1f8] sm:$0xff]
      %v237 = vld [vmem:[%s161 + $0x200] sm:$0xff]
      %v238 = vld [vmem:[%s161 + $0x208] sm:$0xff]
      %v239 = vld [vmem:[%s161 + $0x210] sm:$0xff]
      %v240 = vld [vmem:[%s161 + $0x218] sm:$0xff]
      %v241 = vld [vmem:[%s161 + $0x220] sm:$0xff]
      %v242 = vld [vmem:[%s161 + $0x228] sm:$0xff]
      %v243 = vld [vmem:[%s161 + $0x230] sm:$0xff]
      %v244 = vld [vmem:[%s161 + $0x238] sm:$0xff]
      %v245 = vld [vmem:[%s161 + $0x240] sm:$0xff]
      %v246 = vld [vmem:[%s161 + $0x248] sm:$0xff]
      %v247 = vld [vmem:[%s161 + $0x250] sm:$0xff]
      %v248 = vld [vmem:[%s161 + $0x258] sm:$0xff]
      %v249 = vld [vmem:[%s161 + $0x260] sm:$0xff]
      %v250 = vld [vmem:[%s161 + $0x268] sm:$0xff]
      %v251 = vld [vmem:[%s161 + $0x270] sm:$0xff]
      %v252 = vld [vmem:[%s161 + $0x278] sm:$0xff]
      %v253 = vld [vmem:[%s161 + $0x280] sm:$0xff]
      %v254 = vld [vmem:[%s161 + $0x288] sm:$0xff]
      %v255 = vld [vmem:[%s161 + $0x290] sm:$0xff]
      %v256 = vld [vmem:[%s161 + $0x298] sm:$0xff]
      %v257 = vld [vmem:[%s161 + $0x2a0] sm:$0xff]
      %v258 = vld [vmem:[%s161 + $0x2a8] sm:$0xff]
      %v259 = vld [vmem:[%s161 + $0x2b0] sm:$0xff]
      %v260 = vld [vmem:[%s161 + $0x2b8] sm:$0xff]
      %v261 = vld [vmem:[%s161 + $0x2c0] sm:$0xff]
      %v262 = vld [vmem:[%s161 + $0x2c8] sm:$0xff]
      %v263 = vld [vmem:[%s161 + $0x2d0] sm:$0xff]
      %v264 = vld [vmem:[%s161 + $0x2d8] sm:$0xff]
      %v265 = vld [vmem:[%s161 + $0x2e0] sm:$0xff]
      %v266 = vld [vmem:[%s161 + $0x2e8] sm:$0xff]
      %v267 = vld [vmem:[%s161 + $0x2f0] sm:$0xff]
      %v268 = vld [vmem:[%s161 + $0x2f8] sm:$0xff]
      %v269 = vld [vmem:[%s161 + $0x300] sm:$0xff]
      %v270 = vld [vmem:[%s161 + $0x308] sm:$0xff]
      %v271 = vld [vmem:[%s161 + $0x310] sm:$0xff]
      %v272 = vld [vmem:[%s161 + $0x318] sm:$0xff]
      %v273 = vld [vmem:[%s161 + $0x320] sm:$0xff]
      %v274 = vld [vmem:[%s161 + $0x328] sm:$0xff]
      %v275 = vld [vmem:[%s161 + $0x330] sm:$0xff]
      %v276 = vld [vmem:[%s161 + $0x338] sm:$0xff]
      %v277 = vld [vmem:[%s161 + $0x340] sm:$0xff]
      %v278 = vld [vmem:[%s161 + $0x348] sm:$0xff]
      %v279 = vld [vmem:[%s161 + $0x350] sm:$0xff]
      %v280 = vld [vmem:[%s161 + $0x358] sm:$0xff]
      %v281 = vld [vmem:[%s161 + $0x360] sm:$0xff]
      %v282 = vld [vmem:[%s161 + $0x368] sm:$0xff]
      %v283 = vld [vmem:[%s161 + $0x370] sm:$0xff]
      %v284 = vld [vmem:[%s161 + $0x378] sm:$0xff]
      %v285 = vld [vmem:[%s161 + $0x380] sm:$0xff]
      %v286 = vld [vmem:[%s161 + $0x388] sm:$0xff]
      %v287 = vld [vmem:[%s161 + $0x390] sm:$0xff]
      %v288 = vld [vmem:[%s161 + $0x398] sm:$0xff]
      %v289 = vld [vmem:[%s161 + $0x3a0] sm:$0xff]
      %v290 = vld [vmem:[%s161 + $0x3a8] sm:$0xff]
      %v291 = vld [vmem:[%s161 + $0x3b0] sm:$0xff]
      %v292 = vld [vmem:[%s161 + $0x3b8] sm:$0xff]
      %v293 = vld [vmem:[%s161 + $0x3c0] sm:$0xff]
      %v294 = vld [vmem:[%s161 + $0x3c8] sm:$0xff]
      %v295 = vld [vmem:[%s161 + $0x3d0] sm:$0xff]
      %v296 = vld [vmem:[%s161 + $0x3d8] sm:$0xff]
      %v297 = vld [vmem:[%s161 + $0x3e0] sm:$0xff]
      %v298 = vld [vmem:[%s161 + $0x3e8] sm:$0xff]
      %v299 = vld [vmem:[%s161 + $0x3f0] sm:$0xff]
      %v300 = vld [vmem:[%s161 + $0x3f8] sm:$0xff]
      %v301 = vld [vmem:[%s161 + $0x400] sm:$0xff]
      %v302 = vld [vmem:[%s161 + $0x408] sm:$0xff]
      %v303 = vld [vmem:[%s161 + $0x410] sm:$0xff]
      %v304 = vld [vmem:[%s161 + $0x418] sm:$0xff]
      %v305 = vld [vmem:[%s161 + $0x420] sm:$0xff]
      %v306 = vld [vmem:[%s161 + $0x428] sm:$0xff]
      %v307 = vld [vmem:[%s161 + $0x430] sm:$0xff]
      %v308 = vld [vmem:[%s161 + $0x438] sm:$0xff]
      %v309 = vld [vmem:[%s161 + $0x440] sm:$0xff]
      %v310 = vld [vmem:[%s161 + $0x448] sm:$0xff]
      %v311 = vld [vmem:[%s161 + $0x450] sm:$0xff]
      %v312 = vld [vmem:[%s161 + $0x458] sm:$0xff]
      %v313 = vld [vmem:[%s161 + $0x460] sm:$0xff]
      %v314 = vld [vmem:[%s161 + $0x468] sm:$0xff]
      %v315 = vld [vmem:[%s161 + $0x470] sm:$0xff]
      %v316 = vld [vmem:[%s161 + $0x478] sm:$0xff]
      %v317 = vld [vmem:[%s161 + $0x480] sm:$0xff]
      %v318 = vld [vmem:[%s161 + $0x488] sm:$0xff]
      %v319 = vld [vmem:[%s161 + $0x490] sm:$0xff]
      %v320 = vld [vmem:[%s161 + $0x498] sm:$0xff]
      %v321 = vld [vmem:[%s161 + $0x4a0] sm:$0xff]
      %v322 = vld [vmem:[%s161 + $0x4a8] sm:$0xff]
      %v323 = vld [vmem:[%s161 + $0x4b0] sm:$0xff]
      %v324 = vld [vmem:[%s161 + $0x4b8] sm:$0xff]
      %v325 = vld [vmem:[%s161 + $0x4c0] sm:$0xff]
      %v326 = vld [vmem:[%s161 + $0x4c8] sm:$0xff]
      %v327 = vld [vmem:[%s161 + $0x4d0] sm:$0xff]
      %v328 = vld [vmem:[%s161 + $0x4d8] sm:$0xff]
      %v329 = vld [vmem:[%s161 + $0x4e0] sm:$0xff]
      %v330 = vld [vmem:[%s161 + $0x4e8] sm:$0xff]
      %v331 = vld [vmem:[%s161 + $0x4f0] sm:$0xff]
      %v332 = vld [vmem:[%s161 + $0x4f8] sm:$0xff]
      %v333 = vld [vmem:[%s161 + $0x500] sm:$0xff]
      %v334 = vld [vmem:[%s161 + $0x508] sm:$0xff]
      %v335 = vld [vmem:[%s161 + $0x510] sm:$0xff]
      %v336 = vld [vmem:[%s161 + $0x518] sm:$0xff]
      %v337 = vld [vmem:[%s161 + $0x520] sm:$0xff]
      %v338 = vld [vmem:[%s161 + $0x528] sm:$0xff]
      %v339 = vld [vmem:[%s161 + $0x530] sm:$0xff]
      %v340 = vld [vmem:[%s161 + $0x538] sm:$0xff]
      %v341 = vld [vmem:[%s161 + $0x540] sm:$0xff]
      %v342 = vld [vmem:[%s161 + $0x548] sm:$0xff]
      %v343 = vld [vmem:[%s161 + $0x550] sm:$0xff]
      %v344 = vld [vmem:[%s161 + $0x558] sm:$0xff]
      %v345 = vld [vmem:[%s161 + $0x560] sm:$0xff]
      %v346 = vld [vmem:[%s161 + $0x568] sm:$0xff]
      %v347 = vld [vmem:[%s161 + $0x570] sm:$0xff]
      %v348 = vld [vmem:[%s161 + $0x578] sm:$0xff]
      %v349 = vld [vmem:[%s161 + $0x580] sm:$0xff]
      %v350 = vld [vmem:[%s161 + $0x588] sm:$0xff]
      %v351 = vld [vmem:[%s161 + $0x590] sm:$0xff]
      %v352 = vld [vmem:[%s161 + $0x598] sm:$0xff]
      %v353 = vld [vmem:[%s161 + $0x5a0] sm:$0xff]
      %v354 = vld [vmem:[%s161 + $0x5a8] sm:$0xff]
      %v355 = vld [vmem:[%s161 + $0x5b0] sm:$0xff]
      %v356 = vld [vmem:[%s161 + $0x5b8] sm:$0xff]
      %v357 = vld [vmem:[%s161 + $0x5c0] sm:$0xff]
      %v358 = vld [vmem:[%s161 + $0x5c8] sm:$0xff]
      %v359 = vld [vmem:[%s161 + $0x5d0] sm:$0xff]
      %v360 = vld [vmem:[%s161 + $0x5d8] sm:$0xff]
      %v361 = vld [vmem:[%s161 + $0x5e0] sm:$0xff]
      %v362 = vld [vmem:[%s161 + $0x5e8] sm:$0xff]
      %v363 = vld [vmem:[%s161 + $0x5f0] sm:$0xff]
      %v364 = vld [vmem:[%s161 + $0x5f8] sm:$0xff]
      %v365 = vld [vmem:[%s161 + $0x600] sm:$0xff]
      %v366 = vld [vmem:[%s161 + $0x608] sm:$0xff]
      %v367 = vld [vmem:[%s161 + $0x610] sm:$0xff]
      %v368 = vld [vmem:[%s161 + $0x618] sm:$0xff]
      %v369 = vld [vmem:[%s161 + $0x620] sm:$0xff]
      %v370 = vld [vmem:[%s161 + $0x628] sm:$0xff]
      %v371 = vld [vmem:[%s161 + $0x630] sm:$0xff]
      %v372 = vld [vmem:[%s161 + $0x638] sm:$0xff]
      %v373 = vld [vmem:[%s161 + $0x640] sm:$0xff]
      %v374 = vld [vmem:[%s161 + $0x648] sm:$0xff]
      %v375 = vld [vmem:[%s161 + $0x650] sm:$0xff]
      %v376 = vld [vmem:[%s161 + $0x658] sm:$0xff]
      %v377 = vld [vmem:[%s161 + $0x660] sm:$0xff]
      %v378 = vld [vmem:[%s161 + $0x668] sm:$0xff]
      %v379 = vld [vmem:[%s161 + $0x670] sm:$0xff]
      %v380 = vld [vmem:[%s161 + $0x678] sm:$0xff]
      %v381 = vld [vmem:[%s161 + $0x680] sm:$0xff]
      %v382 = vld [vmem:[%s161 + $0x688] sm:$0xff]
      %v383 = vld [vmem:[%s161 + $0x690] sm:$0xff]
      %v384 = vld [vmem:[%s161 + $0x698] sm:$0xff]
      %v385 = vld [vmem:[%s161 + $0x6a0] sm:$0xff]
      %v386 = vld [vmem:[%s161 + $0x6a8] sm:$0xff]
      %v387 = vld [vmem:[%s161 + $0x6b0] sm:$0xff]
      %v388 = vld [vmem:[%s161 + $0x6b8] sm:$0xff]
      %v389 = vld [vmem:[%s161 + $0x6c0] sm:$0xff]
      %v390 = vld [vmem:[%s161 + $0x6c8] sm:$0xff]
      %v391 = vld [vmem:[%s161 + $0x6d0] sm:$0xff]
      %v392 = vld [vmem:[%s161 + $0x6d8] sm:$0xff]
      %v393 = vld [vmem:[%s161 + $0x6e0] sm:$0xff]
      %v394 = vld [vmem:[%s161 + $0x6e8] sm:$0xff]
      %v395 = vld [vmem:[%s161 + $0x6f0] sm:$0xff]
      %v396 = vld [vmem:[%s161 + $0x6f8] sm:$0xff]
      %v397 = vld [vmem:[%s161 + $0x700] sm:$0xff]
      %v398 = vld [vmem:[%s161 + $0x708] sm:$0xff]
      %v399 = vld [vmem:[%s161 + $0x710] sm:$0xff]
      %v400 = vld [vmem:[%s161 + $0x718] sm:$0xff]
      %v401 = vld [vmem:[%s161 + $0x720] sm:$0xff]
      %v402 = vld [vmem:[%s161 + $0x728] sm:$0xff]
      %v403 = vld [vmem:[%s161 + $0x730] sm:$0xff]
      %v404 = vld [vmem:[%s161 + $0x738] sm:$0xff]
      %v405 = vld [vmem:[%s161 + $0x740] sm:$0xff]
      %v406 = vld [vmem:[%s161 + $0x748] sm:$0xff]
      %v407 = vld [vmem:[%s161 + $0x750] sm:$0xff]
      %v408 = vld [vmem:[%s161 + $0x758] sm:$0xff]
      %v409 = vld [vmem:[%s161 + $0x760] sm:$0xff]
      %v410 = vld [vmem:[%s161 + $0x768] sm:$0xff]
      %v411 = vld [vmem:[%s161 + $0x770] sm:$0xff]
      %v412 = vld [vmem:[%s161 + $0x778] sm:$0xff]
      %v413 = vld [vmem:[%s161 + $0x780] sm:$0xff]
      %v414 = vld [vmem:[%s161 + $0x788] sm:$0xff]
      %v415 = vld [vmem:[%s161 + $0x790] sm:$0xff]
      %v416 = vld [vmem:[%s161 + $0x798] sm:$0xff]
      %v417 = vld [vmem:[%s161 + $0x7a0] sm:$0xff]
      %v418 = vld [vmem:[%s161 + $0x7a8] sm:$0xff]
      %v419 = vld [vmem:[%s161 + $0x7b0] sm:$0xff]
      %v420 = vld [vmem:[%s161 + $0x7b8] sm:$0xff]
      %v421 = vld [vmem:[%s161 + $0x7c0] sm:$0xff]
      %v422 = vld [vmem:[%s161 + $0x7c8] sm:$0xff]
      %v423 = vld [vmem:[%s161 + $0x7d0] sm:$0xff]
      %v424 = vld [vmem:[%s161 + $0x7d8] sm:$0xff]
      %v425 = vld [vmem:[%s161 + $0x7e0] sm:$0xff]
      %v426 = vld [vmem:[%s161 + $0x7e8] sm:$0xff]
      %v427 = vld [vmem:[%s161 + $0x7f0] sm:$0xff]
      %v428 = vld [vmem:[%s161 + $0x7f8] sm:$0xff]
      %v429 = vld [vmem:[%s0] sm:$0xff]
      %v431 = vlaneseq
      %v432 = vshrl.u32 %v431, 7
      %v433 = vsub.s32 0, %v432
      %v434 = vrot.slane %v429, %v433
      %v435 = vlaneseq
      %v436 = vshrl.u32 %v435, 7
      %v437 = vsub.s32 1, %v436
      %v438 = vrot.slane %v429, %v437
      %v439 = vlaneseq
      %v440 = vshrl.u32 %v439, 7
      %v441 = vsub.s32 2, %v440
      %v442 = vrot.slane %v429, %v441
      %v443 = vlaneseq
      %v444 = vshrl.u32 %v443, 7
      %v445 = vsub.s32 3, %v444
      %v446 = vrot.slane %v429, %v445
      %v447 = vlaneseq
      %v448 = vshrl.u32 %v447, 7
      %v449 = vsub.s32 4, %v448
      %v450 = vrot.slane %v429, %v449
      %v451 = vlaneseq
      %v452 = vshrl.u32 %v451, 7
      %v453 = vsub.s32 5, %v452
      %v454 = vrot.slane %v429, %v453
      %v455 = vlaneseq
      %v456 = vshrl.u32 %v455, 7
      %v457 = vsub.s32 6, %v456
      %v458 = vrot.slane %v429, %v457
      %v459 = vlaneseq
      %v460 = vshrl.u32 %v459, 7
      %v461 = vsub.s32 7, %v460
      %v462 = vrot.slane %v429, %v461
      %v471 = vand.u32 %v174, 4294901760
      %472 = vmatprep.subr.mxu0 %v471
      %v473 = vand.u32 %v173, 4294901760
      %474 = vmatpush1.xpose.msra.mxu0 %v473
      %v475 = vand.u32 %v182, 4294901760
      %476 = vmatprep.subr.mxu0 %v475
      %v477 = vand.u32 %v181, 4294901760
      %478 = vmatpush1.xpose.msra.mxu0 %v477
      %v479 = vand.u32 %v190, 4294901760
      %480 = vmatprep.subr.mxu0 %v479
      %v481 = vand.u32 %v189, 4294901760
      %482 = vmatpush1.xpose.msra.mxu0 %v481
      %v483 = vand.u32 %v198, 4294901760
      %484 = vmatprep.subr.mxu0 %v483
      %v485 = vand.u32 %v197, 4294901760
      %486 = vmatpush1.xpose.msra.mxu0 %v485
      %v487 = vand.u32 %v206, 4294901760
      %488 = vmatprep.subr.mxu0 %v487
      %v489 = vand.u32 %v205, 4294901760
      %490 = vmatpush1.xpose.msra.mxu0 %v489
      %v491 = vand.u32 %v214, 4294901760
      %492 = vmatprep.subr.mxu0 %v491
      %v493 = vand.u32 %v213, 4294901760
      %494 = vmatpush1.xpose.msra.mxu0 %v493
      %v495 = vand.u32 %v222, 4294901760
      %496 = vmatprep.subr.mxu0 %v495
      %v497 = vand.u32 %v221, 4294901760
      %498 = vmatpush1.xpose.msra.mxu0 %v497
      %v499 = vand.u32 %v230, 4294901760
      %500 = vmatprep.subr.mxu0 %v499
      %v501 = vand.u32 %v229, 4294901760
      %502 = vmatpush1.xpose.msra.mxu0 %v501
      %v503 = vand.u32 %v238, 4294901760
      %504 = vmatprep.subr.mxu0 %v503
      %v505 = vand.u32 %v237, 4294901760
      %506 = vmatpush1.xpose.msra.mxu0 %v505
      %v507 = vand.u32 %v246, 4294901760
      %508 = vmatprep.subr.mxu0 %v507
      %v509 = vand.u32 %v245, 4294901760
      %510 = vmatpush1.xpose.msra.mxu0 %v509
      %v511 = vand.u32 %v254, 4294901760
      %512 = vmatprep.subr.mxu0 %v511
      %v513 = vand.u32 %v253, 4294901760
      %514 = vmatpush1.xpose.msra.mxu0 %v513
      %v515 = vand.u32 %v262, 4294901760
      %516 = vmatprep.subr.mxu0 %v515
      %v517 = vand.u32 %v261, 4294901760
      %518 = vmatpush1.xpose.msra.mxu0 %v517
      %v519 = vand.u32 %v270, 4294901760
      %520 = vmatprep.subr.mxu0 %v519
      %v521 = vand.u32 %v269, 4294901760
      %522 = vmatpush1.xpose.msra.mxu0 %v521
      %v523 = vand.u32 %v278, 4294901760
      %524 = vmatprep.subr.mxu0 %v523
      %v525 = vand.u32 %v277, 4294901760
      %526 = vmatpush1.xpose.msra.mxu0 %v525
      %v527 = vand.u32 %v286, 4294901760
      %528 = vmatprep.subr.mxu0 %v527
      %v529 = vand.u32 %v285, 4294901760
      %530 = vmatpush1.xpose.msra.mxu0 %v529
      %v531 = vand.u32 %v294, 4294901760
      %532 = vmatprep.subr.mxu0 %v531
      %v533 = vand.u32 %v293, 4294901760
      %534 = vmatpush1.xpose.msra.mxu0 %v533
      %v535 = vand.u32 %v302, 4294901760
      %536 = vmatprep.subr.mxu0 %v535
      %v537 = vand.u32 %v301, 4294901760
      %538 = vmatpush1.xpose.msra.mxu0 %v537
      %v539 = vand.u32 %v310, 4294901760
      %540 = vmatprep.subr.mxu0 %v539
      %v541 = vand.u32 %v309, 4294901760
      %542 = vmatpush1.xpose.msra.mxu0 %v541
      %v543 = vand.u32 %v318, 4294901760
      %544 = vmatprep.subr.mxu0 %v543
      %v545 = vand.u32 %v317, 4294901760
      %546 = vmatpush1.xpose.msra.mxu0 %v545
      %v547 = vand.u32 %v326, 4294901760
      %548 = vmatprep.subr.mxu0 %v547
      %v549 = vand.u32 %v325, 4294901760
      %550 = vmatpush1.xpose.msra.mxu0 %v549
      %v551 = vand.u32 %v334, 4294901760
      %552 = vmatprep.subr.mxu0 %v551
      %v553 = vand.u32 %v333, 4294901760
      %554 = vmatpush1.xpose.msra.mxu0 %v553
      %v555 = vand.u32 %v342, 4294901760
      %556 = vmatprep.subr.mxu0 %v555
      %v557 = vand.u32 %v341, 4294901760
      %558 = vmatpush1.xpose.msra.mxu0 %v557
      %v559 = vand.u32 %v350, 4294901760
      %560 = vmatprep.subr.mxu0 %v559
      %v561 = vand.u32 %v349, 4294901760
      %562 = vmatpush1.xpose.msra.mxu0 %v561
      %v563 = vand.u32 %v358, 4294901760
      %564 = vmatprep.subr.mxu0 %v563
      %v565 = vand.u32 %v357, 4294901760
      %566 = vmatpush1.xpose.msra.mxu0 %v565
      %v567 = vand.u32 %v366, 4294901760
      %568 = vmatprep.subr.mxu0 %v567
      %v569 = vand.u32 %v365, 4294901760
      %570 = vmatpush1.xpose.msra.mxu0 %v569
      %v571 = vand.u32 %v374, 4294901760
      %572 = vmatprep.subr.mxu0 %v571
      %v573 = vand.u32 %v373, 4294901760
      %574 = vmatpush1.xpose.msra.mxu0 %v573
      %v575 = vand.u32 %v382, 4294901760
      %576 = vmatprep.subr.mxu0 %v575
      %v577 = vand.u32 %v381, 4294901760
      %578 = vmatpush1.xpose.msra.mxu0 %v577
      %v579 = vand.u32 %v390, 4294901760
      %580 = vmatprep.subr.mxu0 %v579
      %v581 = vand.u32 %v389, 4294901760
      %582 = vmatpush1.xpose.msra.mxu0 %v581
      %v583 = vand.u32 %v398, 4294901760
      %584 = vmatprep.subr.mxu0 %v583
      %v585 = vand.u32 %v397, 4294901760
      %586 = vmatpush1.xpose.msra.mxu0 %v585
      %v587 = vand.u32 %v406, 4294901760
      %588 = vmatprep.subr.mxu0 %v587
      %v589 = vand.u32 %v405, 4294901760
      %590 = vmatpush1.xpose.msra.mxu0 %v589
      %v591 = vand.u32 %v414, 4294901760
      %592 = vmatprep.subr.mxu0 %v591
      %v593 = vand.u32 %v413, 4294901760
      %594 = vmatpush1.xpose.msra.mxu0 %v593
      %v595 = vand.u32 %v422, 4294901760
      %596 = vmatprep.subr.mxu0 %v595
      %v597 = vand.u32 %v421, 4294901760
      %598 = vmatpush1.xpose.msra.mxu0 %v597
      %v599 = vand.u32 %v438, 4294901760
      %v600 = vsub.f32 %v438, %v599
      %v601 = vand.u32 %v600, 4294901760
      %v602 = vsub.f32 %v600, %v601
      %v603 = vand.u32 %v602, 4294901760
      %604 = vmatprep.mubr.f32.mxu0 %v603
      %v605 = vand.u32 %v434, 4294901760
      %v606 = vsub.f32 %v434, %v605
      %v607 = vand.u32 %v606, 4294901760
      %v608 = vsub.f32 %v606, %v607
      %v609 = vand.u32 %v608, 4294901760
      %610 = vmatmul.mubr.f32.gmra.mrb[0].mxu0 %v609
      %v611 = vpop.f32.mrb[0].mxu0
      %v612 = vadd.f32 0.0, %v611
      %v613 = vpop.f32.mrb[0].mxu0
      %v614 = vadd.f32 0.0, %v613
      %615 = vdwg.mxu0
      %v616 = vand.u32 %v174, 4294901760
      %v617 = vsub.f32 %v174, %v616
      %v618 = vand.u32 %v617, 4294901760
      %v619 = vsub.f32 %v617, %v618
      %v620 = vand.u32 %v619, 4294901760
      %621 = vmatprep.subr.mxu0 %v620
      %v622 = vand.u32 %v173, 4294901760
      %v623 = vsub.f32 %v173, %v622
      %v624 = vand.u32 %v623, 4294901760
      %v625 = vsub.f32 %v623, %v624
      %v626 = vand.u32 %v625, 4294901760
      %627 = vmatpush1.xpose.msra.mxu0 %v626
      %v628 = vand.u32 %v182, 4294901760
      %v629 = vsub.f32 %v182, %v628
      %v630 = vand.u32 %v629, 4294901760
      %v631 = vsub.f32 %v629, %v630
      %v632 = vand.u32 %v631, 4294901760
      %633 = vmatprep.subr.mxu0 %v632
      %v634 = vand.u32 %v181, 4294901760
      %v635 = vsub.f32 %v181, %v634
      %v636 = vand.u32 %v635, 4294901760
      %v637 = vsub.f32 %v635, %v636
      %v638 = vand.u32 %v637, 4294901760
      %639 = vmatpush1.xpose.msra.mxu0 %v638
      %v640 = vand.u32 %v190, 4294901760
      %v641 = vsub.f32 %v190, %v640
      %v642 = vand.u32 %v641, 4294901760
      %v643 = vsub.f32 %v641, %v642
      %v644 = vand.u32 %v643, 4294901760
      %645 = vmatprep.subr.mxu0 %v644
      %v646 = vand.u32 %v189, 4294901760
      %v647 = vsub.f32 %v189, %v646
      %v648 = vand.u32 %v647, 4294901760
      %v649 = vsub.f32 %v647, %v648
      %v650 = vand.u32 %v649, 4294901760
      %651 = vmatpush1.xpose.msra.mxu0 %v650
      %v652 = vand.u32 %v198, 4294901760
      %v653 = vsub.f32 %v198, %v652
      %v654 = vand.u32 %v653, 4294901760
      %v655 = vsub.f32 %v653, %v654
      %v656 = vand.u32 %v655, 4294901760
      %657 = vmatprep.subr.mxu0 %v656
      %v658 = vand.u32 %v197, 4294901760
      %v659 = vsub.f32 %v197, %v658
      %v660 = vand.u32 %v659, 4294901760
      %v661 = vsub.f32 %v659, %v660
      %v662 = vand.u32 %v661, 4294901760
      %663 = vmatpush1.xpose.msra.mxu0 %v662
      %v664 = vand.u32 %v206, 4294901760
      %v665 = vsub.f32 %v206, %v664
      %v666 = vand.u32 %v665, 4294901760
      %v667 = vsub.f32 %v665, %v666
      %v668 = vand.u32 %v667, 4294901760
      %669 = vmatprep.subr.mxu0 %v668
      %v670 = vand.u32 %v205, 4294901760
      %v671 = vsub.f32 %v205, %v670
      %v672 = vand.u32 %v671, 4294901760
      %v673 = vsub.f32 %v671, %v672
      %v674 = vand.u32 %v673, 4294901760
      %675 = vmatpush1.xpose.msra.mxu0 %v674
      %v676 = vand.u32 %v214, 4294901760
      %v677 = vsub.f32 %v214, %v676
      %v678 = vand.u32 %v677, 4294901760
      %v679 = vsub.f32 %v677, %v678
      %v680 = vand.u32 %v679, 4294901760
      %681 = vmatprep.subr.mxu0 %v680
      %v682 = vand.u32 %v213, 4294901760
      %v683 = vsub.f32 %v213, %v682
      %v684 = vand.u32 %v683, 4294901760
      %v685 = vsub.f32 %v683, %v684
      %v686 = vand.u32 %v685, 4294901760
      %687 = vmatpush1.xpose.msra.mxu0 %v686
      %v688 = vand.u32 %v222, 4294901760
      %v689 = vsub.f32 %v222, %v688
      %v690 = vand.u32 %v689, 4294901760
      %v691 = vsub.f32 %v689, %v690
      %v692 = vand.u32 %v691, 4294901760
      %693 = vmatprep.subr.mxu0 %v692
      %v694 = vand.u32 %v221, 4294901760
      %v695 = vsub.f32 %v221, %v694
      %v696 = vand.u32 %v695, 4294901760
      %v697 = vsub.f32 %v695, %v696
      %v698 = vand.u32 %v697, 4294901760
      %699 = vmatpush1.xpose.msra.mxu0 %v698
      %v700 = vand.u32 %v230, 4294901760
      %v701 = vsub.f32 %v230, %v700
      %v702 = vand.u32 %v701, 4294901760
      %v703 = vsub.f32 %v701, %v702
      %v704 = vand.u32 %v703, 4294901760
      %705 = vmatprep.subr.mxu0 %v704
      %v706 = vand.u32 %v229, 4294901760
      %v707 = vsub.f32 %v229, %v706
      %v708 = vand.u32 %v707, 4294901760
      %v709 = vsub.f32 %v707, %v708
      %v710 = vand.u32 %v709, 4294901760
      %711 = vmatpush1.xpose.msra.mxu0 %v710
      %v712 = vand.u32 %v238, 4294901760
      %v713 = vsub.f32 %v238, %v712
      %v714 = vand.u32 %v713, 4294901760
      %v715 = vsub.f32 %v713, %v714
      %v716 = vand.u32 %v715, 4294901760
      %717 = vmatprep.subr.mxu0 %v716
      %v718 = vand.u32 %v237, 4294901760
      %v719 = vsub.f32 %v237, %v718
      %v720 = vand.u32 %v719, 4294901760
      %v721 = vsub.f32 %v719, %v720
      %v722 = vand.u32 %v721, 4294901760
      %723 = vmatpush1.xpose.msra.mxu0 %v722
      %v724 = vand.u32 %v246, 4294901760
      %v725 = vsub.f32 %v246, %v724
      %v726 = vand.u32 %v725, 4294901760
      %v727 = vsub.f32 %v725, %v726
      %v728 = vand.u32 %v727, 4294901760
      %729 = vmatprep.subr.mxu0 %v728
      %v730 = vand.u32 %v245, 4294901760
      %v731 = vsub.f32 %v245, %v730
      %v732 = vand.u32 %v731, 4294901760
      %v733 = vsub.f32 %v731, %v732
      %v734 = vand.u32 %v733, 4294901760
      %735 = vmatpush1.xpose.msra.mxu0 %v734
      %v736 = vand.u32 %v254, 4294901760
      %v737 = vsub.f32 %v254, %v736
      %v738 = vand.u32 %v737, 4294901760
      %v739 = vsub.f32 %v737, %v738
      %v740 = vand.u32 %v739, 4294901760
      %741 = vmatprep.subr.mxu0 %v740
      %v742 = vand.u32 %v253, 4294901760
      %v743 = vsub.f32 %v253, %v742
      %v744 = vand.u32 %v743, 4294901760
      %v745 = vsub.f32 %v743, %v744
      %v746 = vand.u32 %v745, 4294901760
      %747 = vmatpush1.xpose.msra.mxu0 %v746
      %v748 = vand.u32 %v262, 4294901760
      %v749 = vsub.f32 %v262, %v748
      %v750 = vand.u32 %v749, 4294901760
      %v751 = vsub.f32 %v749, %v750
      %v752 = vand.u32 %v751, 4294901760
      %753 = vmatprep.subr.mxu0 %v752
      %v754 = vand.u32 %v261, 4294901760
      %v755 = vsub.f32 %v261, %v754
      %v756 = vand.u32 %v755, 4294901760
      %v757 = vsub.f32 %v755, %v756
      %v758 = vand.u32 %v757, 4294901760
      %759 = vmatpush1.xpose.msra.mxu0 %v758
      %v760 = vand.u32 %v270, 4294901760
      %v761 = vsub.f32 %v270, %v760
      %v762 = vand.u32 %v761, 4294901760
      %v763 = vsub.f32 %v761, %v762
      %v764 = vand.u32 %v763, 4294901760
      %765 = vmatprep.subr.mxu0 %v764
      %v766 = vand.u32 %v269, 4294901760
      %v767 = vsub.f32 %v269, %v766
      %v768 = vand.u32 %v767, 4294901760
      %v769 = vsub.f32 %v767, %v768
      %v770 = vand.u32 %v769, 4294901760
      %771 = vmatpush1.xpose.msra.mxu0 %v770
      %v772 = vand.u32 %v278, 4294901760
      %v773 = vsub.f32 %v278, %v772
      %v774 = vand.u32 %v773, 4294901760
      %v775 = vsub.f32 %v773, %v774
      %v776 = vand.u32 %v775, 4294901760
      %777 = vmatprep.subr.mxu0 %v776
      %v778 = vand.u32 %v277, 4294901760
      %v779 = vsub.f32 %v277, %v778
      %v780 = vand.u32 %v779, 4294901760
      %v781 = vsub.f32 %v779, %v780
      %v782 = vand.u32 %v781, 4294901760
      %783 = vmatpush1.xpose.msra.mxu0 %v782
      %v784 = vand.u32 %v286, 4294901760
      %v785 = vsub.f32 %v286, %v784
      %v786 = vand.u32 %v785, 4294901760
      %v787 = vsub.f32 %v785, %v786
      %v788 = vand.u32 %v787, 4294901760
      %789 = vmatprep.subr.mxu0 %v788
      %v790 = vand.u32 %v285, 4294901760
      %v791 = vsub.f32 %v285, %v790
      %v792 = vand.u32 %v791, 4294901760
      %v793 = vsub.f32 %v791, %v792
      %v794 = vand.u32 %v793, 4294901760
      %795 = vmatpush1.xpose.msra.mxu0 %v794
      %v796 = vand.u32 %v294, 4294901760
      %v797 = vsub.f32 %v294, %v796
      %v798 = vand.u32 %v797, 4294901760
      %v799 = vsub.f32 %v797, %v798
      %v800 = vand.u32 %v799, 4294901760
      %801 = vmatprep.subr.mxu0 %v800
      %v802 = vand.u32 %v293, 4294901760
      %v803 = vsub.f32 %v293, %v802
      %v804 = vand.u32 %v803, 4294901760
      %v805 = vsub.f32 %v803, %v804
      %v806 = vand.u32 %v805, 4294901760
      %807 = vmatpush1.xpose.msra.mxu0 %v806
      %v808 = vand.u32 %v302, 4294901760
      %v809 = vsub.f32 %v302, %v808
      %v810 = vand.u32 %v809, 4294901760
      %v811 = vsub.f32 %v809, %v810
      %v812 = vand.u32 %v811, 4294901760
      %813 = vmatprep.subr.mxu0 %v812
      %v814 = vand.u32 %v301, 4294901760
      %v815 = vsub.f32 %v301, %v814
      %v816 = vand.u32 %v815, 4294901760
      %v817 = vsub.f32 %v815, %v816
      %v818 = vand.u32 %v817, 4294901760
      %819 = vmatpush1.xpose.msra.mxu0 %v818
      %v820 = vand.u32 %v310, 4294901760
      %v821 = vsub.f32 %v310, %v820
      %v822 = vand.u32 %v821, 4294901760
      %v823 = vsub.f32 %v821, %v822
      %v824 = vand.u32 %v823, 4294901760
      %825 = vmatprep.subr.mxu0 %v824
      %v826 = vand.u32 %v309, 4294901760
      %v827 = vsub.f32 %v309, %v826
      %v828 = vand.u32 %v827, 4294901760
      %v829 = vsub.f32 %v827, %v828
      %v830 = vand.u32 %v829, 4294901760
      %831 = vmatpush1.xpose.msra.mxu0 %v830
      %v832 = vand.u32 %v318, 4294901760
      %v833 = vsub.f32 %v318, %v832
      %v834 = vand.u32 %v833, 4294901760
      %v835 = vsub.f32 %v833, %v834
      %v836 = vand.u32 %v835, 4294901760
      %837 = vmatprep.subr.mxu0 %v836
      %v838 = vand.u32 %v317, 4294901760
      %v839 = vsub.f32 %v317, %v838
      %v840 = vand.u32 %v839, 4294901760
      %v841 = vsub.f32 %v839, %v840
      %v842 = vand.u32 %v841, 4294901760
      %843 = vmatpush1.xpose.msra.mxu0 %v842
      %v844 = vand.u32 %v326, 4294901760
      %v845 = vsub.f32 %v326, %v844
      %v846 = vand.u32 %v845, 4294901760
      %v847 = vsub.f32 %v845, %v846
      %v848 = vand.u32 %v847, 4294901760
      %849 = vmatprep.subr.mxu0 %v848
      %v850 = vand.u32 %v325, 4294901760
      %v851 = vsub.f32 %v325, %v850
      %v852 = vand.u32 %v851, 4294901760
      %v853 = vsub.f32 %v851, %v852
      %v854 = vand.u32 %v853, 4294901760
      %855 = vmatpush1.xpose.msra.mxu0 %v854
      %v856 = vand.u32 %v334, 4294901760
      %v857 = vsub.f32 %v334, %v856
      %v858 = vand.u32 %v857, 4294901760
      %v859 = vsub.f32 %v857, %v858
      %v860 = vand.u32 %v859, 4294901760
      %861 = vmatprep.subr.mxu0 %v860
      %v862 = vand.u32 %v333, 4294901760
      %v863 = vsub.f32 %v333, %v862
      %v864 = vand.u32 %v863, 4294901760
      %v865 = vsub.f32 %v863, %v864
      %v866 = vand.u32 %v865, 4294901760
      %867 = vmatpush1.xpose.msra.mxu0 %v866
      %v868 = vand.u32 %v342, 4294901760
      %v869 = vsub.f32 %v342, %v868
      %v870 = vand.u32 %v869, 4294901760
      %v871 = vsub.f32 %v869, %v870
      %v872 = vand.u32 %v871, 4294901760
      %873 = vmatprep.subr.mxu0 %v872
      %v874 = vand.u32 %v341, 4294901760
      %v875 = vsub.f32 %v341, %v874
      %v876 = vand.u32 %v875, 4294901760
      %v877 = vsub.f32 %v875, %v876
      %v878 = vand.u32 %v877, 4294901760
      %879 = vmatpush1.xpose.msra.mxu0 %v878
      %v880 = vand.u32 %v350, 4294901760
      %v881 = vsub.f32 %v350, %v880
      %v882 = vand.u32 %v881, 4294901760
      %v883 = vsub.f32 %v881, %v882
      %v884 = vand.u32 %v883, 4294901760
      %885 = vmatprep.subr.mxu0 %v884
      %v886 = vand.u32 %v349, 4294901760
      %v887 = vsub.f32 %v349, %v886
      %v888 = vand.u32 %v887, 4294901760
      %v889 = vsub.f32 %v887, %v888
      %v890 = vand.u32 %v889, 4294901760
      %891 = vmatpush1.xpose.msra.mxu0 %v890
      %v892 = vand.u32 %v358, 4294901760
      %v893 = vsub.f32 %v358, %v892
      %v894 = vand.u32 %v893, 4294901760
      %v895 = vsub.f32 %v893, %v894
      %v896 = vand.u32 %v895, 4294901760
      %897 = vmatprep.subr.mxu0 %v896
      %v898 = vand.u32 %v357, 4294901760
      %v899 = vsub.f32 %v357, %v898
      %v900 = vand.u32 %v899, 4294901760
      %v901 = vsub.f32 %v899, %v900
      %v902 = vand.u32 %v901, 4294901760
      %903 = vmatpush1.xpose.msra.mxu0 %v902
      %v904 = vand.u32 %v366, 4294901760
      %v905 = vsub.f32 %v366, %v904
      %v906 = vand.u32 %v905, 4294901760
      %v907 = vsub.f32 %v905, %v906
      %v908 = vand.u32 %v907, 4294901760
      %909 = vmatprep.subr.mxu0 %v908
      %v910 = vand.u32 %v365, 4294901760
      %v911 = vsub.f32 %v365, %v910
      %v912 = vand.u32 %v911, 4294901760
      %v913 = vsub.f32 %v911, %v912
      %v914 = vand.u32 %v913, 4294901760
      %915 = vmatpush1.xpose.msra.mxu0 %v914
      %v916 = vand.u32 %v374, 4294901760
      %v917 = vsub.f32 %v374, %v916
      %v918 = vand.u32 %v917, 4294901760
      %v919 = vsub.f32 %v917, %v918
      %v920 = vand.u32 %v919, 4294901760
      %921 = vmatprep.subr.mxu0 %v920
      %v922 = vand.u32 %v373, 4294901760
      %v923 = vsub.f32 %v373, %v922
      %v924 = vand.u32 %v923, 4294901760
      %v925 = vsub.f32 %v923, %v924
      %v926 = vand.u32 %v925, 4294901760
      %927 = vmatpush1.xpose.msra.mxu0 %v926
      %v928 = vand.u32 %v382, 4294901760
      %v929 = vsub.f32 %v382, %v928
      %v930 = vand.u32 %v929, 4294901760
      %v931 = vsub.f32 %v929, %v930
      %v932 = vand.u32 %v931, 4294901760
      %933 = vmatprep.subr.mxu0 %v932
      %v934 = vand.u32 %v381, 4294901760
      %v935 = vsub.f32 %v381, %v934
      %v936 = vand.u32 %v935, 4294901760
      %v937 = vsub.f32 %v935, %v936
      %v938 = vand.u32 %v937, 4294901760
      %939 = vmatpush1.xpose.msra.mxu0 %v938
      %v940 = vand.u32 %v390, 4294901760
      %v941 = vsub.f32 %v390, %v940
      %v942 = vand.u32 %v941, 4294901760
      %v943 = vsub.f32 %v941, %v942
      %v944 = vand.u32 %v943, 4294901760
      %945 = vmatprep.subr.mxu0 %v944
      %v946 = vand.u32 %v389, 4294901760
      %v947 = vsub.f32 %v389, %v946
      %v948 = vand.u32 %v947, 4294901760
      %v949 = vsub.f32 %v947, %v948
      %v950 = vand.u32 %v949, 4294901760
      %951 = vmatpush1.xpose.msra.mxu0 %v950
      %v952 = vand.u32 %v398, 4294901760
      %v953 = vsub.f32 %v398, %v952
      %v954 = vand.u32 %v953, 4294901760
      %v955 = vsub.f32 %v953, %v954
      %v956 = vand.u32 %v955, 4294901760
      %957 = vmatprep.subr.mxu0 %v956
      %v958 = vand.u32 %v397, 4294901760
      %v959 = vsub.f32 %v397, %v958
      %v960 = vand.u32 %v959, 4294901760
      %v961 = vsub.f32 %v959, %v960
      %v962 = vand.u32 %v961, 4294901760
      %963 = vmatpush1.xpose.msra.mxu0 %v962
      %v964 = vand.u32 %v406, 4294901760
      %v965 = vsub.f32 %v406, %v964
      %v966 = vand.u32 %v965, 4294901760
      %v967 = vsub.f32 %v965, %v966
      %v968 = vand.u32 %v967, 4294901760
      %969 = vmatprep.subr.mxu0 %v968
      %v970 = vand.u32 %v405, 4294901760
      %v971 = vsub.f32 %v405, %v970
      %v972 = vand.u32 %v971, 4294901760
      %v973 = vsub.f32 %v971, %v972
      %v974 = vand.u32 %v973, 4294901760
      %975 = vmatpush1.xpose.msra.mxu0 %v974
      %v976 = vand.u32 %v414, 4294901760
      %v977 = vsub.f32 %v414, %v976
      %v978 = vand.u32 %v977, 4294901760
      %v979 = vsub.f32 %v977, %v978
      %v980 = vand.u32 %v979, 4294901760
      %981 = vmatprep.subr.mxu0 %v980
      %v982 = vand.u32 %v413, 4294901760
      %v983 = vsub.f32 %v413, %v982
      %v984 = vand.u32 %v983, 4294901760
      %v985 = vsub.f32 %v983, %v984
      %v986 = vand.u32 %v985, 4294901760
      %987 = vmatpush1.xpose.msra.mxu0 %v986
      %v988 = vand.u32 %v422, 4294901760
      %v989 = vsub.f32 %v422, %v988
      %v990 = vand.u32 %v989, 4294901760
      %v991 = vsub.f32 %v989, %v990
      %v992 = vand.u32 %v991, 4294901760
      %993 = vmatprep.subr.mxu0 %v992
      %v994 = vand.u32 %v421, 4294901760
      %v995 = vsub.f32 %v421, %v994
      %v996 = vand.u32 %v995, 4294901760
      %v997 = vsub.f32 %v995, %v996
      %v998 = vand.u32 %v997, 4294901760
      %999 = vmatpush1.xpose.msra.mxu0 %v998
      %v1000 = vand.u32 %v438, 4294901760
      %1001 = vmatprep.mubr.f32.mxu0 %v1000
      %v1002 = vand.u32 %v434, 4294901760
      %1003 = vmatmul.mubr.f32.gmra.mrb[0].mxu0 %v1002
      %v1004 = vpop.f32.mrb[0].mxu0
      %v1005 = vadd.f32 %v612, %v1004
      %v1006 = vpop.f32.mrb[0].mxu0
      %v1007 = vadd.f32 %v614, %v1006
      %1008 = vdwg.mxu0
      %v1009 = vand.u32 %v174, 4294901760
      %v1010 = vsub.f32 %v174, %v1009
      %1011 = vmatprep.subr.mxu0 %v1010
      %v1012 = vand.u32 %v173, 4294901760
      %v1013 = vsub.f32 %v173, %v1012
      %1014 = vmatpush1.xpose.msra.mxu0 %v1013
      %v1015 = vand.u32 %v182, 4294901760
      %v1016 = vsub.f32 %v182, %v1015
      %1017 = vmatprep.subr.mxu0 %v1016
      %v1018 = vand.u32 %v181, 4294901760
      %v1019 = vsub.f32 %v181, %v1018
      %1020 = vmatpush1.xpose.msra.mxu0 %v1019
      %v1021 = vand.u32 %v190, 4294901760
      %v1022 = vsub.f32 %v190, %v1021
      %1023 = vmatprep.subr.mxu0 %v1022
      %v1024 = vand.u32 %v189, 4294901760
      %v1025 = vsub.f32 %v189, %v1024
      %1026 = vmatpush1.xpose.msra.mxu0 %v1025
      %v1027 = vand.u32 %v198, 4294901760
      %v1028 = vsub.f32 %v198, %v1027
      %1029 = vmatprep.subr.mxu0 %v1028
      %v1030 = vand.u32 %v197, 4294901760
      %v1031 = vsub.f32 %v197, %v1030
      %1032 = vmatpush1.xpose.msra.mxu0 %v1031
      %v1033 = vand.u32 %v206, 4294901760
      %v1034 = vsub.f32 %v206, %v1033
      %1035 = vmatprep.subr.mxu0 %v1034
      %v1036 = vand.u32 %v205, 4294901760
      %v1037 = vsub.f32 %v205, %v1036
      %1038 = vmatpush1.xpose.msra.mxu0 %v1037
      %v1039 = vand.u32 %v214, 4294901760
      %v1040 = vsub.f32 %v214, %v1039
      %1041 = vmatprep.subr.mxu0 %v1040
      %v1042 = vand.u32 %v213, 4294901760
      %v1043 = vsub.f32 %v213, %v1042
      %1044 = vmatpush1.xpose.msra.mxu0 %v1043
      %v1045 = vand.u32 %v222, 4294901760
      %v1046 = vsub.f32 %v222, %v1045
      %1047 = vmatprep.subr.mxu0 %v1046
      %v1048 = vand.u32 %v221, 4294901760
      %v1049 = vsub.f32 %v221, %v1048
      %1050 = vmatpush1.xpose.msra.mxu0 %v1049
      %v1051 = vand.u32 %v230, 4294901760
      %v1052 = vsub.f32 %v230, %v1051
      %1053 = vmatprep.subr.mxu0 %v1052
      %v1054 = vand.u32 %v229, 4294901760
      %v1055 = vsub.f32 %v229, %v1054
      %1056 = vmatpush1.xpose.msra.mxu0 %v1055
      %v1057 = vand.u32 %v238, 4294901760
      %v1058 = vsub.f32 %v238, %v1057
      %1059 = vmatprep.subr.mxu0 %v1058
      %v1060 = vand.u32 %v237, 4294901760
      %v1061 = vsub.f32 %v237, %v1060
      %1062 = vmatpush1.xpose.msra.mxu0 %v1061
      %v1063 = vand.u32 %v246, 4294901760
      %v1064 = vsub.f32 %v246, %v1063
      %1065 = vmatprep.subr.mxu0 %v1064
      %v1066 = vand.u32 %v245, 4294901760
      %v1067 = vsub.f32 %v245, %v1066
      %1068 = vmatpush1.xpose.msra.mxu0 %v1067
      %v1069 = vand.u32 %v254, 4294901760
      %v1070 = vsub.f32 %v254, %v1069
      %1071 = vmatprep.subr.mxu0 %v1070
      %v1072 = vand.u32 %v253, 4294901760
      %v1073 = vsub.f32 %v253, %v1072
      %1074 = vmatpush1.xpose.msra.mxu0 %v1073
      %v1075 = vand.u32 %v262, 4294901760
      %v1076 = vsub.f32 %v262, %v1075
      %1077 = vmatprep.subr.mxu0 %v1076
      %v1078 = vand.u32 %v261, 4294901760
      %v1079 = vsub.f32 %v261, %v1078
      %1080 = vmatpush1.xpose.msra.mxu0 %v1079
      %v1081 = vand.u32 %v270, 4294901760
      %v1082 = vsub.f32 %v270, %v1081
      %1083 = vmatprep.subr.mxu0 %v1082
      %v1084 = vand.u32 %v269, 4294901760
      %v1085 = vsub.f32 %v269, %v1084
      %1086 = vmatpush1.xpose.msra.mxu0 %v1085
      %v1087 = vand.u32 %v278, 4294901760
      %v1088 = vsub.f32 %v278, %v1087
      %1089 = vmatprep.subr.mxu0 %v1088
      %v1090 = vand.u32 %v277, 4294901760
      %v1091 = vsub.f32 %v277, %v1090
      %1092 = vmatpush1.xpose.msra.mxu0 %v1091
      %v1093 = vand.u32 %v286, 4294901760
      %v1094 = vsub.f32 %v286, %v1093
      %1095 = vmatprep.subr.mxu0 %v1094
      %v1096 = vand.u32 %v285, 4294901760
      %v1097 = vsub.f32 %v285, %v1096
      %1098 = vmatpush1.xpose.msra.mxu0 %v1097
      %v1099 = vand.u32 %v294, 4294901760
      %v1100 = vsub.f32 %v294, %v1099
      %1101 = vmatprep.subr.mxu0 %v1100
      %v1102 = vand.u32 %v293, 4294901760
      %v1103 = vsub.f32 %v293, %v1102
      %1104 = vmatpush1.xpose.msra.mxu0 %v1103
      %v1105 = vand.u32 %v302, 4294901760
      %v1106 = vsub.f32 %v302, %v1105
      %1107 = vmatprep.subr.mxu0 %v1106
      %v1108 = vand.u32 %v301, 4294901760
      %v1109 = vsub.f32 %v301, %v1108
      %1110 = vmatpush1.xpose.msra.mxu0 %v1109
      %v1111 = vand.u32 %v310, 4294901760
      %v1112 = vsub.f32 %v310, %v1111
      %1113 = vmatprep.subr.mxu0 %v1112
      %v1114 = vand.u32 %v309, 4294901760
      %v1115 = vsub.f32 %v309, %v1114
      %1116 = vmatpush1.xpose.msra.mxu0 %v1115
      %v1117 = vand.u32 %v318, 4294901760
      %v1118 = vsub.f32 %v318, %v1117
      %1119 = vmatprep.subr.mxu0 %v1118
      %v1120 = vand.u32 %v317, 4294901760
      %v1121 = vsub.f32 %v317, %v1120
      %1122 = vmatpush1.xpose.msra.mxu0 %v1121
      %v1123 = vand.u32 %v326, 4294901760
      %v1124 = vsub.f32 %v326, %v1123
      %1125 = vmatprep.subr.mxu0 %v1124
      %v1126 = vand.u32 %v325, 4294901760
      %v1127 = vsub.f32 %v325, %v1126
      %1128 = vmatpush1.xpose.msra.mxu0 %v1127
      %v1129 = vand.u32 %v334, 4294901760
      %v1130 = vsub.f32 %v334, %v1129
      %1131 = vmatprep.subr.mxu0 %v1130
      %v1132 = vand.u32 %v333, 4294901760
      %v1133 = vsub.f32 %v333, %v1132
      %1134 = vmatpush1.xpose.msra.mxu0 %v1133
      %v1135 = vand.u32 %v342, 4294901760
      %v1136 = vsub.f32 %v342, %v1135
      %1137 = vmatprep.subr.mxu0 %v1136
      %v1138 = vand.u32 %v341, 4294901760
      %v1139 = vsub.f32 %v341, %v1138
      %1140 = vmatpush1.xpose.msra.mxu0 %v1139
      %v1141 = vand.u32 %v350, 4294901760
      %v1142 = vsub.f32 %v350, %v1141
      %1143 = vmatprep.subr.mxu0 %v1142
      %v1144 = vand.u32 %v349, 4294901760
      %v1145 = vsub.f32 %v349, %v1144
      %1146 = vmatpush1.xpose.msra.mxu0 %v1145
      %v1147 = vand.u32 %v358, 4294901760
      %v1148 = vsub.f32 %v358, %v1147
      %1149 = vmatprep.subr.mxu0 %v1148
      %v1150 = vand.u32 %v357, 4294901760
      %v1151 = vsub.f32 %v357, %v1150
      %1152 = vmatpush1.xpose.msra.mxu0 %v1151
      %v1153 = vand.u32 %v366, 4294901760
      %v1154 = vsub.f32 %v366, %v1153
      %1155 = vmatprep.subr.mxu0 %v1154
      %v1156 = vand.u32 %v365, 4294901760
      %v1157 = vsub.f32 %v365, %v1156
      %1158 = vmatpush1.xpose.msra.mxu0 %v1157
      %v1159 = vand.u32 %v374, 4294901760
      %v1160 = vsub.f32 %v374, %v1159
      %1161 = vmatprep.subr.mxu0 %v1160
      %v1162 = vand.u32 %v373, 4294901760
      %v1163 = vsub.f32 %v373, %v1162
      %1164 = vmatpush1.xpose.msra.mxu0 %v1163
      %v1165 = vand.u32 %v382, 4294901760
      %v1166 = vsub.f32 %v382, %v1165
      %1167 = vmatprep.subr.mxu0 %v1166
      %v1168 = vand.u32 %v381, 4294901760
      %v1169 = vsub.f32 %v381, %v1168
      %1170 = vmatpush1.xpose.msra.mxu0 %v1169
      %v1171 = vand.u32 %v390, 4294901760
      %v1172 = vsub.f32 %v390, %v1171
      %1173 = vmatprep.subr.mxu0 %v1172
      %v1174 = vand.u32 %v389, 4294901760
      %v1175 = vsub.f32 %v389, %v1174
      %1176 = vmatpush1.xpose.msra.mxu0 %v1175
      %v1177 = vand.u32 %v398, 4294901760
      %v1178 = vsub.f32 %v398, %v1177
      %1179 = vmatprep.subr.mxu0 %v1178
      %v1180 = vand.u32 %v397, 4294901760
      %v1181 = vsub.f32 %v397, %v1180
      %1182 = vmatpush1.xpose.msra.mxu0 %v1181
      %v1183 = vand.u32 %v406, 4294901760
      %v1184 = vsub.f32 %v406, %v1183
      %1185 = vmatprep.subr.mxu0 %v1184
      %v1186 = vand.u32 %v405, 4294901760
      %v1187 = vsub.f32 %v405, %v1186
      %1188 = vmatpush1.xpose.msra.mxu0 %v1187
      %v1189 = vand.u32 %v414, 4294901760
      %v1190 = vsub.f32 %v414, %v1189
      %1191 = vmatprep.subr.mxu0 %v1190
      %v1192 = vand.u32 %v413, 4294901760
      %v1193 = vsub.f32 %v413, %v1192
      %1194 = vmatpush1.xpose.msra.mxu0 %v1193
      %v1195 = vand.u32 %v422, 4294901760
      %v1196 = vsub.f32 %v422, %v1195
      %1197 = vmatprep.subr.mxu0 %v1196
      %v1198 = vand.u32 %v421, 4294901760
      %v1199 = vsub.f32 %v421, %v1198
      %1200 = vmatpush1.xpose.msra.mxu0 %v1199
      %v1201 = vand.u32 %v438, 4294901760
      %v1202 = vsub.f32 %v438, %v1201
      %1203 = vmatprep.mubr.f32.mxu0 %v1202
      %v1204 = vand.u32 %v434, 4294901760
      %v1205 = vsub.f32 %v434, %v1204
      %1206 = vmatmul.mubr.f32.gmra.mrb[0].mxu0 %v1205
      %v1207 = vpop.f32.mrb[0].mxu0
      %v1208 = vadd.f32 %v1005, %v1207
      %v1209 = vpop.f32.mrb[0].mxu0
      %v1210 = vadd.f32 %v1007, %v1209
      %1211 = vdwg.mxu0
      %v1212 = vand.u32 %v174, 4294901760
      %1213 = vmatprep.subr.mxu0 %v1212
      %v1214 = vand.u32 %v173, 4294901760
      %1215 = vmatpush1.xpose.msra.mxu0 %v1214
      %v1216 = vand.u32 %v182, 4294901760
      %1217 = vmatprep.subr.mxu0 %v1216
      %v1218 = vand.u32 %v181, 4294901760
      %1219 = vmatpush1.xpose.msra.mxu0 %v1218
      %v1220 = vand.u32 %v190, 4294901760
      %1221 = vmatprep.subr.mxu0 %v1220
      %v1222 = vand.u32 %v189, 4294901760
      %1223 = vmatpush1.xpose.msra.mxu0 %v1222
      %v1224 = vand.u32 %v198, 4294901760
      %1225 = vmatprep.subr.mxu0 %v1224
      %v1226 = vand.u32 %v197, 4294901760
      %1227 = vmatpush1.xpose.msra.mxu0 %v1226
      %v1228 = vand.u32 %v206, 4294901760
      %1229 = vmatprep.subr.mxu0 %v1228
      %v1230 = vand.u32 %v205, 4294901760
      %1231 = vmatpush1.xpose.msra.mxu0 %v1230
      %v1232 = vand.u32 %v214, 4294901760
      %1233 = vmatprep.subr.mxu0 %v1232
      %v1234 = vand.u32 %v213, 4294901760
      %1235 = vmatpush1.xpose.msra.mxu0 %v1234
      %v1236 = vand.u32 %v222, 4294901760
      %1237 = vmatprep.subr.mxu0 %v1236
      %v1238 = vand.u32 %v221, 4294901760
      %1239 = vmatpush1.xpose.msra.mxu0 %v1238
      %v1240 = vand.u32 %v230, 4294901760
      %1241 = vmatprep.subr.mxu0 %v1240
      %v1242 = vand.u32 %v229, 4294901760
      %1243 = vmatpush1.xpose.msra.mxu0 %v1242
      %v1244 = vand.u32 %v238, 4294901760
      %1245 = vmatprep.subr.mxu0 %v1244
      %v1246 = vand.u32 %v237, 4294901760
      %1247 = vmatpush1.xpose.msra.mxu0 %v1246
      %v1248 = vand.u32 %v246, 4294901760
      %1249 = vmatprep.subr.mxu0 %v1248
      %v1250 = vand.u32 %v245, 4294901760
      %1251 = vmatpush1.xpose.msra.mxu0 %v1250
      %v1252 = vand.u32 %v254, 4294901760
      %1253 = vmatprep.subr.mxu0 %v1252
      %v1254 = vand.u32 %v253, 4294901760
      %1255 = vmatpush1.xpose.msra.mxu0 %v1254
      %v1256 = vand.u32 %v262, 4294901760
      %1257 = vmatprep.subr.mxu0 %v1256
      %v1258 = vand.u32 %v261, 4294901760
      %1259 = vmatpush1.xpose.msra.mxu0 %v1258
      %v1260 = vand.u32 %v270, 4294901760
      %1261 = vmatprep.subr.mxu0 %v1260
      %v1262 = vand.u32 %v269, 4294901760
      %1263 = vmatpush1.xpose.msra.mxu0 %v1262
      %v1264 = vand.u32 %v278, 4294901760
      %1265 = vmatprep.subr.mxu0 %v1264
      %v1266 = vand.u32 %v277, 4294901760
      %1267 = vmatpush1.xpose.msra.mxu0 %v1266
      %v1268 = vand.u32 %v286, 4294901760
      %1269 = vmatprep.subr.mxu0 %v1268
      %v1270 = vand.u32 %v285, 4294901760
      %1271 = vmatpush1.xpose.msra.mxu0 %v1270
      %v1272 = vand.u32 %v294, 4294901760
      %1273 = vmatprep.subr.mxu0 %v1272
      %v1274 = vand.u32 %v293, 4294901760
      %1275 = vmatpush1.xpose.msra.mxu0 %v1274
      %v1276 = vand.u32 %v302, 4294901760
      %1277 = vmatprep.subr.mxu0 %v1276
      %v1278 = vand.u32 %v301, 4294901760
      %1279 = vmatpush1.xpose.msra.mxu0 %v1278
      %v1280 = vand.u32 %v310, 4294901760
      %1281 = vmatprep.subr.mxu0 %v1280
      %v1282 = vand.u32 %v309, 4294901760
      %1283 = vmatpush1.xpose.msra.mxu0 %v1282
      %v1284 = vand.u32 %v318, 4294901760
      %1285 = vmatprep.subr.mxu0 %v1284
      %v1286 = vand.u32 %v317, 4294901760
      %1287 = vmatpush1.xpose.msra.mxu0 %v1286
      %v1288 = vand.u32 %v326, 4294901760
      %1289 = vmatprep.subr.mxu0 %v1288
      %v1290 = vand.u32 %v325, 4294901760
      %1291 = vmatpush1.xpose.msra.mxu0 %v1290
      %v1292 = vand.u32 %v334, 4294901760
      %1293 = vmatprep.subr.mxu0 %v1292
      %v1294 = vand.u32 %v333, 4294901760
      %1295 = vmatpush1.xpose.msra.mxu0 %v1294
      %v1296 = vand.u32 %v342, 4294901760
      %1297 = vmatprep.subr.mxu0 %v1296
      %v1298 = vand.u32 %v341, 4294901760
      %1299 = vmatpush1.xpose.msra.mxu0 %v1298
      %v1300 = vand.u32 %v350, 4294901760
      %1301 = vmatprep.subr.mxu0 %v1300
      %v1302 = vand.u32 %v349, 4294901760
      %1303 = vmatpush1.xpose.msra.mxu0 %v1302
      %v1304 = vand.u32 %v358, 4294901760
      %1305 = vmatprep.subr.mxu0 %v1304
      %v1306 = vand.u32 %v357, 4294901760
      %1307 = vmatpush1.xpose.msra.mxu0 %v1306
      %v1308 = vand.u32 %v366, 4294901760
      %1309 = vmatprep.subr.mxu0 %v1308
      %v1310 = vand.u32 %v365, 4294901760
      %1311 = vmatpush1.xpose.msra.mxu0 %v1310
      %v1312 = vand.u32 %v374, 4294901760
      %1313 = vmatprep.subr.mxu0 %v1312
      %v1314 = vand.u32 %v373, 4294901760
      %1315 = vmatpush1.xpose.msra.mxu0 %v1314
      %v1316 = vand.u32 %v382, 4294901760
      %1317 = vmatprep.subr.mxu0 %v1316
      %v1318 = vand.u32 %v381, 4294901760
      %1319 = vmatpush1.xpose.msra.mxu0 %v1318
      %v1320 = vand.u32 %v390, 4294901760
      %1321 = vmatprep.subr.mxu0 %v1320
      %v1322 = vand.u32 %v389, 4294901760
      %1323 = vmatpush1.xpose.msra.mxu0 %v1322
      %v1324 = vand.u32 %v398, 4294901760
      %1325 = vmatprep.subr.mxu0 %v1324
      %v1326 = vand.u32 %v397, 4294901760
      %1327 = vmatpush1.xpose.msra.mxu0 %v1326
      %v1328 = vand.u32 %v406, 4294901760
      %1329 = vmatprep.subr.mxu0 %v1328
      %v1330 = vand.u32 %v405, 4294901760
      %1331 = vmatpush1.xpose.msra.mxu0 %v1330
      %v1332 = vand.u32 %v414, 4294901760
      %1333 = vmatprep.subr.mxu0 %v1332
      %v1334 = vand.u32 %v413, 4294901760
      %1335 = vmatpush1.xpose.msra.mxu0 %v1334
      %v1336 = vand.u32 %v422, 4294901760
      %1337 = vmatprep.subr.mxu0 %v1336
      %v1338 = vand.u32 %v421, 4294901760
      %1339 = vmatpush1.xpose.msra.mxu0 %v1338
      %v1340 = vand.u32 %v438, 4294901760
      %v1341 = vsub.f32 %v438, %v1340
      %v1342 = vand.u32 %v1341, 4294901760
      %1343 = vmatprep.mubr.f32.mxu0 %v1342
      %v1344 = vand.u32 %v434, 4294901760
      %v1345 = vsub.f32 %v434, %v1344
      %v1346 = vand.u32 %v1345, 4294901760
      %1347 = vmatmul.mubr.f32.gmra.mrb[0].mxu0 %v1346
      %v1348 = vpop.f32.mrb[0].mxu0
      %v1349 = vadd.f32 %v1208, %v1348
      %v1350 = vpop.f32.mrb[0].mxu0
      %v1351 = vadd.f32 %v1210, %v1350
      %1352 = vdwg.mxu0
      %v1353 = vand.u32 %v174, 4294901760
      %v1354 = vsub.f32 %v174, %v1353
      %v1355 = vand.u32 %v1354, 4294901760
      %1356 = vmatprep.subr.mxu0 %v1355
      %v1357 = vand.u32 %v173, 4294901760
      %v1358 = vsub.f32 %v173, %v1357
      %v1359 = vand.u32 %v1358, 4294901760
      %1360 = vmatpush1.xpose.msra.mxu0 %v1359
      %v1361 = vand.u32 %v182, 4294901760
      %v1362 = vsub.f32 %v182, %v1361
      %v1363 = vand.u32 %v1362, 4294901760
      %1364 = vmatprep.subr.mxu0 %v1363
      %v1365 = vand.u32 %v181, 4294901760
      %v1366 = vsub.f32 %v181, %v1365
      %v1367 = vand.u32 %v1366, 4294901760
      %1368 = vmatpush1.xpose.msra.mxu0 %v1367
      %v1369 = vand.u32 %v190, 4294901760
      %v1370 = vsub.f32 %v190, %v1369
      %v1371 = vand.u32 %v1370, 4294901760
      %1372 = vmatprep.subr.mxu0 %v1371
      %v1373 = vand.u32 %v189, 4294901760
      %v1374 = vsub.f32 %v189, %v1373
      %v1375 = vand.u32 %v1374, 4294901760
      %1376 = vmatpush1.xpose.msra.mxu0 %v1375
      %v1377 = vand.u32 %v198, 4294901760
      %v1378 = vsub.f32 %v198, %v1377
      %v1379 = vand.u32 %v1378, 4294901760
      %1380 = vmatprep.subr.mxu0 %v1379
      %v1381 = vand.u32 %v197, 4294901760
      %v1382 = vsub.f32 %v197, %v1381
      %v1383 = vand.u32 %v1382, 4294901760
      %1384 = vmatpush1.xpose.msra.mxu0 %v1383
      %v1385 = vand.u32 %v206, 4294901760
      %v1386 = vsub.f32 %v206, %v1385
      %v1387 = vand.u32 %v1386, 4294901760
      %1388 = vmatprep.subr.mxu0 %v1387
      %v1389 = vand.u32 %v205, 4294901760
      %v1390 = vsub.f32 %v205, %v1389
      %v1391 = vand.u32 %v1390, 4294901760
      %1392 = vmatpush1.xpose.msra.mxu0 %v1391
      %v1393 = vand.u32 %v214, 4294901760
      %v1394 = vsub.f32 %v214, %v1393
      %v1395 = vand.u32 %v1394, 4294901760
      %1396 = vmatprep.subr.mxu0 %v1395
      %v1397 = vand.u32 %v213, 4294901760
      %v1398 = vsub.f32 %v213, %v1397
      %v1399 = vand.u32 %v1398, 4294901760
      %1400 = vmatpush1.xpose.msra.mxu0 %v1399
      %v1401 = vand.u32 %v222, 4294901760
      %v1402 = vsub.f32 %v222, %v1401
      %v1403 = vand.u32 %v1402, 4294901760
      %1404 = vmatprep.subr.mxu0 %v1403
      %v1405 = vand.u32 %v221, 4294901760
      %v1406 = vsub.f32 %v221, %v1405
      %v1407 = vand.u32 %v1406, 4294901760
      %1408 = vmatpush1.xpose.msra.mxu0 %v1407
      %v1409 = vand.u32 %v230, 4294901760
      %v1410 = vsub.f32 %v230, %v1409
      %v1411 = vand.u32 %v1410, 4294901760
      %1412 = vmatprep.subr.mxu0 %v1411
      %v1413 = vand.u32 %v229, 4294901760
      %v1414 = vsub.f32 %v229, %v1413
      %v1415 = vand.u32 %v1414, 4294901760
      %1416 = vmatpush1.xpose.msra.mxu0 %v1415
      %v1417 = vand.u32 %v238, 4294901760
      %v1418 = vsub.f32 %v238, %v1417
      %v1419 = vand.u32 %v1418, 4294901760
      %1420 = vmatprep.subr.mxu0 %v1419
      %v1421 = vand.u32 %v237, 4294901760
      %v1422 = vsub.f32 %v237, %v1421
      %v1423 = vand.u32 %v1422, 4294901760
      %1424 = vmatpush1.xpose.msra.mxu0 %v1423
      %v1425 = vand.u32 %v246, 4294901760
      %v1426 = vsub.f32 %v246, %v1425
      %v1427 = vand.u32 %v1426, 4294901760
      %1428 = vmatprep.subr.mxu0 %v1427
      %v1429 = vand.u32 %v245, 4294901760
      %v1430 = vsub.f32 %v245, %v1429
      %v1431 = vand.u32 %v1430, 4294901760
      %1432 = vmatpush1.xpose.msra.mxu0 %v1431
      %v1433 = vand.u32 %v254, 4294901760
      %v1434 = vsub.f32 %v254, %v1433
      %v1435 = vand.u32 %v1434, 4294901760
      %1436 = vmatprep.subr.mxu0 %v1435
      %v1437 = vand.u32 %v253, 4294901760
      %v1438 = vsub.f32 %v253, %v1437
      %v1439 = vand.u32 %v1438, 4294901760
      %1440 = vmatpush1.xpose.msra.mxu0 %v1439
      %v1441 = vand.u32 %v262, 4294901760
      %v1442 = vsub.f32 %v262, %v1441
      %v1443 = vand.u32 %v1442, 4294901760
      %1444 = vmatprep.subr.mxu0 %v1443
      %v1445 = vand.u32 %v261, 4294901760
      %v1446 = vsub.f32 %v261, %v1445
      %v1447 = vand.u32 %v1446, 4294901760
      %1448 = vmatpush1.xpose.msra.mxu0 %v1447
      %v1449 = vand.u32 %v270, 4294901760
      %v1450 = vsub.f32 %v270, %v1449
      %v1451 = vand.u32 %v1450, 4294901760
      %1452 = vmatprep.subr.mxu0 %v1451
      %v1453 = vand.u32 %v269, 4294901760
      %v1454 = vsub.f32 %v269, %v1453
      %v1455 = vand.u32 %v1454, 4294901760
      %1456 = vmatpush1.xpose.msra.mxu0 %v1455
      %v1457 = vand.u32 %v278, 4294901760
      %v1458 = vsub.f32 %v278, %v1457
      %v1459 = vand.u32 %v1458, 4294901760
      %1460 = vmatprep.subr.mxu0 %v1459
      %v1461 = vand.u32 %v277, 4294901760
      %v1462 = vsub.f32 %v277, %v1461
      %v1463 = vand.u32 %v1462, 4294901760
      %1464 = vmatpush1.xpose.msra.mxu0 %v1463
      %v1465 = vand.u32 %v286, 4294901760
      %v1466 = vsub.f32 %v286, %v1465
      %v1467 = vand.u32 %v1466, 4294901760
      %1468 = vmatprep.subr.mxu0 %v1467
      %v1469 = vand.u32 %v285, 4294901760
      %v1470 = vsub.f32 %v285, %v1469
      %v1471 = vand.u32 %v1470, 4294901760
      %1472 = vmatpush1.xpose.msra.mxu0 %v1471
      %v1473 = vand.u32 %v294, 4294901760
      %v1474 = vsub.f32 %v294, %v1473
      %v1475 = vand.u32 %v1474, 4294901760
      %1476 = vmatprep.subr.mxu0 %v1475
      %v1477 = vand.u32 %v293, 4294901760
      %v1478 = vsub.f32 %v293, %v1477
      %v1479 = vand.u32 %v1478, 4294901760
      %1480 = vmatpush1.xpose.msra.mxu0 %v1479
      %v1481 = vand.u32 %v302, 4294901760
      %v1482 = vsub.f32 %v302, %v1481
      %v1483 = vand.u32 %v1482, 4294901760
      %1484 = vmatprep.subr.mxu0 %v1483
      %v1485 = vand.u32 %v301, 4294901760
      %v1486 = vsub.f32 %v301, %v1485
      %v1487 = vand.u32 %v1486, 4294901760
      %1488 = vmatpush1.xpose.msra.mxu0 %v1487
      %v1489 = vand.u32 %v310, 4294901760
      %v1490 = vsub.f32 %v310, %v1489
      %v1491 = vand.u32 %v1490, 4294901760
      %1492 = vmatprep.subr.mxu0 %v1491
      %v1493 = vand.u32 %v309, 4294901760
      %v1494 = vsub.f32 %v309, %v1493
      %v1495 = vand.u32 %v1494, 4294901760
      %1496 = vmatpush1.xpose.msra.mxu0 %v1495
      %v1497 = vand.u32 %v318, 4294901760
      %v1498 = vsub.f32 %v318, %v1497
      %v1499 = vand.u32 %v1498, 4294901760
      %1500 = vmatprep.subr.mxu0 %v1499
      %v1501 = vand.u32 %v317, 4294901760
      %v1502 = vsub.f32 %v317, %v1501
      %v1503 = vand.u32 %v1502, 4294901760
      %1504 = vmatpush1.xpose.msra.mxu0 %v1503
      %v1505 = vand.u32 %v326, 4294901760
      %v1506 = vsub.f32 %v326, %v1505
      %v1507 = vand.u32 %v1506, 4294901760
      %1508 = vmatprep.subr.mxu0 %v1507
      %v1509 = vand.u32 %v325, 4294901760
      %v1510 = vsub.f32 %v325, %v1509
      %v1511 = vand.u32 %v1510, 4294901760
      %1512 = vmatpush1.xpose.msra.mxu0 %v1511
      %v1513 = vand.u32 %v334, 4294901760
      %v1514 = vsub.f32 %v334, %v1513
      %v1515 = vand.u32 %v1514, 4294901760
      %1516 = vmatprep.subr.mxu0 %v1515
      %v1517 = vand.u32 %v333, 4294901760
      %v1518 = vsub.f32 %v333, %v1517
      %v1519 = vand.u32 %v1518, 4294901760
      %1520 = vmatpush1.xpose.msra.mxu0 %v1519
      %v1521 = vand.u32 %v342, 4294901760
      %v1522 = vsub.f32 %v342, %v1521
      %v1523 = vand.u32 %v1522, 4294901760
      %1524 = vmatprep.subr.mxu0 %v1523
      %v1525 = vand.u32 %v341, 4294901760
      %v1526 = vsub.f32 %v341, %v1525
      %v1527 = vand.u32 %v1526, 4294901760
      %1528 = vmatpush1.xpose.msra.mxu0 %v1527
      %v1529 = vand.u32 %v350, 4294901760
      %v1530 = vsub.f32 %v350, %v1529
      %v1531 = vand.u32 %v1530, 4294901760
      %1532 = vmatprep.subr.mxu0 %v1531
      %v1533 = vand.u32 %v349, 4294901760
      %v1534 = vsub.f32 %v349, %v1533
      %v1535 = vand.u32 %v1534, 4294901760
      %1536 = vmatpush1.xpose.msra.mxu0 %v1535
      %v1537 = vand.u32 %v358, 4294901760
      %v1538 = vsub.f32 %v358, %v1537
      %v1539 = vand.u32 %v1538, 4294901760
      %1540 = vmatprep.subr.mxu0 %v1539
      %v1541 = vand.u32 %v357, 4294901760
      %v1542 = vsub.f32 %v357, %v1541
      %v1543 = vand.u32 %v1542, 4294901760
      %1544 = vmatpush1.xpose.msra.mxu0 %v1543
      %v1545 = vand.u32 %v366, 4294901760
      %v1546 = vsub.f32 %v366, %v1545
      %v1547 = vand.u32 %v1546, 4294901760
      %1548 = vmatprep.subr.mxu0 %v1547
      %v1549 = vand.u32 %v365, 4294901760
      %v1550 = vsub.f32 %v365, %v1549
      %v1551 = vand.u32 %v1550, 4294901760
      %1552 = vmatpush1.xpose.msra.mxu0 %v1551
      %v1553 = vand.u32 %v374, 4294901760
      %v1554 = vsub.f32 %v374, %v1553
      %v1555 = vand.u32 %v1554, 4294901760
      %1556 = vmatprep.subr.mxu0 %v1555
      %v1557 = vand.u32 %v373, 4294901760
      %v1558 = vsub.f32 %v373, %v1557
      %v1559 = vand.u32 %v1558, 4294901760
      %1560 = vmatpush1.xpose.msra.mxu0 %v1559
      %v1561 = vand.u32 %v382, 4294901760
      %v1562 = vsub.f32 %v382, %v1561
      %v1563 = vand.u32 %v1562, 4294901760
      %1564 = vmatprep.subr.mxu0 %v1563
      %v1565 = vand.u32 %v381, 4294901760
      %v1566 = vsub.f32 %v381, %v1565
      %v1567 = vand.u32 %v1566, 4294901760
      %1568 = vmatpush1.xpose.msra.mxu0 %v1567
      %v1569 = vand.u32 %v390, 4294901760
      %v1570 = vsub.f32 %v390, %v1569
      %v1571 = vand.u32 %v1570, 4294901760
      %1572 = vmatprep.subr.mxu0 %v1571
      %v1573 = vand.u32 %v389, 4294901760
      %v1574 = vsub.f32 %v389, %v1573
      %v1575 = vand.u32 %v1574, 4294901760
      %1576 = vmatpush1.xpose.msra.mxu0 %v1575
      %v1577 = vand.u32 %v398, 4294901760
      %v1578 = vsub.f32 %v398, %v1577
      %v1579 = vand.u32 %v1578, 4294901760
      %1580 = vmatprep.subr.mxu0 %v1579
      %v1581 = vand.u32 %v397, 4294901760
      %v1582 = vsub.f32 %v397, %v1581
      %v1583 = vand.u32 %v1582, 4294901760
      %1584 = vmatpush1.xpose.msra.mxu0 %v1583
      %v1585 = vand.u32 %v406, 4294901760
      %v1586 = vsub.f32 %v406, %v1585
      %v1587 = vand.u32 %v1586, 4294901760
      %1588 = vmatprep.subr.mxu0 %v1587
      %v1589 = vand.u32 %v405, 4294901760
      %v1590 = vsub.f32 %v405, %v1589
      %v1591 = vand.u32 %v1590, 4294901760
      %1592 = vmatpush1.xpose.msra.mxu0 %v1591
      %v1593 = vand.u32 %v414, 4294901760
      %v1594 = vsub.f32 %v414, %v1593
      %v1595 = vand.u32 %v1594, 4294901760
      %1596 = vmatprep.subr.mxu0 %v1595
      %v1597 = vand.u32 %v413, 4294901760
      %v1598 = vsub.f32 %v413, %v1597
      %v1599 = vand.u32 %v1598, 4294901760
      %1600 = vmatpush1.xpose.msra.mxu0 %v1599
      %v1601 = vand.u32 %v422, 4294901760
      %v1602 = vsub.f32 %v422, %v1601
      %v1603 = vand.u32 %v1602, 4294901760
      %1604 = vmatprep.subr.mxu0 %v1603
      %v1605 = vand.u32 %v421, 4294901760
      %v1606 = vsub.f32 %v421, %v1605
      %v1607 = vand.u32 %v1606, 4294901760
      %1608 = vmatpush1.xpose.msra.mxu0 %v1607
      %v1609 = vand.u32 %v438, 4294901760
      %1610 = vmatprep.mubr.f32.mxu0 %v1609
      %v1611 = vand.u32 %v434, 4294901760
      %1612 = vmatmul.mubr.f32.gmra.mrb[0].mxu0 %v1611
      %v1613 = vpop.f32.mrb[0].mxu0
      %v1614 = vadd.f32 %v1349, %v1613
      %v1615 = vpop.f32.mrb[0].mxu0
      %v1616 = vadd.f32 %v1351, %v1615
      %1617 = vdwg.mxu0
      %v1618 = vand.u32 %v174, 4294901760
      %1619 = vmatprep.subr.mxu0 %v1618
      %v1620 = vand.u32 %v173, 4294901760
      %1621 = vmatpush1.xpose.msra.mxu0 %v1620
      %v1622 = vand.u32 %v182, 4294901760
      %1623 = vmatprep.subr.mxu0 %v1622
      %v1624 = vand.u32 %v181, 4294901760
      %1625 = vmatpush1.xpose.msra.mxu0 %v1624
      %v1626 = vand.u32 %v190, 4294901760
      %1627 = vmatprep.subr.mxu0 %v1626
      %v1628 = vand.u32 %v189, 4294901760
      %1629 = vmatpush1.xpose.msra.mxu0 %v1628
      %v1630 = vand.u32 %v198, 4294901760
      %1631 = vmatprep.subr.mxu0 %v1630
      %v1632 = vand.u32 %v197, 4294901760
      %1633 = vmatpush1.xpose.msra.mxu0 %v1632
      %v1634 = vand.u32 %v206, 4294901760
      %1635 = vmatprep.subr.mxu0 %v1634
      %v1636 = vand.u32 %v205, 4294901760
      %1637 = vmatpush1.xpose.msra.mxu0 %v1636
      %v1638 = vand.u32 %v214, 4294901760
      %1639 = vmatprep.subr.mxu0 %v1638
      %v1640 = vand.u32 %v213, 4294901760
      %1641 = vmatpush1.xpose.msra.mxu0 %v1640
      %v1642 = vand.u32 %v222, 4294901760
      %1643 = vmatprep.subr.mxu0 %v1642
      %v1644 = vand.u32 %v221, 4294901760
      %1645 = vmatpush1.xpose.msra.mxu0 %v1644
      %v1646 = vand.u32 %v230, 4294901760
      %1647 = vmatprep.subr.mxu0 %v1646
      %v1648 = vand.u32 %v229, 4294901760
      %1649 = vmatpush1.xpose.msra.mxu0 %v1648
      %v1650 = vand.u32 %v238, 4294901760
      %1651 = vmatprep.subr.mxu0 %v1650
      %v1652 = vand.u32 %v237, 4294901760
      %1653 = vmatpush1.xpose.msra.mxu0 %v1652
      %v1654 = vand.u32 %v246, 4294901760
      %1655 = vmatprep.subr.mxu0 %v1654
      %v1656 = vand.u32 %v245, 4294901760
      %1657 = vmatpush1.xpose.msra.mxu0 %v1656
      %v1658 = vand.u32 %v254, 4294901760
      %1659 = vmatprep.subr.mxu0 %v1658
      %v1660 = vand.u32 %v253, 4294901760
      %1661 = vmatpush1.xpose.msra.mxu0 %v1660
      %v1662 = vand.u32 %v262, 4294901760
      %1663 = vmatprep.subr.mxu0 %v1662
      %v1664 = vand.u32 %v261, 4294901760
      %1665 = vmatpush1.xpose.msra.mxu0 %v1664
      %v1666 = vand.u32 %v270, 4294901760
      %1667 = vmatprep.subr.mxu0 %v1666
      %v1668 = vand.u32 %v269, 4294901760
      %1669 = vmatpush1.xpose.msra.mxu0 %v1668
      %v1670 = vand.u32 %v278, 4294901760
      %1671 = vmatprep.subr.mxu0 %v1670
      %v1672 = vand.u32 %v277, 4294901760
      %1673 = vmatpush1.xpose.msra.mxu0 %v1672
      %v1674 = vand.u32 %v286, 4294901760
      %1675 = vmatprep.subr.mxu0 %v1674
      %v1676 = vand.u32 %v285, 4294901760
      %1677 = vmatpush1.xpose.msra.mxu0 %v1676
      %v1678 = vand.u32 %v294, 4294901760
      %1679 = vmatprep.subr.mxu0 %v1678
      %v1680 = vand.u32 %v293, 4294901760
      %1681 = vmatpush1.xpose.msra.mxu0 %v1680
      %v1682 = vand.u32 %v302, 4294901760
      %1683 = vmatprep.subr.mxu0 %v1682
      %v1684 = vand.u32 %v301, 4294901760
      %1685 = vmatpush1.xpose.msra.mxu0 %v1684
      %v1686 = vand.u32 %v310, 4294901760
      %1687 = vmatprep.subr.mxu0 %v1686
      %v1688 = vand.u32 %v309, 4294901760
      %1689 = vmatpush1.xpose.msra.mxu0 %v1688
      %v1690 = vand.u32 %v318, 4294901760
      %1691 = vmatprep.subr.mxu0 %v1690
      %v1692 = vand.u32 %v317, 4294901760
      %1693 = vmatpush1.xpose.msra.mxu0 %v1692
      %v1694 = vand.u32 %v326, 4294901760
      %1695 = vmatprep.subr.mxu0 %v1694
      %v1696 = vand.u32 %v325, 4294901760
      %1697 = vmatpush1.xpose.msra.mxu0 %v1696
      %v1698 = vand.u32 %v334, 4294901760
      %1699 = vmatprep.subr.mxu0 %v1698
      %v1700 = vand.u32 %v333, 4294901760
      %1701 = vmatpush1.xpose.msra.mxu0 %v1700
      %v1702 = vand.u32 %v342, 4294901760
      %1703 = vmatprep.subr.mxu0 %v1702
      %v1704 = vand.u32 %v341, 4294901760
      %1705 = vmatpush1.xpose.msra.mxu0 %v1704
      %v1706 = vand.u32 %v350, 4294901760
      %1707 = vmatprep.subr.mxu0 %v1706
      %v1708 = vand.u32 %v349, 4294901760
      %1709 = vmatpush1.xpose.msra.mxu0 %v1708
      %v1710 = vand.u32 %v358, 4294901760
      %1711 = vmatprep.subr.mxu0 %v1710
      %v1712 = vand.u32 %v357, 4294901760
      %1713 = vmatpush1.xpose.msra.mxu0 %v1712
      %v1714 = vand.u32 %v366, 4294901760
      %1715 = vmatprep.subr.mxu0 %v1714
      %v1716 = vand.u32 %v365, 4294901760
      %1717 = vmatpush1.xpose.msra.mxu0 %v1716
      %v1718 = vand.u32 %v374, 4294901760
      %1719 = vmatprep.subr.mxu0 %v1718
      %v1720 = vand.u32 %v373, 4294901760
      %1721 = vmatpush1.xpose.msra.mxu0 %v1720
      %v1722 = vand.u32 %v382, 4294901760
      %1723 = vmatprep.subr.mxu0 %v1722
      %v1724 = vand.u32 %v381, 4294901760
      %1725 = vmatpush1.xpose.msra.mxu0 %v1724
      %v1726 = vand.u32 %v390, 4294901760
      %1727 = vmatprep.subr.mxu0 %v1726
      %v1728 = vand.u32 %v389, 4294901760
      %1729 = vmatpush1.xpose.msra.mxu0 %v1728
      %v1730 = vand.u32 %v398, 4294901760
      %1731 = vmatprep.subr.mxu0 %v1730
      %v1732 = vand.u32 %v397, 4294901760
      %1733 = vmatpush1.xpose.msra.mxu0 %v1732
      %v1734 = vand.u32 %v406, 4294901760
      %1735 = vmatprep.subr.mxu0 %v1734
      %v1736 = vand.u32 %v405, 4294901760
      %1737 = vmatpush1.xpose.msra.mxu0 %v1736
      %v1738 = vand.u32 %v414, 4294901760
      %1739 = vmatprep.subr.mxu0 %v1738
      %v1740 = vand.u32 %v413, 4294901760
      %1741 = vmatpush1.xpose.msra.mxu0 %v1740
      %v1742 = vand.u32 %v422, 4294901760
      %1743 = vmatprep.subr.mxu0 %v1742
      %v1744 = vand.u32 %v421, 4294901760
      %1745 = vmatpush1.xpose.msra.mxu0 %v1744
      %v1746 = vand.u32 %v438, 4294901760
      %1747 = vmatprep.mubr.f32.mxu0 %v1746
      %v1748 = vand.u32 %v434, 4294901760
      %1749 = vmatmul.mubr.f32.gmra.mrb[0].mxu0 %v1748
      %v1750 = vpop.f32.mrb[0].mxu0
      %v1751 = vadd.f32 %v1614, %v1750
      %v1752 = vpop.f32.mrb[0].mxu0
      %v1753 = vadd.f32 %v1616, %v1752
      %1754 = vdwg.mxu0
      %v1755 = vand.u32 %v176, 4294901760
      %1756 = vmatprep.subr.mxu0 %v1755
      %v1757 = vand.u32 %v175, 4294901760
      %1758 = vmatpush1.xpose.msra.mxu0 %v1757
      %v1759 = vand.u32 %v184, 4294901760
      %1760 = vmatprep.subr.mxu0 %v1759
      %v1761 = vand.u32 %v183, 4294901760
      %1762 = vmatpush1.xpose.msra.mxu0 %v1761
      %v1763 = vand.u32 %v192, 4294901760
      %1764 = vmatprep.subr.mxu0 %v1763
      %v1765 = vand.u32 %v191, 4294901760
      %1766 = vmatpush1.xpose.msra.mxu0 %v1765
      %v1767 = vand.u32 %v200, 4294901760
      %1768 = vmatprep.subr.mxu0 %v1767
      %v1769 = vand.u32 %v199, 4294901760
      %1770 = vmatpush1.xpose.msra.mxu0 %v1769
      %v1771 = vand.u32 %v208, 4294901760
      %1772 = vmatprep.subr.mxu0 %v1771
      %v1773 = vand.u32 %v207, 4294901760
      %1774 = vmatpush1.xpose.msra.mxu0 %v1773
      %v1775 = vand.u32 %v216, 4294901760
      %1776 = vmatprep.subr.mxu0 %v1775
      %v1777 = vand.u32 %v215, 4294901760
      %1778 = vmatpush1.xpose.msra.mxu0 %v1777
      %v1779 = vand.u32 %v224, 4294901760
      %1780 = vmatprep.subr.mxu0 %v1779
      %v1781 = vand.u32 %v223, 4294901760
      %1782 = vmatpush1.xpose.msra.mxu0 %v1781
      %v1783 = vand.u32 %v232, 4294901760
      %1784 = vmatprep.subr.mxu0 %v1783
      %v1785 = vand.u32 %v231, 4294901760
      %1786 = vmatpush1.xpose.msra.mxu0 %v1785
      %v1787 = vand.u32 %v240, 4294901760
      %1788 = vmatprep.subr.mxu0 %v1787
      %v1789 = vand.u32 %v239, 4294901760
      %1790 = vmatpush1.xpose.msra.mxu0 %v1789
      %v1791 = vand.u32 %v248, 4294901760
      %1792 = vmatprep.subr.mxu0 %v1791
      %v1793 = vand.u32 %v247, 4294901760
      %1794 = vmatpush1.xpose.msra.mxu0 %v1793
      %v1795 = vand.u32 %v256, 4294901760
      %1796 = vmatprep.subr.mxu0 %v1795
      %v1797 = vand.u32 %v255, 4294901760
      %1798 = vmatpush1.xpose.msra.mxu0 %v1797
      %v1799 = vand.u32 %v264, 4294901760
      %1800 = vmatprep.subr.mxu0 %v1799
      %v1801 = vand.u32 %v263, 4294901760
      %1802 = vmatpush1.xpose.msra.mxu0 %v1801
      %v1803 = vand.u32 %v272, 4294901760
      %1804 = vmatprep.subr.mxu0 %v1803
      %v1805 = vand.u32 %v271, 4294901760
      %1806 = vmatpush1.xpose.msra.mxu0 %v1805
      %v1807 = vand.u32 %v280, 4294901760
      %1808 = vmatprep.subr.mxu0 %v1807
      %v1809 = vand.u32 %v279, 4294901760
      %1810 = vmatpush1.xpose.msra.mxu0 %v1809
      %v1811 = vand.u32 %v288, 4294901760
      %1812 = vmatprep.subr.mxu0 %v1811
      %v1813 = vand.u32 %v287, 4294901760
      %1814 = vmatpush1.xpose.msra.mxu0 %v1813
      %v1815 = vand.u32 %v296, 4294901760
      %1816 = vmatprep.subr.mxu0 %v1815
      %v1817 = vand.u32 %v295, 4294901760
      %1818 = vmatpush1.xpose.msra.mxu0 %v1817
      %v1819 = vand.u32 %v304, 4294901760
      %1820 = vmatprep.subr.mxu0 %v1819
      %v1821 = vand.u32 %v303, 4294901760
      %1822 = vmatpush1.xpose.msra.mxu0 %v1821
      %v1823 = vand.u32 %v312, 4294901760
      %1824 = vmatprep.subr.mxu0 %v1823
      %v1825 = vand.u32 %v311, 4294901760
      %1826 = vmatpush1.xpose.msra.mxu0 %v1825
      %v1827 = vand.u32 %v320, 4294901760
      %1828 = vmatprep.subr.mxu0 %v1827
      %v1829 = vand.u32 %v319, 4294901760
      %1830 = vmatpush1.xpose.msra.mxu0 %v1829
      %v1831 = vand.u32 %v328, 4294901760
      %1832 = vmatprep.subr.mxu0 %v1831
      %v1833 = vand.u32 %v327, 4294901760
      %1834 = vmatpush1.xpose.msra.mxu0 %v1833
      %v1835 = vand.u32 %v336, 4294901760
      %1836 = vmatprep.subr.mxu0 %v1835
      %v1837 = vand.u32 %v335, 4294901760
      %1838 = vmatpush1.xpose.msra.mxu0 %v1837
      %v1839 = vand.u32 %v344, 4294901760
      %1840 = vmatprep.subr.mxu0 %v1839
      %v1841 = vand.u32 %v343, 4294901760
      %1842 = vmatpush1.xpose.msra.mxu0 %v1841
      %v1843 = vand.u32 %v352, 4294901760
      %1844 = vmatprep.subr.mxu0 %v1843
      %v1845 = vand.u32 %v351, 4294901760
      %1846 = vmatpush1.xpose.msra.mxu0 %v1845
      %v1847 = vand.u32 %v360, 4294901760
      %1848 = vmatprep.subr.mxu0 %v1847
      %v1849 = vand.u32 %v359, 4294901760
      %1850 = vmatpush1.xpose.msra.mxu0 %v1849
      %v1851 = vand.u32 %v368, 4294901760
      %1852 = vmatprep.subr.mxu0 %v1851
      %v1853 = vand.u32 %v367, 4294901760
      %1854 = vmatpush1.xpose.msra.mxu0 %v1853
      %v1855 = vand.u32 %v376, 4294901760
      %1856 = vmatprep.subr.mxu0 %v1855
      %v1857 = vand.u32 %v375, 4294901760
      %1858 = vmatpush1.xpose.msra.mxu0 %v1857
      %v1859 = vand.u32 %v384, 4294901760
      %1860 = vmatprep.subr.mxu0 %v1859
      %v1861 = vand.u32 %v383, 4294901760
      %1862 = vmatpush1.xpose.msra.mxu0 %v1861
      %v1863 = vand.u32 %v392, 4294901760
      %1864 = vmatprep.subr.mxu0 %v1863
      %v1865 = vand.u32 %v391, 4294901760
      %1866 = vmatpush1.xpose.msra.mxu0 %v1865
      %v1867 = vand.u32 %v400, 4294901760
      %1868 = vmatprep.subr.mxu0 %v1867
      %v1869 = vand.u32 %v399, 4294901760
      %1870 = vmatpush1.xpose.msra.mxu0 %v1869
      %v1871 = vand.u32 %v408, 4294901760
      %1872 = vmatprep.subr.mxu0 %v1871
      %v1873 = vand.u32 %v407, 4294901760
      %1874 = vmatpush1.xpose.msra.mxu0 %v1873
      %v1875 = vand.u32 %v416, 4294901760
      %1876 = vmatprep.subr.mxu0 %v1875
      %v1877 = vand.u32 %v415, 4294901760
      %1878 = vmatpush1.xpose.msra.mxu0 %v1877
      %v1879 = vand.u32 %v424, 4294901760
      %1880 = vmatprep.subr.mxu0 %v1879
      %v1881 = vand.u32 %v423, 4294901760
      %1882 = vmatpush1.xpose.msra.mxu0 %v1881
      %v1883 = vand.u32 %v446, 4294901760
      %v1884 = vsub.f32 %v446, %v1883
      %v1885 = vand.u32 %v1884, 4294901760
      %v1886 = vsub.f32 %v1884, %v1885
      %v1887 = vand.u32 %v1886, 4294901760
      %1888 = vmatprep.mubr.f32.mxu0 %v1887
      %v1889 = vand.u32 %v442, 4294901760
      %v1890 = vsub.f32 %v442, %v1889
      %v1891 = vand.u32 %v1890, 4294901760
      %v1892 = vsub.f32 %v1890, %v1891
      %v1893 = vand.u32 %v1892, 4294901760
      %1894 = vmatmul.mubr.f32.gmra.mrb[0].mxu0 %v1893
      %v1895 = vpop.f32.mrb[0].mxu0
      %v1896 = vadd.f32 %v1751, %v1895
      %v1897 = vpop.f32.mrb[0].mxu0
      %v1898 = vadd.f32 %v1753, %v1897
      %1899 = vdwg.mxu0
      %v1900 = vand.u32 %v176, 4294901760
      %v1901 = vsub.f32 %v176, %v1900
      %v1902 = vand.u32 %v1901, 4294901760
      %v1903 = vsub.f32 %v1901, %v1902
      %v1904 = vand.u32 %v1903, 4294901760
      %1905 = vmatprep.subr.mxu0 %v1904
      %v1906 = vand.u32 %v175, 4294901760
      %v1907 = vsub.f32 %v175, %v1906
      %v1908 = vand.u32 %v1907, 4294901760
      %v1909 = vsub.f32 %v1907, %v1908
      %v1910 = vand.u32 %v1909, 4294901760
      %1911 = vmatpush1.xpose.msra.mxu0 %v1910
      %v1912 = vand.u32 %v184, 4294901760
      %v1913 = vsub.f32 %v184, %v1912
      %v1914 = vand.u32 %v1913, 4294901760
      %v1915 = vsub.f32 %v1913, %v1914
      %v1916 = vand.u32 %v1915, 4294901760
      %1917 = vmatprep.subr.mxu0 %v1916
      %v1918 = vand.u32 %v183, 4294901760
      %v1919 = vsub.f32 %v183, %v1918
      %v1920 = vand.u32 %v1919, 4294901760
      %v1921 = vsub.f32 %v1919, %v1920
      %v1922 = vand.u32 %v1921, 4294901760
      %1923 = vmatpush1.xpose.msra.mxu0 %v1922
      %v1924 = vand.u32 %v192, 4294901760
      %v1925 = vsub.f32 %v192, %v1924
      %v1926 = vand.u32 %v1925, 4294901760
      %v1927 = vsub.f32 %v1925, %v1926
      %v1928 = vand.u32 %v1927, 4294901760
      %1929 = vmatprep.subr.mxu0 %v1928
      %v1930 = vand.u32 %v191, 4294901760
      %v1931 = vsub.f32 %v191, %v1930
      %v1932 = vand.u32 %v1931, 4294901760
      %v1933 = vsub.f32 %v1931, %v1932
      %v1934 = vand.u32 %v1933, 4294901760
      %1935 = vmatpush1.xpose.msra.mxu0 %v1934
      %v1936 = vand.u32 %v200, 4294901760
      %v1937 = vsub.f32 %v200, %v1936
      %v1938 = vand.u32 %v1937, 4294901760
      %v1939 = vsub.f32 %v1937, %v1938
      %v1940 = vand.u32 %v1939, 4294901760
      %1941 = vmatprep.subr.mxu0 %v1940
      %v1942 = vand.u32 %v199, 4294901760
      %v1943 = vsub.f32 %v199, %v1942
      %v1944 = vand.u32 %v1943, 4294901760
      %v1945 = vsub.f32 %v1943, %v1944
      %v1946 = vand.u32 %v1945, 4294901760
      %1947 = vmatpush1.xpose.msra.mxu0 %v1946
      %v1948 = vand.u32 %v208, 4294901760
      %v1949 = vsub.f32 %v208, %v1948
      %v1950 = vand.u32 %v1949, 4294901760
      %v1951 = vsub.f32 %v1949, %v1950
      %v1952 = vand.u32 %v1951, 4294901760
      %1953 = vmatprep.subr.mxu0 %v1952
      %v1954 = vand.u32 %v207, 4294901760
      %v1955 = vsub.f32 %v207, %v1954
      %v1956 = vand.u32 %v1955, 4294901760
      %v1957 = vsub.f32 %v1955, %v1956
      %v1958 = vand.u32 %v1957, 4294901760
      %1959 = vmatpush1.xpose.msra.mxu0 %v1958
      %v1960 = vand.u32 %v216, 4294901760
      %v1961 = vsub.f32 %v216, %v1960
      %v1962 = vand.u32 %v1961, 4294901760
      %v1963 = vsub.f32 %v1961, %v1962
      %v1964 = vand.u32 %v1963, 4294901760
      %1965 = vmatprep.subr.mxu0 %v1964
      %v1966 = vand.u32 %v215, 4294901760
      %v1967 = vsub.f32 %v215, %v1966
      %v1968 = vand.u32 %v1967, 4294901760
      %v1969 = vsub.f32 %v1967, %v1968
      %v1970 = vand.u32 %v1969, 4294901760
      %1971 = vmatpush1.xpose.msra.mxu0 %v1970
      %v1972 = vand.u32 %v224, 4294901760
      %v1973 = vsub.f32 %v224, %v1972
      %v1974 = vand.u32 %v1973, 4294901760
      %v1975 = vsub.f32 %v1973, %v1974
      %v1976 = vand.u32 %v1975, 4294901760
      %1977 = vmatprep.subr.mxu0 %v1976
      %v1978 = vand.u32 %v223, 4294901760
      %v1979 = vsub.f32 %v223, %v1978
      %v1980 = vand.u32 %v1979, 4294901760
      %v1981 = vsub.f32 %v1979, %v1980
      %v1982 = vand.u32 %v1981, 4294901760
      %1983 = vmatpush1.xpose.msra.mxu0 %v1982
      %v1984 = vand.u32 %v232, 4294901760
      %v1985 = vsub.f32 %v232, %v1984
      %v1986 = vand.u32 %v1985, 4294901760
      %v1987 = vsub.f32 %v1985, %v1986
      %v1988 = vand.u32 %v1987, 4294901760
      %1989 = vmatprep.subr.mxu0 %v1988
      %v1990 = vand.u32 %v231, 4294901760
      %v1991 = vsub.f32 %v231, %v1990
      %v1992 = vand.u32 %v1991, 4294901760
      %v1993 = vsub.f32 %v1991, %v1992
      %v1994 = vand.u32 %v1993, 4294901760
      %1995 = vmatpush1.xpose.msra.mxu0 %v1994
      %v1996 = vand.u32 %v240, 4294901760
      %v1997 = vsub.f32 %v240, %v1996
      %v1998 = vand.u32 %v1997, 4294901760
      %v1999 = vsub.f32 %v1997, %v1998
      %v2000 = vand.u32 %v1999, 4294901760
      %2001 = vmatprep.subr.mxu0 %v2000
      %v2002 = vand.u32 %v239, 4294901760
      %v2003 = vsub.f32 %v239, %v2002
      %v2004 = vand.u32 %v2003, 4294901760
      %v2005 = vsub.f32 %v2003, %v2004
      %v2006 = vand.u32 %v2005, 4294901760
      %2007 = vmatpush1.xpose.msra.mxu0 %v2006
      %v2008 = vand.u32 %v248, 4294901760
      %v2009 = vsub.f32 %v248, %v2008
      %v2010 = vand.u32 %v2009, 4294901760
      %v2011 = vsub.f32 %v2009, %v2010
      %v2012 = vand.u32 %v2011, 4294901760
      %2013 = vmatprep.subr.mxu0 %v2012
      %v2014 = vand.u32 %v247, 4294901760
      %v2015 = vsub.f32 %v247, %v2014
      %v2016 = vand.u32 %v2015, 4294901760
      %v2017 = vsub.f32 %v2015, %v2016
      %v2018 = vand.u32 %v2017, 4294901760
      %2019 = vmatpush1.xpose.msra.mxu0 %v2018
      %v2020 = vand.u32 %v256, 4294901760
      %v2021 = vsub.f32 %v256, %v2020
      %v2022 = vand.u32 %v2021, 4294901760
      %v2023 = vsub.f32 %v2021, %v2022
      %v2024 = vand.u32 %v2023, 4294901760
      %2025 = vmatprep.subr.mxu0 %v2024
      %v2026 = vand.u32 %v255, 4294901760
      %v2027 = vsub.f32 %v255, %v2026
      %v2028 = vand.u32 %v2027, 4294901760
      %v2029 = vsub.f32 %v2027, %v2028
      %v2030 = vand.u32 %v2029, 4294901760
      %2031 = vmatpush1.xpose.msra.mxu0 %v2030
      %v2032 = vand.u32 %v264, 4294901760
      %v2033 = vsub.f32 %v264, %v2032
      %v2034 = vand.u32 %v2033, 4294901760
      %v2035 = vsub.f32 %v2033, %v2034
      %v2036 = vand.u32 %v2035, 4294901760
      %2037 = vmatprep.subr.mxu0 %v2036
      %v2038 = vand.u32 %v263, 4294901760
      %v2039 = vsub.f32 %v263, %v2038
      %v2040 = vand.u32 %v2039, 4294901760
      %v2041 = vsub.f32 %v2039, %v2040
      %v2042 = vand.u32 %v2041, 4294901760
      %2043 = vmatpush1.xpose.msra.mxu0 %v2042
      %v2044 = vand.u32 %v272, 4294901760
      %v2045 = vsub.f32 %v272, %v2044
      %v2046 = vand.u32 %v2045, 4294901760
      %v2047 = vsub.f32 %v2045, %v2046
      %v2048 = vand.u32 %v2047, 4294901760
      %2049 = vmatprep.subr.mxu0 %v2048
      %v2050 = vand.u32 %v271, 4294901760
      %v2051 = vsub.f32 %v271, %v2050
      %v2052 = vand.u32 %v2051, 4294901760
      %v2053 = vsub.f32 %v2051, %v2052
      %v2054 = vand.u32 %v2053, 4294901760
      %2055 = vmatpush1.xpose.msra.mxu0 %v2054
      %v2056 = vand.u32 %v280, 4294901760
      %v2057 = vsub.f32 %v280, %v2056
      %v2058 = vand.u32 %v2057, 4294901760
      %v2059 = vsub.f32 %v2057, %v2058
      %v2060 = vand.u32 %v2059, 4294901760
      %2061 = vmatprep.subr.mxu0 %v2060
      %v2062 = vand.u32 %v279, 4294901760
      %v2063 = vsub.f32 %v279, %v2062
      %v2064 = vand.u32 %v2063, 4294901760
      %v2065 = vsub.f32 %v2063, %v2064
      %v2066 = vand.u32 %v2065, 4294901760
      %2067 = vmatpush1.xpose.msra.mxu0 %v2066
      %v2068 = vand.u32 %v288, 4294901760
      %v2069 = vsub.f32 %v288, %v2068
      %v2070 = vand.u32 %v2069, 4294901760
      %v2071 = vsub.f32 %v2069, %v2070
      %v2072 = vand.u32 %v2071, 4294901760
      %2073 = vmatprep.subr.mxu0 %v2072
      %v2074 = vand.u32 %v287, 4294901760
      %v2075 = vsub.f32 %v287, %v2074
      %v2076 = vand.u32 %v2075, 4294901760
      %v2077 = vsub.f32 %v2075, %v2076
      %v2078 = vand.u32 %v2077, 4294901760
      %2079 = vmatpush1.xpose.msra.mxu0 %v2078
      %v2080 = vand.u32 %v296, 4294901760
      %v2081 = vsub.f32 %v296, %v2080
      %v2082 = vand.u32 %v2081, 4294901760
      %v2083 = vsub.f32 %v2081, %v2082
      %v2084 = vand.u32 %v2083, 4294901760
      %2085 = vmatprep.subr.mxu0 %v2084
      %v2086 = vand.u32 %v295, 4294901760
      %v2087 = vsub.f32 %v295, %v2086
      %v2088 = vand.u32 %v2087, 4294901760
      %v2089 = vsub.f32 %v2087, %v2088
      %v2090 = vand.u32 %v2089, 4294901760
      %2091 = vmatpush1.xpose.msra.mxu0 %v2090
      %v2092 = vand.u32 %v304, 4294901760
      %v2093 = vsub.f32 %v304, %v2092
      %v2094 = vand.u32 %v2093, 4294901760
      %v2095 = vsub.f32 %v2093, %v2094
      %v2096 = vand.u32 %v2095, 4294901760
      %2097 = vmatprep.subr.mxu0 %v2096
      %v2098 = vand.u32 %v303, 4294901760
      %v2099 = vsub.f32 %v303, %v2098
      %v2100 = vand.u32 %v2099, 4294901760
      %v2101 = vsub.f32 %v2099, %v2100
      %v2102 = vand.u32 %v2101, 4294901760
      %2103 = vmatpush1.xpose.msra.mxu0 %v2102
      %v2104 = vand.u32 %v312, 4294901760
      %v2105 = vsub.f32 %v312, %v2104
      %v2106 = vand.u32 %v2105, 4294901760
      %v2107 = vsub.f32 %v2105, %v2106
      %v2108 = vand.u32 %v2107, 4294901760
      %2109 = vmatprep.subr.mxu0 %v2108
      %v2110 = vand.u32 %v311, 4294901760
      %v2111 = vsub.f32 %v311, %v2110
      %v2112 = vand.u32 %v2111, 4294901760
      %v2113 = vsub.f32 %v2111, %v2112
      %v2114 = vand.u32 %v2113, 4294901760
      %2115 = vmatpush1.xpose.msra.mxu0 %v2114
      %v2116 = vand.u32 %v320, 4294901760
      %v2117 = vsub.f32 %v320, %v2116
      %v2118 = vand.u32 %v2117, 4294901760
      %v2119 = vsub.f32 %v2117, %v2118
      %v2120 = vand.u32 %v2119, 4294901760
      %2121 = vmatprep.subr.mxu0 %v2120
      %v2122 = vand.u32 %v319, 4294901760
      %v2123 = vsub.f32 %v319, %v2122
      %v2124 = vand.u32 %v2123, 4294901760
      %v2125 = vsub.f32 %v2123, %v2124
      %v2126 = vand.u32 %v2125, 4294901760
      %2127 = vmatpush1.xpose.msra.mxu0 %v2126
      %v2128 = vand.u32 %v328, 4294901760
      %v2129 = vsub.f32 %v328, %v2128
      %v2130 = vand.u32 %v2129, 4294901760
      %v2131 = vsub.f32 %v2129, %v2130
      %v2132 = vand.u32 %v2131, 4294901760
      %2133 = vmatprep.subr.mxu0 %v2132
      %v2134 = vand.u32 %v327, 4294901760
      %v2135 = vsub.f32 %v327, %v2134
      %v2136 = vand.u32 %v2135, 4294901760
      %v2137 = vsub.f32 %v2135, %v2136
      %v2138 = vand.u32 %v2137, 4294901760
      %2139 = vmatpush1.xpose.msra.mxu0 %v2138
      %v2140 = vand.u32 %v336, 4294901760
      %v2141 = vsub.f32 %v336, %v2140
      %v2142 = vand.u32 %v2141, 4294901760
      %v2143 = vsub.f32 %v2141, %v2142
      %v2144 = vand.u32 %v2143, 4294901760
      %2145 = vmatprep.subr.mxu0 %v2144
      %v2146 = vand.u32 %v335, 4294901760
      %v2147 = vsub.f32 %v335, %v2146
      %v2148 = vand.u32 %v2147, 4294901760
      %v2149 = vsub.f32 %v2147, %v2148
      %v2150 = vand.u32 %v2149, 4294901760
      %2151 = vmatpush1.xpose.msra.mxu0 %v2150
      %v2152 = vand.u32 %v344, 4294901760
      %v2153 = vsub.f32 %v344, %v2152
      %v2154 = vand.u32 %v2153, 4294901760
      %v2155 = vsub.f32 %v2153, %v2154
      %v2156 = vand.u32 %v2155, 4294901760
      %2157 = vmatprep.subr.mxu0 %v2156
      %v2158 = vand.u32 %v343, 4294901760
      %v2159 = vsub.f32 %v343, %v2158
      %v2160 = vand.u32 %v2159, 4294901760
      %v2161 = vsub.f32 %v2159, %v2160
      %v2162 = vand.u32 %v2161, 4294901760
      %2163 = vmatpush1.xpose.msra.mxu0 %v2162
      %v2164 = vand.u32 %v352, 4294901760
      %v2165 = vsub.f32 %v352, %v2164
      %v2166 = vand.u32 %v2165, 4294901760
      %v2167 = vsub.f32 %v2165, %v2166
      %v2168 = vand.u32 %v2167, 4294901760
      %2169 = vmatprep.subr.mxu0 %v2168
      %v2170 = vand.u32 %v351, 4294901760
      %v2171 = vsub.f32 %v351, %v2170
      %v2172 = vand.u32 %v2171, 4294901760
      %v2173 = vsub.f32 %v2171, %v2172
      %v2174 = vand.u32 %v2173, 4294901760
      %2175 = vmatpush1.xpose.msra.mxu0 %v2174
      %v2176 = vand.u32 %v360, 4294901760
      %v2177 = vsub.f32 %v360, %v2176
      %v2178 = vand.u32 %v2177, 4294901760
      %v2179 = vsub.f32 %v2177, %v2178
      %v2180 = vand.u32 %v2179, 4294901760
      %2181 = vmatprep.subr.mxu0 %v2180
      %v2182 = vand.u32 %v359, 4294901760
      %v2183 = vsub.f32 %v359, %v2182
      %v2184 = vand.u32 %v2183, 4294901760
      %v2185 = vsub.f32 %v2183, %v2184
      %v2186 = vand.u32 %v2185, 4294901760
      %2187 = vmatpush1.xpose.msra.mxu0 %v2186
      %v2188 = vand.u32 %v368, 4294901760
      %v2189 = vsub.f32 %v368, %v2188
      %v2190 = vand.u32 %v2189, 4294901760
      %v2191 = vsub.f32 %v2189, %v2190
      %v2192 = vand.u32 %v2191, 4294901760
      %2193 = vmatprep.subr.mxu0 %v2192
      %v2194 = vand.u32 %v367, 4294901760
      %v2195 = vsub.f32 %v367, %v2194
      %v2196 = vand.u32 %v2195, 4294901760
      %v2197 = vsub.f32 %v2195, %v2196
      %v2198 = vand.u32 %v2197, 4294901760
      %2199 = vmatpush1.xpose.msra.mxu0 %v2198
      %v2200 = vand.u32 %v376, 4294901760
      %v2201 = vsub.f32 %v376, %v2200
      %v2202 = vand.u32 %v2201, 4294901760
      %v2203 = vsub.f32 %v2201, %v2202
      %v2204 = vand.u32 %v2203, 4294901760
      %2205 = vmatprep.subr.mxu0 %v2204
      %v2206 = vand.u32 %v375, 4294901760
      %v2207 = vsub.f32 %v375, %v2206
      %v2208 = vand.u32 %v2207, 4294901760
      %v2209 = vsub.f32 %v2207, %v2208
      %v2210 = vand.u32 %v2209, 4294901760
      %2211 = vmatpush1.xpose.msra.mxu0 %v2210
      %v2212 = vand.u32 %v384, 4294901760
      %v2213 = vsub.f32 %v384, %v2212
      %v2214 = vand.u32 %v2213, 4294901760
      %v2215 = vsub.f32 %v2213, %v2214
      %v2216 = vand.u32 %v2215, 4294901760
      %2217 = vmatprep.subr.mxu0 %v2216
      %v2218 = vand.u32 %v383, 4294901760
      %v2219 = vsub.f32 %v383, %v2218
      %v2220 = vand.u32 %v2219, 4294901760
      %v2221 = vsub.f32 %v2219, %v2220
      %v2222 = vand.u32 %v2221, 4294901760
      %2223 = vmatpush1.xpose.msra.mxu0 %v2222
      %v2224 = vand.u32 %v392, 4294901760
      %v2225 = vsub.f32 %v392, %v2224
      %v2226 = vand.u32 %v2225, 4294901760
      %v2227 = vsub.f32 %v2225, %v2226
      %v2228 = vand.u32 %v2227, 4294901760
      %2229 = vmatprep.subr.mxu0 %v2228
      %v2230 = vand.u32 %v391, 4294901760
      %v2231 = vsub.f32 %v391, %v2230
      %v2232 = vand.u32 %v2231, 4294901760
      %v2233 = vsub.f32 %v2231, %v2232
      %v2234 = vand.u32 %v2233, 4294901760
      %2235 = vmatpush1.xpose.msra.mxu0 %v2234
      %v2236 = vand.u32 %v400, 4294901760
      %v2237 = vsub.f32 %v400, %v2236
      %v2238 = vand.u32 %v2237, 4294901760
      %v2239 = vsub.f32 %v2237, %v2238
      %v2240 = vand.u32 %v2239, 4294901760
      %2241 = vmatprep.subr.mxu0 %v2240
      %v2242 = vand.u32 %v399, 4294901760
      %v2243 = vsub.f32 %v399, %v2242
      %v2244 = vand.u32 %v2243, 4294901760
      %v2245 = vsub.f32 %v2243, %v2244
      %v2246 = vand.u32 %v2245, 4294901760
      %2247 = vmatpush1.xpose.msra.mxu0 %v2246
      %v2248 = vand.u32 %v408, 4294901760
      %v2249 = vsub.f32 %v408, %v2248
      %v2250 = vand.u32 %v2249, 4294901760
      %v2251 = vsub.f32 %v2249, %v2250
      %v2252 = vand.u32 %v2251, 4294901760
      %2253 = vmatprep.subr.mxu0 %v2252
      %v2254 = vand.u32 %v407, 4294901760
      %v2255 = vsub.f32 %v407, %v2254
      %v2256 = vand.u32 %v2255, 4294901760
      %v2257 = vsub.f32 %v2255, %v2256
      %v2258 = vand.u32 %v2257, 4294901760
      %2259 = vmatpush1.xpose.msra.mxu0 %v2258
      %v2260 = vand.u32 %v416, 4294901760
      %v2261 = vsub.f32 %v416, %v2260
      %v2262 = vand.u32 %v2261, 4294901760
      %v2263 = vsub.f32 %v2261, %v2262
      %v2264 = vand.u32 %v2263, 4294901760
      %2265 = vmatprep.subr.mxu0 %v2264
      %v2266 = vand.u32 %v415, 4294901760
      %v2267 = vsub.f32 %v415, %v2266
      %v2268 = vand.u32 %v2267, 4294901760
      %v2269 = vsub.f32 %v2267, %v2268
      %v2270 = vand.u32 %v2269, 4294901760
      %2271 = vmatpush1.xpose.msra.mxu0 %v2270
      %v2272 = vand.u32 %v424, 4294901760
      %v2273 = vsub.f32 %v424, %v2272
      %v2274 = vand.u32 %v2273, 4294901760
      %v2275 = vsub.f32 %v2273, %v2274
      %v2276 = vand.u32 %v2275, 4294901760
      %2277 = vmatprep.subr.mxu0 %v2276
      %v2278 = vand.u32 %v423, 4294901760
      %v2279 = vsub.f32 %v423, %v2278
      %v2280 = vand.u32 %v2279, 4294901760
      %v2281 = vsub.f32 %v2279, %v2280
      %v2282 = vand.u32 %v2281, 4294901760
      %2283 = vmatpush1.xpose.msra.mxu0 %v2282
      %v2284 = vand.u32 %v446, 4294901760
      %2285 = vmatprep.mubr.f32.mxu0 %v2284
      %v2286 = vand.u32 %v442, 4294901760
      %2287 = vmatmul.mubr.f32.gmra.mrb[0].mxu0 %v2286
      %v2288 = vpop.f32.mrb[0].mxu0
      %v2289 = vadd.f32 %v1896, %v2288
      %v2290 = vpop.f32.mrb[0].mxu0
      %v2291 = vadd.f32 %v1898, %v2290
      %2292 = vdwg.mxu0
      %v2293 = vand.u32 %v176, 4294901760
      %v2294 = vsub.f32 %v176, %v2293
      %2295 = vmatprep.subr.mxu0 %v2294
      %v2296 = vand.u32 %v175, 4294901760
      %v2297 = vsub.f32 %v175, %v2296
      %2298 = vmatpush1.xpose.msra.mxu0 %v2297
      %v2299 = vand.u32 %v184, 4294901760
      %v2300 = vsub.f32 %v184, %v2299
      %2301 = vmatprep.subr.mxu0 %v2300
      %v2302 = vand.u32 %v183, 4294901760
      %v2303 = vsub.f32 %v183, %v2302
      %2304 = vmatpush1.xpose.msra.mxu0 %v2303
      %v2305 = vand.u32 %v192, 4294901760
      %v2306 = vsub.f32 %v192, %v2305
      %2307 = vmatprep.subr.mxu0 %v2306
      %v2308 = vand.u32 %v191, 4294901760
      %v2309 = vsub.f32 %v191, %v2308
      %2310 = vmatpush1.xpose.msra.mxu0 %v2309
      %v2311 = vand.u32 %v200, 4294901760
      %v2312 = vsub.f32 %v200, %v2311
      %2313 = vmatprep.subr.mxu0 %v2312
      %v2314 = vand.u32 %v199, 4294901760
      %v2315 = vsub.f32 %v199, %v2314
      %2316 = vmatpush1.xpose.msra.mxu0 %v2315
      %v2317 = vand.u32 %v208, 4294901760
      %v2318 = vsub.f32 %v208, %v2317
      %2319 = vmatprep.subr.mxu0 %v2318
      %v2320 = vand.u32 %v207, 4294901760
      %v2321 = vsub.f32 %v207, %v2320
      %2322 = vmatpush1.xpose.msra.mxu0 %v2321
      %v2323 = vand.u32 %v216, 4294901760
      %v2324 = vsub.f32 %v216, %v2323
      %2325 = vmatprep.subr.mxu0 %v2324
      %v2326 = vand.u32 %v215, 4294901760
      %v2327 = vsub.f32 %v215, %v2326
      %2328 = vmatpush1.xpose.msra.mxu0 %v2327
      %v2329 = vand.u32 %v224, 4294901760
      %v2330 = vsub.f32 %v224, %v2329
      %2331 = vmatprep.subr.mxu0 %v2330
      %v2332 = vand.u32 %v223, 4294901760
      %v2333 = vsub.f32 %v223, %v2332
      %2334 = vmatpush1.xpose.msra.mxu0 %v2333
      %v2335 = vand.u32 %v232, 4294901760
      %v2336 = vsub.f32 %v232, %v2335
      %2337 = vmatprep.subr.mxu0 %v2336
      %v2338 = vand.u32 %v231, 4294901760
      %v2339 = vsub.f32 %v231, %v2338
      %2340 = vmatpush1.xpose.msra.mxu0 %v2339
      %v2341 = vand.u32 %v240, 4294901760
      %v2342 = vsub.f32 %v240, %v2341
      %2343 = vmatprep.subr.mxu0 %v2342
      %v2344 = vand.u32 %v239, 4294901760
      %v2345 = vsub.f32 %v239, %v2344
      %2346 = vmatpush1.xpose.msra.mxu0 %v2345
      %v2347 = vand.u32 %v248, 4294901760
      %v2348 = vsub.f32 %v248, %v2347
      %2349 = vmatprep.subr.mxu0 %v2348
      %v2350 = vand.u32 %v247, 4294901760
      %v2351 = vsub.f32 %v247, %v2350
      %2352 = vmatpush1.xpose.msra.mxu0 %v2351
      %v2353 = vand.u32 %v256, 4294901760
      %v2354 = vsub.f32 %v256, %v2353
      %2355 = vmatprep.subr.mxu0 %v2354
      %v2356 = vand.u32 %v255, 4294901760
      %v2357 = vsub.f32 %v255, %v2356
      %2358 = vmatpush1.xpose.msra.mxu0 %v2357
      %v2359 = vand.u32 %v264, 4294901760
      %v2360 = vsub.f32 %v264, %v2359
      %2361 = vmatprep.subr.mxu0 %v2360
      %v2362 = vand.u32 %v263, 4294901760
      %v2363 = vsub.f32 %v263, %v2362
      %2364 = vmatpush1.xpose.msra.mxu0 %v2363
      %v2365 = vand.u32 %v272, 4294901760
      %v2366 = vsub.f32 %v272, %v2365
      %2367 = vmatprep.subr.mxu0 %v2366
      %v2368 = vand.u32 %v271, 4294901760
      %v2369 = vsub.f32 %v271, %v2368
      %2370 = vmatpush1.xpose.msra.mxu0 %v2369
      %v2371 = vand.u32 %v280, 4294901760
      %v2372 = vsub.f32 %v280, %v2371
      %2373 = vmatprep.subr.mxu0 %v2372
      %v2374 = vand.u32 %v279, 4294901760
      %v2375 = vsub.f32 %v279, %v2374
      %2376 = vmatpush1.xpose.msra.mxu0 %v2375
      %v2377 = vand.u32 %v288, 4294901760
      %v2378 = vsub.f32 %v288, %v2377
      %2379 = vmatprep.subr.mxu0 %v2378
      %v2380 = vand.u32 %v287, 4294901760
      %v2381 = vsub.f32 %v287, %v2380
      %2382 = vmatpush1.xpose.msra.mxu0 %v2381
      %v2383 = vand.u32 %v296, 4294901760
      %v2384 = vsub.f32 %v296, %v2383
      %2385 = vmatprep.subr.mxu0 %v2384
      %v2386 = vand.u32 %v295, 4294901760
      %v2387 = vsub.f32 %v295, %v2386
      %2388 = vmatpush1.xpose.msra.mxu0 %v2387
      %v2389 = vand.u32 %v304, 4294901760
      %v2390 = vsub.f32 %v304, %v2389
      %2391 = vmatprep.subr.mxu0 %v2390
      %v2392 = vand.u32 %v303, 4294901760
      %v2393 = vsub.f32 %v303, %v2392
      %2394 = vmatpush1.xpose.msra.mxu0 %v2393
      %v2395 = vand.u32 %v312, 4294901760
      %v2396 = vsub.f32 %v312, %v2395
      %2397 = vmatprep.subr.mxu0 %v2396
      %v2398 = vand.u32 %v311, 4294901760
      %v2399 = vsub.f32 %v311, %v2398
      %2400 = vmatpush1.xpose.msra.mxu0 %v2399
      %v2401 = vand.u32 %v320, 4294901760
      %v2402 = vsub.f32 %v320, %v2401
      %2403 = vmatprep.subr.mxu0 %v2402
      %v2404 = vand.u32 %v319, 4294901760
      %v2405 = vsub.f32 %v319, %v2404
      %2406 = vmatpush1.xpose.msra.mxu0 %v2405
      %v2407 = vand.u32 %v328, 4294901760
      %v2408 = vsub.f32 %v328, %v2407
      %2409 = vmatprep.subr.mxu0 %v2408
      %v2410 = vand.u32 %v327, 4294901760
      %v2411 = vsub.f32 %v327, %v2410
      %2412 = vmatpush1.xpose.msra.mxu0 %v2411
      %v2413 = vand.u32 %v336, 4294901760
      %v2414 = vsub.f32 %v336, %v2413
      %2415 = vmatprep.subr.mxu0 %v2414
      %v2416 = vand.u32 %v335, 4294901760
      %v2417 = vsub.f32 %v335, %v2416
      %2418 = vmatpush1.xpose.msra.mxu0 %v2417
      %v2419 = vand.u32 %v344, 4294901760
      %v2420 = vsub.f32 %v344, %v2419
      %2421 = vmatprep.subr.mxu0 %v2420
      %v2422 = vand.u32 %v343, 4294901760
      %v2423 = vsub.f32 %v343, %v2422
      %2424 = vmatpush1.xpose.msra.mxu0 %v2423
      %v2425 = vand.u32 %v352, 4294901760
      %v2426 = vsub.f32 %v352, %v2425
      %2427 = vmatprep.subr.mxu0 %v2426
      %v2428 = vand.u32 %v351, 4294901760
      %v2429 = vsub.f32 %v351, %v2428
      %2430 = vmatpush1.xpose.msra.mxu0 %v2429
      %v2431 = vand.u32 %v360, 4294901760
      %v2432 = vsub.f32 %v360, %v2431
      %2433 = vmatprep.subr.mxu0 %v2432
      %v2434 = vand.u32 %v359, 4294901760
      %v2435 = vsub.f32 %v359, %v2434
      %2436 = vmatpush1.xpose.msra.mxu0 %v2435
      %v2437 = vand.u32 %v368, 4294901760
      %v2438 = vsub.f32 %v368, %v2437
      %2439 = vmatprep.subr.mxu0 %v2438
      %v2440 = vand.u32 %v367, 4294901760
      %v2441 = vsub.f32 %v367, %v2440
      %2442 = vmatpush1.xpose.msra.mxu0 %v2441
      %v2443 = vand.u32 %v376, 4294901760
      %v2444 = vsub.f32 %v376, %v2443
      %2445 = vmatprep.subr.mxu0 %v2444
      %v2446 = vand.u32 %v375, 4294901760
      %v2447 = vsub.f32 %v375, %v2446
      %2448 = vmatpush1.xpose.msra.mxu0 %v2447
      %v2449 = vand.u32 %v384, 4294901760
      %v2450 = vsub.f32 %v384, %v2449
      %2451 = vmatprep.subr.mxu0 %v2450
      %v2452 = vand.u32 %v383, 4294901760
      %v2453 = vsub.f32 %v383, %v2452
      %2454 = vmatpush1.xpose.msra.mxu0 %v2453
      %v2455 = vand.u32 %v392, 4294901760
      %v2456 = vsub.f32 %v392, %v2455
      %2457 = vmatprep.subr.mxu0 %v2456
      %v2458 = vand.u32 %v391, 4294901760
      %v2459 = vsub.f32 %v391, %v2458
      %2460 = vmatpush1.xpose.msra.mxu0 %v2459
      %v2461 = vand.u32 %v400, 4294901760
      %v2462 = vsub.f32 %v400, %v2461
      %2463 = vmatprep.subr.mxu0 %v2462
      %v2464 = vand.u32 %v399, 4294901760
      %v2465 = vsub.f32 %v399, %v2464
      %2466 = vmatpush1.xpose.msra.mxu0 %v2465
      %v2467 = vand.u32 %v408, 4294901760
      %v2468 = vsub.f32 %v408, %v2467
      %2469 = vmatprep.subr.mxu0 %v2468
      %v2470 = vand.u32 %v407, 4294901760
      %v2471 = vsub.f32 %v407, %v2470
      %2472 = vmatpush1.xpose.msra.mxu0 %v2471
      %v2473 = vand.u32 %v416, 4294901760
      %v2474 = vsub.f32 %v416, %v2473
      %2475 = vmatprep.subr.mxu0 %v2474
      %v2476 = vand.u32 %v415, 4294901760
      %v2477 = vsub.f32 %v415, %v2476
      %2478 = vmatpush1.xpose.msra.mxu0 %v2477
      %v2479 = vand.u32 %v424, 4294901760
      %v2480 = vsub.f32 %v424, %v2479
      %2481 = vmatprep.subr.mxu0 %v2480
      %v2482 = vand.u32 %v423, 4294901760
      %v2483 = vsub.f32 %v423, %v2482
      %2484 = vmatpush1.xpose.msra.mxu0 %v2483
      %v2485 = vand.u32 %v446, 4294901760
      %v2486 = vsub.f32 %v446, %v2485
      %2487 = vmatprep.mubr.f32.mxu0 %v2486
      %v2488 = vand.u32 %v442, 4294901760
      %v2489 = vsub.f32 %v442, %v2488
      %2490 = vmatmul.mubr.f32.gmra.mrb[0].mxu0 %v2489
      %v2491 = vpop.f32.mrb[0].mxu0
      %v2492 = vadd.f32 %v2289, %v2491
      %v2493 = vpop.f32.mrb[0].mxu0
      %v2494 = vadd.f32 %v2291, %v2493
      %2495 = vdwg.mxu0
      %v2496 = vand.u32 %v176, 4294901760
      %2497 = vmatprep.subr.mxu0 %v2496
      %v2498 = vand.u32 %v175, 4294901760
      %2499 = vmatpush1.xpose.msra.mxu0 %v2498
      %v2500 = vand.u32 %v184, 4294901760
      %2501 = vmatprep.subr.mxu0 %v2500
      %v2502 = vand.u32 %v183, 4294901760
      %2503 = vmatpush1.xpose.msra.mxu0 %v2502
      %v2504 = vand.u32 %v192, 4294901760
      %2505 = vmatprep.subr.mxu0 %v2504
      %v2506 = vand.u32 %v191, 4294901760
      %2507 = vmatpush1.xpose.msra.mxu0 %v2506
      %v2508 = vand.u32 %v200, 4294901760
      %2509 = vmatprep.subr.mxu0 %v2508
      %v2510 = vand.u32 %v199, 4294901760
      %2511 = vmatpush1.xpose.msra.mxu0 %v2510
      %v2512 = vand.u32 %v208, 4294901760
      %2513 = vmatprep.subr.mxu0 %v2512
      %v2514 = vand.u32 %v207, 4294901760
      %2515 = vmatpush1.xpose.msra.mxu0 %v2514
      %v2516 = vand.u32 %v216, 4294901760
      %2517 = vmatprep.subr.mxu0 %v2516
      %v2518 = vand.u32 %v215, 4294901760
      %2519 = vmatpush1.xpose.msra.mxu0 %v2518
      %v2520 = vand.u32 %v224, 4294901760
      %2521 = vmatprep.subr.mxu0 %v2520
      %v2522 = vand.u32 %v223, 4294901760
      %2523 = vmatpush1.xpose.msra.mxu0 %v2522
      %v2524 = vand.u32 %v232, 4294901760
      %2525 = vmatprep.subr.mxu0 %v2524
      %v2526 = vand.u32 %v231, 4294901760
      %2527 = vmatpush1.xpose.msra.mxu0 %v2526
      %v2528 = vand.u32 %v240, 4294901760
      %2529 = vmatprep.subr.mxu0 %v2528
      %v2530 = vand.u32 %v239, 4294901760
      %2531 = vmatpush1.xpose.msra.mxu0 %v2530
      %v2532 = vand.u32 %v248, 4294901760
      %2533 = vmatprep.subr.mxu0 %v2532
      %v2534 = vand.u32 %v247, 4294901760
      %2535 = vmatpush1.xpose.msra.mxu0 %v2534
      %v2536 = vand.u32 %v256, 4294901760
      %2537 = vmatprep.subr.mxu0 %v2536
      %v2538 = vand.u32 %v255, 4294901760
      %2539 = vmatpush1.xpose.msra.mxu0 %v2538
      %v2540 = vand.u32 %v264, 4294901760
      %2541 = vmatprep.subr.mxu0 %v2540
      %v2542 = vand.u32 %v263, 4294901760
      %2543 = vmatpush1.xpose.msra.mxu0 %v2542
      %v2544 = vand.u32 %v272, 4294901760
      %2545 = vmatprep.subr.mxu0 %v2544
      %v2546 = vand.u32 %v271, 4294901760
      %2547 = vmatpush1.xpose.msra.mxu0 %v2546
      %v2548 = vand.u32 %v280, 4294901760
      %2549 = vmatprep.subr.mxu0 %v2548
      %v2550 = vand.u32 %v279, 4294901760
      %2551 = vmatpush1.xpose.msra.mxu0 %v2550
      %v2552 = vand.u32 %v288, 4294901760
      %2553 = vmatprep.subr.mxu0 %v2552
      %v2554 = vand.u32 %v287, 4294901760
      %2555 = vmatpush1.xpose.msra.mxu0 %v2554
      %v2556 = vand.u32 %v296, 4294901760
      %2557 = vmatprep.subr.mxu0 %v2556
      %v2558 = vand.u32 %v295, 4294901760
      %2559 = vmatpush1.xpose.msra.mxu0 %v2558
      %v2560 = vand.u32 %v304, 4294901760
      %2561 = vmatprep.subr.mxu0 %v2560
      %v2562 = vand.u32 %v303, 4294901760
      %2563 = vmatpush1.xpose.msra.mxu0 %v2562
      %v2564 = vand.u32 %v312, 4294901760
      %2565 = vmatprep.subr.mxu0 %v2564
      %v2566 = vand.u32 %v311, 4294901760
      %2567 = vmatpush1.xpose.msra.mxu0 %v2566
      %v2568 = vand.u32 %v320, 4294901760
      %2569 = vmatprep.subr.mxu0 %v2568
      %v2570 = vand.u32 %v319, 4294901760
      %2571 = vmatpush1.xpose.msra.mxu0 %v2570
      %v2572 = vand.u32 %v328, 4294901760
      %2573 = vmatprep.subr.mxu0 %v2572
      %v2574 = vand.u32 %v327, 4294901760
      %2575 = vmatpush1.xpose.msra.mxu0 %v2574
      %v2576 = vand.u32 %v336, 4294901760
      %2577 = vmatprep.subr.mxu0 %v2576
      %v2578 = vand.u32 %v335, 4294901760
      %2579 = vmatpush1.xpose.msra.mxu0 %v2578
      %v2580 = vand.u32 %v344, 4294901760
      %2581 = vmatprep.subr.mxu0 %v2580
      %v2582 = vand.u32 %v343, 4294901760
      %2583 = vmatpush1.xpose.msra.mxu0 %v2582
      %v2584 = vand.u32 %v352, 4294901760
      %2585 = vmatprep.subr.mxu0 %v2584
      %v2586 = vand.u32 %v351, 4294901760
      %2587 = vmatpush1.xpose.msra.mxu0 %v2586
      %v2588 = vand.u32 %v360, 4294901760
      %2589 = vmatprep.subr.mxu0 %v2588
      %v2590 = vand.u32 %v359, 4294901760
      %2591 = vmatpush1.xpose.msra.mxu0 %v2590
      %v2592 = vand.u32 %v368, 4294901760
      %2593 = vmatprep.subr.mxu0 %v2592
      %v2594 = vand.u32 %v367, 4294901760
      %2595 = vmatpush1.xpose.msra.mxu0 %v2594
      %v2596 = vand.u32 %v376, 4294901760
      %2597 = vmatprep.subr.mxu0 %v2596
      %v2598 = vand.u32 %v375, 4294901760
      %2599 = vmatpush1.xpose.msra.mxu0 %v2598
      %v2600 = vand.u32 %v384, 4294901760
      %2601 = vmatprep.subr.mxu0 %v2600
      %v2602 = vand.u32 %v383, 4294901760
      %2603 = vmatpush1.xpose.msra.mxu0 %v2602
      %v2604 = vand.u32 %v392, 4294901760
      %2605 = vmatprep.subr.mxu0 %v2604
      %v2606 = vand.u32 %v391, 4294901760
      %2607 = vmatpush1.xpose.msra.mxu0 %v2606
      %v2608 = vand.u32 %v400, 4294901760
      %2609 = vmatprep.subr.mxu0 %v2608
      %v2610 = vand.u32 %v399, 4294901760
      %2611 = vmatpush1.xpose.msra.mxu0 %v2610
      %v2612 = vand.u32 %v408, 4294901760
      %2613 = vmatprep.subr.mxu0 %v2612
      %v2614 = vand.u32 %v407, 4294901760
      %2615 = vmatpush1.xpose.msra.mxu0 %v2614
      %v2616 = vand.u32 %v416, 4294901760
      %2617 = vmatprep.subr.mxu0 %v2616
      %v2618 = vand.u32 %v415, 4294901760
      %2619 = vmatpush1.xpose.msra.mxu0 %v2618
      %v2620 = vand.u32 %v424, 4294901760
      %2621 = vmatprep.subr.mxu0 %v2620
      %v2622 = vand.u32 %v423, 4294901760
      %2623 = vmatpush1.xpose.msra.mxu0 %v2622
      %v2624 = vand.u32 %v446, 4294901760
      %v2625 = vsub.f32 %v446, %v2624
      %v2626 = vand.u32 %v2625, 4294901760
      %2627 = vmatprep.mubr.f32.mxu0 %v2626
      %v2628 = vand.u32 %v442, 4294901760
      %v2629 = vsub.f32 %v442, %v2628
      %v2630 = vand.u32 %v2629, 4294901760
      %2631 = vmatmul.mubr.f32.gmra.mrb[0].mxu0 %v2630
      %v2632 = vpop.f32.mrb[0].mxu0
      %v2633 = vadd.f32 %v2492, %v2632
      %v2634 = vpop.f32.mrb[0].mxu0
      %v2635 = vadd.f32 %v2494, %v2634
      %2636 = vdwg.mxu0
      %v2637 = vand.u32 %v176, 4294901760
      %v2638 = vsub.f32 %v176, %v2637
      %v2639 = vand.u32 %v2638, 4294901760
      %2640 = vmatprep.subr.mxu0 %v2639
      %v2641 = vand.u32 %v175, 4294901760
      %v2642 = vsub.f32 %v175, %v2641
      %v2643 = vand.u32 %v2642, 4294901760
      %2644 = vmatpush1.xpose.msra.mxu0 %v2643
      %v2645 = vand.u32 %v184, 4294901760
      %v2646 = vsub.f32 %v184, %v2645
      %v2647 = vand.u32 %v2646, 4294901760
      %2648 = vmatprep.subr.mxu0 %v2647
      %v2649 = vand.u32 %v183, 4294901760
      %v2650 = vsub.f32 %v183, %v2649
      %v2651 = vand.u32 %v2650, 4294901760
      %2652 = vmatpush1.xpose.msra.mxu0 %v2651
      %v2653 = vand.u32 %v192, 4294901760
      %v2654 = vsub.f32 %v192, %v2653
      %v2655 = vand.u32 %v2654, 4294901760
      %2656 = vmatprep.subr.mxu0 %v2655
      %v2657 = vand.u32 %v191, 4294901760
      %v2658 = vsub.f32 %v191, %v2657
      %v2659 = vand.u32 %v2658, 4294901760
      %2660 = vmatpush1.xpose.msra.mxu0 %v2659
      %v2661 = vand.u32 %v200, 4294901760
      %v2662 = vsub.f32 %v200, %v2661
      %v2663 = vand.u32 %v2662, 4294901760
      %2664 = vmatprep.subr.mxu0 %v2663
      %v2665 = vand.u32 %v199, 4294901760
      %v2666 = vsub.f32 %v199, %v2665
      %v2667 = vand.u32 %v2666, 4294901760
      %2668 = vmatpush1.xpose.msra.mxu0 %v2667
      %v2669 = vand.u32 %v208, 4294901760
      %v2670 = vsub.f32 %v208, %v2669
      %v2671 = vand.u32 %v2670, 4294901760
      %2672 = vmatprep.subr.mxu0 %v2671
      %v2673 = vand.u32 %v207, 4294901760
      %v2674 = vsub.f32 %v207, %v2673
      %v2675 = vand.u32 %v2674, 4294901760
      %2676 = vmatpush1.xpose.msra.mxu0 %v2675
      %v2677 = vand.u32 %v216, 4294901760
      %v2678 = vsub.f32 %v216, %v2677
      %v2679 = vand.u32 %v2678, 4294901760
      %2680 = vmatprep.subr.mxu0 %v2679
      %v2681 = vand.u32 %v215, 4294901760
      %v2682 = vsub.f32 %v215, %v2681
      %v2683 = vand.u32 %v2682, 4294901760
      %2684 = vmatpush1.xpose.msra.mxu0 %v2683
      %v2685 = vand.u32 %v224, 4294901760
      %v2686 = vsub.f32 %v224, %v2685
      %v2687 = vand.u32 %v2686, 4294901760
      %2688 = vmatprep.subr.mxu0 %v2687
      %v2689 = vand.u32 %v223, 4294901760
      %v2690 = vsub.f32 %v223, %v2689
      %v2691 = vand.u32 %v2690, 4294901760
      %2692 = vmatpush1.xpose.msra.mxu0 %v2691
      %v2693 = vand.u32 %v232, 4294901760
      %v2694 = vsub.f32 %v232, %v2693
      %v2695 = vand.u32 %v2694, 4294901760
      %2696 = vmatprep.subr.mxu0 %v2695
      %v2697 = vand.u32 %v231, 4294901760
      %v2698 = vsub.f32 %v231, %v2697
      %v2699 = vand.u32 %v2698, 4294901760
      %2700 = vmatpush1.xpose.msra.mxu0 %v2699
      %v2701 = vand.u32 %v240, 4294901760
      %v2702 = vsub.f32 %v240, %v2701
      %v2703 = vand.u32 %v2702, 4294901760
      %2704 = vmatprep.subr.mxu0 %v2703
      %v2705 = vand.u32 %v239, 4294901760
      %v2706 = vsub.f32 %v239, %v2705
      %v2707 = vand.u32 %v2706, 4294901760
      %2708 = vmatpush1.xpose.msra.mxu0 %v2707
      %v2709 = vand.u32 %v248, 4294901760
      %v2710 = vsub.f32 %v248, %v2709
      %v2711 = vand.u32 %v2710, 4294901760
      %2712 = vmatprep.subr.mxu0 %v2711
      %v2713 = vand.u32 %v247, 4294901760
      %v2714 = vsub.f32 %v247, %v2713
      %v2715 = vand.u32 %v2714, 4294901760
      %2716 = vmatpush1.xpose.msra.mxu0 %v2715
      %v2717 = vand.u32 %v256, 4294901760
      %v2718 = vsub.f32 %v256, %v2717
      %v2719 = vand.u32 %v2718, 4294901760
      %2720 = vmatprep.subr.mxu0 %v2719
      %v2721 = vand.u32 %v255, 4294901760
      %v2722 = vsub.f32 %v255, %v2721
      %v2723 = vand.u32 %v2722, 4294901760
      %2724 = vmatpush1.xpose.msra.mxu0 %v2723
      %v2725 = vand.u32 %v264, 4294901760
      %v2726 = vsub.f32 %v264, %v2725
      %v2727 = vand.u32 %v2726, 4294901760
      %2728 = vmatprep.subr.mxu0 %v2727
      %v2729 = vand.u32 %v263, 4294901760
      %v2730 = vsub.f32 %v263, %v2729
      %v2731 = vand.u32 %v2730, 4294901760
      %2732 = vmatpush1.xpose.msra.mxu0 %v2731
      %v2733 = vand.u32 %v272, 4294901760
      %v2734 = vsub.f32 %v272, %v2733
      %v2735 = vand.u32 %v2734, 4294901760
      %2736 = vmatprep.subr.mxu0 %v2735
      %v2737 = vand.u32 %v271, 4294901760
      %v2738 = vsub.f32 %v271, %v2737
      %v2739 = vand.u32 %v2738, 4294901760
      %2740 = vmatpush1.xpose.msra.mxu0 %v2739
      %v2741 = vand.u32 %v280, 4294901760
      %v2742 = vsub.f32 %v280, %v2741
      %v2743 = vand.u32 %v2742, 4294901760
      %2744 = vmatprep.subr.mxu0 %v2743
      %v2745 = vand.u32 %v279, 4294901760
      %v2746 = vsub.f32 %v279, %v2745
      %v2747 = vand.u32 %v2746, 4294901760
      %2748 = vmatpush1.xpose.msra.mxu0 %v2747
      %v2749 = vand.u32 %v288, 4294901760
      %v2750 = vsub.f32 %v288, %v2749
      %v2751 = vand.u32 %v2750, 4294901760
      %2752 = vmatprep.subr.mxu0 %v2751
      %v2753 = vand.u32 %v287, 4294901760
      %v2754 = vsub.f32 %v287, %v2753
      %v2755 = vand.u32 %v2754, 4294901760
      %2756 = vmatpush1.xpose.msra.mxu0 %v2755
      %v2757 = vand.u32 %v296, 4294901760
      %v2758 = vsub.f32 %v296, %v2757
      %v2759 = vand.u32 %v2758, 4294901760
      %2760 = vmatprep.subr.mxu0 %v2759
      %v2761 = vand.u32 %v295, 4294901760
      %v2762 = vsub.f32 %v295, %v2761
      %v2763 = vand.u32 %v2762, 4294901760
      %2764 = vmatpush1.xpose.msra.mxu0 %v2763
      %v2765 = vand.u32 %v304, 4294901760
      %v2766 = vsub.f32 %v304, %v2765
      %v2767 = vand.u32 %v2766, 4294901760
      %2768 = vmatprep.subr.mxu0 %v2767
      %v2769 = vand.u32 %v303, 4294901760
      %v2770 = vsub.f32 %v303, %v2769
      %v2771 = vand.u32 %v2770, 4294901760
      %2772 = vmatpush1.xpose.msra.mxu0 %v2771
      %v2773 = vand.u32 %v312, 4294901760
      %v2774 = vsub.f32 %v312, %v2773
      %v2775 = vand.u32 %v2774, 4294901760
      %2776 = vmatprep.subr.mxu0 %v2775
      %v2777 = vand.u32 %v311, 4294901760
      %v2778 = vsub.f32 %v311, %v2777
      %v2779 = vand.u32 %v2778, 4294901760
      %2780 = vmatpush1.xpose.msra.mxu0 %v2779
      %v2781 = vand.u32 %v320, 4294901760
      %v2782 = vsub.f32 %v320, %v2781
      %v2783 = vand.u32 %v2782, 4294901760
      %2784 = vmatprep.subr.mxu0 %v2783
      %v2785 = vand.u32 %v319, 4294901760
      %v2786 = vsub.f32 %v319, %v2785
      %v2787 = vand.u32 %v2786, 4294901760
      %2788 = vmatpush1.xpose.msra.mxu0 %v2787
      %v2789 = vand.u32 %v328, 4294901760
      %v2790 = vsub.f32 %v328, %v2789
      %v2791 = vand.u32 %v2790, 4294901760
      %2792 = vmatprep.subr.mxu0 %v2791
      %v2793 = vand.u32 %v327, 4294901760
      %v2794 = vsub.f32 %v327, %v2793
      %v2795 = vand.u32 %v2794, 4294901760
      %2796 = vmatpush1.xpose.msra.mxu0 %v2795
      %v2797 = vand.u32 %v336, 4294901760
      %v2798 = vsub.f32 %v336, %v2797
      %v2799 = vand.u32 %v2798, 4294901760
      %2800 = vmatprep.subr.mxu0 %v2799
      %v2801 = vand.u32 %v335, 4294901760
      %v2802 = vsub.f32 %v335, %v2801
      %v2803 = vand.u32 %v2802, 4294901760
      %2804 = vmatpush1.xpose.msra.mxu0 %v2803
      %v2805 = vand.u32 %v344, 4294901760
      %v2806 = vsub.f32 %v344, %v2805
      %v2807 = vand.u32 %v2806, 4294901760
      %2808 = vmatprep.subr.mxu0 %v2807
      %v2809 = vand.u32 %v343, 4294901760
      %v2810 = vsub.f32 %v343, %v2809
      %v2811 = vand.u32 %v2810, 4294901760
      %2812 = vmatpush1.xpose.msra.mxu0 %v2811
      %v2813 = vand.u32 %v352, 4294901760
      %v2814 = vsub.f32 %v352, %v2813
      %v2815 = vand.u32 %v2814, 4294901760
      %2816 = vmatprep.subr.mxu0 %v2815
      %v2817 = vand.u32 %v351, 4294901760
      %v2818 = vsub.f32 %v351, %v2817
      %v2819 = vand.u32 %v2818, 4294901760
      %2820 = vmatpush1.xpose.msra.mxu0 %v2819
      %v2821 = vand.u32 %v360, 4294901760
      %v2822 = vsub.f32 %v360, %v2821
      %v2823 = vand.u32 %v2822, 4294901760
      %2824 = vmatprep.subr.mxu0 %v2823
      %v2825 = vand.u32 %v359, 4294901760
      %v2826 = vsub.f32 %v359, %v2825
      %v2827 = vand.u32 %v2826, 4294901760
      %2828 = vmatpush1.xpose.msra.mxu0 %v2827
      %v2829 = vand.u32 %v368, 4294901760
      %v2830 = vsub.f32 %v368, %v2829
      %v2831 = vand.u32 %v2830, 4294901760
      %2832 = vmatprep.subr.mxu0 %v2831
      %v2833 = vand.u32 %v367, 4294901760
      %v2834 = vsub.f32 %v367, %v2833
      %v2835 = vand.u32 %v2834, 4294901760
      %2836 = vmatpush1.xpose.msra.mxu0 %v2835
      %v2837 = vand.u32 %v376, 4294901760
      %v2838 = vsub.f32 %v376, %v2837
      %v2839 = vand.u32 %v2838, 4294901760
      %2840 = vmatprep.subr.mxu0 %v2839
      %v2841 = vand.u32 %v375, 4294901760
      %v2842 = vsub.f32 %v375, %v2841
      %v2843 = vand.u32 %v2842, 4294901760
      %2844 = vmatpush1.xpose.msra.mxu0 %v2843
      %v2845 = vand.u32 %v384, 4294901760
      %v2846 = vsub.f32 %v384, %v2845
      %v2847 = vand.u32 %v2846, 4294901760
      %2848 = vmatprep.subr.mxu0 %v2847
      %v2849 = vand.u32 %v383, 4294901760
      %v2850 = vsub.f32 %v383, %v2849
      %v2851 = vand.u32 %v2850, 4294901760
      %2852 = vmatpush1.xpose.msra.mxu0 %v2851
      %v2853 = vand.u32 %v392, 4294901760
      %v2854 = vsub.f32 %v392, %v2853
      %v2855 = vand.u32 %v2854, 4294901760
      %2856 = vmatprep.subr.mxu0 %v2855
      %v2857 = vand.u32 %v391, 4294901760
      %v2858 = vsub.f32 %v391, %v2857
      %v2859 = vand.u32 %v2858, 4294901760
      %2860 = vmatpush1.xpose.msra.mxu0 %v2859
      %v2861 = vand.u32 %v400, 4294901760
      %v2862 = vsub.f32 %v400, %v2861
      %v2863 = vand.u32 %v2862, 4294901760
      %2864 = vmatprep.subr.mxu0 %v2863
      %v2865 = vand.u32 %v399, 4294901760
      %v2866 = vsub.f32 %v399, %v2865
      %v2867 = vand.u32 %v2866, 4294901760
      %2868 = vmatpush1.xpose.msra.mxu0 %v2867
      %v2869 = vand.u32 %v408, 4294901760
      %v2870 = vsub.f32 %v408, %v2869
      %v2871 = vand.u32 %v2870, 4294901760
      %2872 = vmatprep.subr.mxu0 %v2871
      %v2873 = vand.u32 %v407, 4294901760
      %v2874 = vsub.f32 %v407, %v2873
      %v2875 = vand.u32 %v2874, 4294901760
      %2876 = vmatpush1.xpose.msra.mxu0 %v2875
      %v2877 = vand.u32 %v416, 4294901760
      %v2878 = vsub.f32 %v416, %v2877
      %v2879 = vand.u32 %v2878, 4294901760
      %2880 = vmatprep.subr.mxu0 %v2879
      %v2881 = vand.u32 %v415, 4294901760
      %v2882 = vsub.f32 %v415, %v2881
      %v2883 = vand.u32 %v2882, 4294901760
      %2884 = vmatpush1.xpose.msra.mxu0 %v2883
      %v2885 = vand.u32 %v424, 4294901760
      %v2886 = vsub.f32 %v424, %v2885
      %v2887 = vand.u32 %v2886, 4294901760
      %2888 = vmatprep.subr.mxu0 %v2887
      %v2889 = vand.u32 %v423, 4294901760
      %v2890 = vsub.f32 %v423, %v2889
      %v2891 = vand.u32 %v2890, 4294901760
      %2892 = vmatpush1.xpose.msra.mxu0 %v2891
      %v2893 = vand.u32 %v446, 4294901760
      %2894 = vmatprep.mubr.f32.mxu0 %v2893
      %v2895 = vand.u32 %v442, 4294901760
      %2896 = vmatmul.mubr.f32.gmra.mrb[0].mxu0 %v2895
      %v2897 = vpop.f32.mrb[0].mxu0
      %v2898 = vadd.f32 %v2633, %v2897
      %v2899 = vpop.f32.mrb[0].mxu0
      %v2900 = vadd.f32 %v2635, %v2899
      %2901 = vdwg.mxu0
      %v2902 = vand.u32 %v176, 4294901760
      %2903 = vmatprep.subr.mxu0 %v2902
      %v2904 = vand.u32 %v175, 4294901760
      %2905 = vmatpush1.xpose.msra.mxu0 %v2904
      %v2906 = vand.u32 %v184, 4294901760
      %2907 = vmatprep.subr.mxu0 %v2906
      %v2908 = vand.u32 %v183, 4294901760
      %2909 = vmatpush1.xpose.msra.mxu0 %v2908
      %v2910 = vand.u32 %v192, 4294901760
      %2911 = vmatprep.subr.mxu0 %v2910
      %v2912 = vand.u32 %v191, 4294901760
      %2913 = vmatpush1.xpose.msra.mxu0 %v2912
      %v2914 = vand.u32 %v200, 4294901760
      %2915 = vmatprep.subr.mxu0 %v2914
      %v2916 = vand.u32 %v199, 4294901760
      %2917 = vmatpush1.xpose.msra.mxu0 %v2916
      %v2918 = vand.u32 %v208, 4294901760
      %2919 = vmatprep.subr.mxu0 %v2918
      %v2920 = vand.u32 %v207, 4294901760
      %2921 = vmatpush1.xpose.msra.mxu0 %v2920
      %v2922 = vand.u32 %v216, 4294901760
      %2923 = vmatprep.subr.mxu0 %v2922
      %v2924 = vand.u32 %v215, 4294901760
      %2925 = vmatpush1.xpose.msra.mxu0 %v2924
      %v2926 = vand.u32 %v224, 4294901760
      %2927 = vmatprep.subr.mxu0 %v2926
      %v2928 = vand.u32 %v223, 4294901760
      %2929 = vmatpush1.xpose.msra.mxu0 %v2928
      %v2930 = vand.u32 %v232, 4294901760
      %2931 = vmatprep.subr.mxu0 %v2930
      %v2932 = vand.u32 %v231, 4294901760
      %2933 = vmatpush1.xpose.msra.mxu0 %v2932
      %v2934 = vand.u32 %v240, 4294901760
      %2935 = vmatprep.subr.mxu0 %v2934
      %v2936 = vand.u32 %v239, 4294901760
      %2937 = vmatpush1.xpose.msra.mxu0 %v2936
      %v2938 = vand.u32 %v248, 4294901760
      %2939 = vmatprep.subr.mxu0 %v2938
      %v2940 = vand.u32 %v247, 4294901760
      %2941 = vmatpush1.xpose.msra.mxu0 %v2940
      %v2942 = vand.u32 %v256, 4294901760
      %2943 = vmatprep.subr.mxu0 %v2942
      %v2944 = vand.u32 %v255, 4294901760
      %2945 = vmatpush1.xpose.msra.mxu0 %v2944
      %v2946 = vand.u32 %v264, 4294901760
      %2947 = vmatprep.subr.mxu0 %v2946
      %v2948 = vand.u32 %v263, 4294901760
      %2949 = vmatpush1.xpose.msra.mxu0 %v2948
      %v2950 = vand.u32 %v272, 4294901760
      %2951 = vmatprep.subr.mxu0 %v2950
      %v2952 = vand.u32 %v271, 4294901760
      %2953 = vmatpush1.xpose.msra.mxu0 %v2952
      %v2954 = vand.u32 %v280, 4294901760
      %2955 = vmatprep.subr.mxu0 %v2954
      %v2956 = vand.u32 %v279, 4294901760
      %2957 = vmatpush1.xpose.msra.mxu0 %v2956
      %v2958 = vand.u32 %v288, 4294901760
      %2959 = vmatprep.subr.mxu0 %v2958
      %v2960 = vand.u32 %v287, 4294901760
      %2961 = vmatpush1.xpose.msra.mxu0 %v2960
      %v2962 = vand.u32 %v296, 4294901760
      %2963 = vmatprep.subr.mxu0 %v2962
      %v2964 = vand.u32 %v295, 4294901760
      %2965 = vmatpush1.xpose.msra.mxu0 %v2964
      %v2966 = vand.u32 %v304, 4294901760
      %2967 = vmatprep.subr.mxu0 %v2966
      %v2968 = vand.u32 %v303, 4294901760
      %2969 = vmatpush1.xpose.msra.mxu0 %v2968
      %v2970 = vand.u32 %v312, 4294901760
      %2971 = vmatprep.subr.mxu0 %v2970
      %v2972 = vand.u32 %v311, 4294901760
      %2973 = vmatpush1.xpose.msra.mxu0 %v2972
      %v2974 = vand.u32 %v320, 4294901760
      %2975 = vmatprep.subr.mxu0 %v2974
      %v2976 = vand.u32 %v319, 4294901760
      %2977 = vmatpush1.xpose.msra.mxu0 %v2976
      %v2978 = vand.u32 %v328, 4294901760
      %2979 = vmatprep.subr.mxu0 %v2978
      %v2980 = vand.u32 %v327, 4294901760
      %2981 = vmatpush1.xpose.msra.mxu0 %v2980
      %v2982 = vand.u32 %v336, 4294901760
      %2983 = vmatprep.subr.mxu0 %v2982
      %v2984 = vand.u32 %v335, 4294901760
      %2985 = vmatpush1.xpose.msra.mxu0 %v2984
      %v2986 = vand.u32 %v344, 4294901760
      %2987 = vmatprep.subr.mxu0 %v2986
      %v2988 = vand.u32 %v343, 4294901760
      %2989 = vmatpush1.xpose.msra.mxu0 %v2988
      %v2990 = vand.u32 %v352, 4294901760
      %2991 = vmatprep.subr.mxu0 %v2990
      %v2992 = vand.u32 %v351, 4294901760
      %2993 = vmatpush1.xpose.msra.mxu0 %v2992
      %v2994 = vand.u32 %v360, 4294901760
      %2995 = vmatprep.subr.mxu0 %v2994
      %v2996 = vand.u32 %v359, 4294901760
      %2997 = vmatpush1.xpose.msra.mxu0 %v2996
      %v2998 = vand.u32 %v368, 4294901760
      %2999 = vmatprep.subr.mxu0 %v2998
      %v3000 = vand.u32 %v367, 4294901760
      %3001 = vmatpush1.xpose.msra.mxu0 %v3000
      %v3002 = vand.u32 %v376, 4294901760
      %3003 = vmatprep.subr.mxu0 %v3002
      %v3004 = vand.u32 %v375, 4294901760
      %3005 = vmatpush1.xpose.msra.mxu0 %v3004
      %v3006 = vand.u32 %v384, 4294901760
      %3007 = vmatprep.subr.mxu0 %v3006
      %v3008 = vand.u32 %v383, 4294901760
      %3009 = vmatpush1.xpose.msra.mxu0 %v3008
      %v3010 = vand.u32 %v392, 4294901760
      %3011 = vmatprep.subr.mxu0 %v3010
      %v3012 = vand.u32 %v391, 4294901760
      %3013 = vmatpush1.xpose.msra.mxu0 %v3012
      %v3014 = vand.u32 %v400, 4294901760
      %3015 = vmatprep.subr.mxu0 %v3014
      %v3016 = vand.u32 %v399, 4294901760
      %3017 = vmatpush1.xpose.msra.mxu0 %v3016
      %v3018 = vand.u32 %v408, 4294901760
      %3019 = vmatprep.subr.mxu0 %v3018
      %v3020 = vand.u32 %v407, 4294901760
      %3021 = vmatpush1.xpose.msra.mxu0 %v3020
      %v3022 = vand.u32 %v416, 4294901760
      %3023 = vmatprep.subr.mxu0 %v3022
      %v3024 = vand.u32 %v415, 4294901760
      %3025 = vmatpush1.xpose.msra.mxu0 %v3024
      %v3026 = vand.u32 %v424, 4294901760
      %3027 = vmatprep.subr.mxu0 %v3026
      %v3028 = vand.u32 %v423, 4294901760
      %3029 = vmatpush1.xpose.msra.mxu0 %v3028
      %v3030 = vand.u32 %v446, 4294901760
      %3031 = vmatprep.mubr.f32.mxu0 %v3030
      %v3032 = vand.u32 %v442, 4294901760
      %3033 = vmatmul.mubr.f32.gmra.mrb[0].mxu0 %v3032
      %v3034 = vpop.f32.mrb[0].mxu0
      %v3035 = vadd.f32 %v2898, %v3034
      %v3036 = vpop.f32.mrb[0].mxu0
      %v3037 = vadd.f32 %v2900, %v3036
      %3038 = vdwg.mxu0
      %v3039 = vand.u32 %v178, 4294901760
      %3040 = vmatprep.subr.mxu0 %v3039
      %v3041 = vand.u32 %v177, 4294901760
      %3042 = vmatpush1.xpose.msra.mxu0 %v3041
      %v3043 = vand.u32 %v186, 4294901760
      %3044 = vmatprep.subr.mxu0 %v3043
      %v3045 = vand.u32 %v185, 4294901760
      %3046 = vmatpush1.xpose.msra.mxu0 %v3045
      %v3047 = vand.u32 %v194, 4294901760
      %3048 = vmatprep.subr.mxu0 %v3047
      %v3049 = vand.u32 %v193, 4294901760
      %3050 = vmatpush1.xpose.msra.mxu0 %v3049
      %v3051 = vand.u32 %v202, 4294901760
      %3052 = vmatprep.subr.mxu0 %v3051
      %v3053 = vand.u32 %v201, 4294901760
      %3054 = vmatpush1.xpose.msra.mxu0 %v3053
      %v3055 = vand.u32 %v210, 4294901760
      %3056 = vmatprep.subr.mxu0 %v3055
      %v3057 = vand.u32 %v209, 4294901760
      %3058 = vmatpush1.xpose.msra.mxu0 %v3057
      %v3059 = vand.u32 %v218, 4294901760
      %3060 = vmatprep.subr.mxu0 %v3059
      %v3061 = vand.u32 %v217, 4294901760
      %3062 = vmatpush1.xpose.msra.mxu0 %v3061
      %v3063 = vand.u32 %v226, 4294901760
      %3064 = vmatprep.subr.mxu0 %v3063
      %v3065 = vand.u32 %v225, 4294901760
      %3066 = vmatpush1.xpose.msra.mxu0 %v3065
      %v3067 = vand.u32 %v234, 4294901760
      %3068 = vmatprep.subr.mxu0 %v3067
      %v3069 = vand.u32 %v233, 4294901760
      %3070 = vmatpush1.xpose.msra.mxu0 %v3069
      %v3071 = vand.u32 %v242, 4294901760
      %3072 = vmatprep.subr.mxu0 %v3071
      %v3073 = vand.u32 %v241, 4294901760
      %3074 = vmatpush1.xpose.msra.mxu0 %v3073
      %v3075 = vand.u32 %v250, 4294901760
      %3076 = vmatprep.subr.mxu0 %v3075
      %v3077 = vand.u32 %v249, 4294901760
      %3078 = vmatpush1.xpose.msra.mxu0 %v3077
      %v3079 = vand.u32 %v258, 4294901760
      %3080 = vmatprep.subr.mxu0 %v3079
      %v3081 = vand.u32 %v257, 4294901760
      %3082 = vmatpush1.xpose.msra.mxu0 %v3081
      %v3083 = vand.u32 %v266, 4294901760
      %3084 = vmatprep.subr.mxu0 %v3083
      %v3085 = vand.u32 %v265, 4294901760
      %3086 = vmatpush1.xpose.msra.mxu0 %v3085
      %v3087 = vand.u32 %v274, 4294901760
      %3088 = vmatprep.subr.mxu0 %v3087
      %v3089 = vand.u32 %v273, 4294901760
      %3090 = vmatpush1.xpose.msra.mxu0 %v3089
      %v3091 = vand.u32 %v282, 4294901760
      %3092 = vmatprep.subr.mxu0 %v3091
      %v3093 = vand.u32 %v281, 4294901760
      %3094 = vmatpush1.xpose.msra.mxu0 %v3093
      %v3095 = vand.u32 %v290, 4294901760
      %3096 = vmatprep.subr.mxu0 %v3095
      %v3097 = vand.u32 %v289, 4294901760
      %3098 = vmatpush1.xpose.msra.mxu0 %v3097
      %v3099 = vand.u32 %v298, 4294901760
      %3100 = vmatprep.subr.mxu0 %v3099
      %v3101 = vand.u32 %v297, 4294901760
      %3102 = vmatpush1.xpose.msra.mxu0 %v3101
      %v3103 = vand.u32 %v306, 4294901760
      %3104 = vmatprep.subr.mxu0 %v3103
      %v3105 = vand.u32 %v305, 4294901760
      %3106 = vmatpush1.xpose.msra.mxu0 %v3105
      %v3107 = vand.u32 %v314, 4294901760
      %3108 = vmatprep.subr.mxu0 %v3107
      %v3109 = vand.u32 %v313, 4294901760
      %3110 = vmatpush1.xpose.msra.mxu0 %v3109
      %v3111 = vand.u32 %v322, 4294901760
      %3112 = vmatprep.subr.mxu0 %v3111
      %v3113 = vand.u32 %v321, 4294901760
      %3114 = vmatpush1.xpose.msra.mxu0 %v3113
      %v3115 = vand.u32 %v330, 4294901760
      %3116 = vmatprep.subr.mxu0 %v3115
      %v3117 = vand.u32 %v329, 4294901760
      %3118 = vmatpush1.xpose.msra.mxu0 %v3117
      %v3119 = vand.u32 %v338, 4294901760
      %3120 = vmatprep.subr.mxu0 %v3119
      %v3121 = vand.u32 %v337, 4294901760
      %3122 = vmatpush1.xpose.msra.mxu0 %v3121
      %v3123 = vand.u32 %v346, 4294901760
      %3124 = vmatprep.subr.mxu0 %v3123
      %v3125 = vand.u32 %v345, 4294901760
      %3126 = vmatpush1.xpose.msra.mxu0 %v3125
      %v3127 = vand.u32 %v354, 4294901760
      %3128 = vmatprep.subr.mxu0 %v3127
      %v3129 = vand.u32 %v353, 4294901760
      %3130 = vmatpush1.xpose.msra.mxu0 %v3129
      %v3131 = vand.u32 %v362, 4294901760
      %3132 = vmatprep.subr.mxu0 %v3131
      %v3133 = vand.u32 %v361, 4294901760
      %3134 = vmatpush1.xpose.msra.mxu0 %v3133
      %v3135 = vand.u32 %v370, 4294901760
      %3136 = vmatprep.subr.mxu0 %v3135
      %v3137 = vand.u32 %v369, 4294901760
      %3138 = vmatpush1.xpose.msra.mxu0 %v3137
      %v3139 = vand.u32 %v378, 4294901760
      %3140 = vmatprep.subr.mxu0 %v3139
      %v3141 = vand.u32 %v377, 4294901760
      %3142 = vmatpush1.xpose.msra.mxu0 %v3141
      %v3143 = vand.u32 %v386, 4294901760
      %3144 = vmatprep.subr.mxu0 %v3143
      %v3145 = vand.u32 %v385, 4294901760
      %3146 = vmatpush1.xpose.msra.mxu0 %v3145
      %v3147 = vand.u32 %v394, 4294901760
      %3148 = vmatprep.subr.mxu0 %v3147
      %v3149 = vand.u32 %v393, 4294901760
      %3150 = vmatpush1.xpose.msra.mxu0 %v3149
      %v3151 = vand.u32 %v402, 4294901760
      %3152 = vmatprep.subr.mxu0 %v3151
      %v3153 = vand.u32 %v401, 4294901760
      %3154 = vmatpush1.xpose.msra.mxu0 %v3153
      %v3155 = vand.u32 %v410, 4294901760
      %3156 = vmatprep.subr.mxu0 %v3155
      %v3157 = vand.u32 %v409, 4294901760
      %3158 = vmatpush1.xpose.msra.mxu0 %v3157
      %v3159 = vand.u32 %v418, 4294901760
      %3160 = vmatprep.subr.mxu0 %v3159
      %v3161 = vand.u32 %v417, 4294901760
      %3162 = vmatpush1.xpose.msra.mxu0 %v3161
      %v3163 = vand.u32 %v426, 4294901760
      %3164 = vmatprep.subr.mxu0 %v3163
      %v3165 = vand.u32 %v425, 4294901760
      %3166 = vmatpush1.xpose.msra.mxu0 %v3165
      %v3167 = vand.u32 %v454, 4294901760
      %v3168 = vsub.f32 %v454, %v3167
      %v3169 = vand.u32 %v3168, 4294901760
      %v3170 = vsub.f32 %v3168, %v3169
      %v3171 = vand.u32 %v3170, 4294901760
      %3172 = vmatprep.mubr.f32.mxu0 %v3171
      %v3173 = vand.u32 %v450, 4294901760
      %v3174 = vsub.f32 %v450, %v3173
      %v3175 = vand.u32 %v3174, 4294901760
      %v3176 = vsub.f32 %v3174, %v3175
      %v3177 = vand.u32 %v3176, 4294901760
      %3178 = vmatmul.mubr.f32.gmra.mrb[0].mxu0 %v3177
      %v3179 = vpop.f32.mrb[0].mxu0
      %v3180 = vadd.f32 %v3035, %v3179
      %v3181 = vpop.f32.mrb[0].mxu0
      %v3182 = vadd.f32 %v3037, %v3181
      %3183 = vdwg.mxu0
      %v3184 = vand.u32 %v178, 4294901760
      %v3185 = vsub.f32 %v178, %v3184
      %v3186 = vand.u32 %v3185, 4294901760
      %v3187 = vsub.f32 %v3185, %v3186
      %v3188 = vand.u32 %v3187, 4294901760
      %3189 = vmatprep.subr.mxu0 %v3188
      %v3190 = vand.u32 %v177, 4294901760
      %v3191 = vsub.f32 %v177, %v3190
      %v3192 = vand.u32 %v3191, 4294901760
      %v3193 = vsub.f32 %v3191, %v3192
      %v3194 = vand.u32 %v3193, 4294901760
      %3195 = vmatpush1.xpose.msra.mxu0 %v3194
      %v3196 = vand.u32 %v186, 4294901760
      %v3197 = vsub.f32 %v186, %v3196
      %v3198 = vand.u32 %v3197, 4294901760
      %v3199 = vsub.f32 %v3197, %v3198
      %v3200 = vand.u32 %v3199, 4294901760
      %3201 = vmatprep.subr.mxu0 %v3200
      %v3202 = vand.u32 %v185, 4294901760
      %v3203 = vsub.f32 %v185, %v3202
      %v3204 = vand.u32 %v3203, 4294901760
      %v3205 = vsub.f32 %v3203, %v3204
      %v3206 = vand.u32 %v3205, 4294901760
      %3207 = vmatpush1.xpose.msra.mxu0 %v3206
      %v3208 = vand.u32 %v194, 4294901760
      %v3209 = vsub.f32 %v194, %v3208
      %v3210 = vand.u32 %v3209, 4294901760
      %v3211 = vsub.f32 %v3209, %v3210
      %v3212 = vand.u32 %v3211, 4294901760
      %3213 = vmatprep.subr.mxu0 %v3212
      %v3214 = vand.u32 %v193, 4294901760
      %v3215 = vsub.f32 %v193, %v3214
      %v3216 = vand.u32 %v3215, 4294901760
      %v3217 = vsub.f32 %v3215, %v3216
      %v3218 = vand.u32 %v3217, 4294901760
      %3219 = vmatpush1.xpose.msra.mxu0 %v3218
      %v3220 = vand.u32 %v202, 4294901760
      %v3221 = vsub.f32 %v202, %v3220
      %v3222 = vand.u32 %v3221, 4294901760
      %v3223 = vsub.f32 %v3221, %v3222
      %v3224 = vand.u32 %v3223, 4294901760
      %3225 = vmatprep.subr.mxu0 %v3224
      %v3226 = vand.u32 %v201, 4294901760
      %v3227 = vsub.f32 %v201, %v3226
      %v3228 = vand.u32 %v3227, 4294901760
      %v3229 = vsub.f32 %v3227, %v3228
      %v3230 = vand.u32 %v3229, 4294901760
      %3231 = vmatpush1.xpose.msra.mxu0 %v3230
      %v3232 = vand.u32 %v210, 4294901760
      %v3233 = vsub.f32 %v210, %v3232
      %v3234 = vand.u32 %v3233, 4294901760
      %v3235 = vsub.f32 %v3233, %v3234
      %v3236 = vand.u32 %v3235, 4294901760
      %3237 = vmatprep.subr.mxu0 %v3236
      %v3238 = vand.u32 %v209, 4294901760
      %v3239 = vsub.f32 %v209, %v3238
      %v3240 = vand.u32 %v3239, 4294901760
      %v3241 = vsub.f32 %v3239, %v3240
      %v3242 = vand.u32 %v3241, 4294901760
      %3243 = vmatpush1.xpose.msra.mxu0 %v3242
      %v3244 = vand.u32 %v218, 4294901760
      %v3245 = vsub.f32 %v218, %v3244
      %v3246 = vand.u32 %v3245, 4294901760
      %v3247 = vsub.f32 %v3245, %v3246
      %v3248 = vand.u32 %v3247, 4294901760
      %3249 = vmatprep.subr.mxu0 %v3248
      %v3250 = vand.u32 %v217, 4294901760
      %v3251 = vsub.f32 %v217, %v3250
      %v3252 = vand.u32 %v3251, 4294901760
      %v3253 = vsub.f32 %v3251, %v3252
      %v3254 = vand.u32 %v3253, 4294901760
      %3255 = vmatpush1.xpose.msra.mxu0 %v3254
      %v3256 = vand.u32 %v226, 4294901760
      %v3257 = vsub.f32 %v226, %v3256
      %v3258 = vand.u32 %v3257, 4294901760
      %v3259 = vsub.f32 %v3257, %v3258
      %v3260 = vand.u32 %v3259, 4294901760
      %3261 = vmatprep.subr.mxu0 %v3260
      %v3262 = vand.u32 %v225, 4294901760
      %v3263 = vsub.f32 %v225, %v3262
      %v3264 = vand.u32 %v3263, 4294901760
      %v3265 = vsub.f32 %v3263, %v3264
      %v3266 = vand.u32 %v3265, 4294901760
      %3267 = vmatpush1.xpose.msra.mxu0 %v3266
      %v3268 = vand.u32 %v234, 4294901760
      %v3269 = vsub.f32 %v234, %v3268
      %v3270 = vand.u32 %v3269, 4294901760
      %v3271 = vsub.f32 %v3269, %v3270
      %v3272 = vand.u32 %v3271, 4294901760
      %3273 = vmatprep.subr.mxu0 %v3272
      %v3274 = vand.u32 %v233, 4294901760
      %v3275 = vsub.f32 %v233, %v3274
      %v3276 = vand.u32 %v3275, 4294901760
      %v3277 = vsub.f32 %v3275, %v3276
      %v3278 = vand.u32 %v3277, 4294901760
      %3279 = vmatpush1.xpose.msra.mxu0 %v3278
      %v3280 = vand.u32 %v242, 4294901760
      %v3281 = vsub.f32 %v242, %v3280
      %v3282 = vand.u32 %v3281, 4294901760
      %v3283 = vsub.f32 %v3281, %v3282
      %v3284 = vand.u32 %v3283, 4294901760
      %3285 = vmatprep.subr.mxu0 %v3284
      %v3286 = vand.u32 %v241, 4294901760
      %v3287 = vsub.f32 %v241, %v3286
      %v3288 = vand.u32 %v3287, 4294901760
      %v3289 = vsub.f32 %v3287, %v3288
      %v3290 = vand.u32 %v3289, 4294901760
      %3291 = vmatpush1.xpose.msra.mxu0 %v3290
      %v3292 = vand.u32 %v250, 4294901760
      %v3293 = vsub.f32 %v250, %v3292
      %v3294 = vand.u32 %v3293, 4294901760
      %v3295 = vsub.f32 %v3293, %v3294
      %v3296 = vand.u32 %v3295, 4294901760
      %3297 = vmatprep.subr.mxu0 %v3296
      %v3298 = vand.u32 %v249, 4294901760
      %v3299 = vsub.f32 %v249, %v3298
      %v3300 = vand.u32 %v3299, 4294901760
      %v3301 = vsub.f32 %v3299, %v3300
      %v3302 = vand.u32 %v3301, 4294901760
      %3303 = vmatpush1.xpose.msra.mxu0 %v3302
      %v3304 = vand.u32 %v258, 4294901760
      %v3305 = vsub.f32 %v258, %v3304
      %v3306 = vand.u32 %v3305, 4294901760
      %v3307 = vsub.f32 %v3305, %v3306
      %v3308 = vand.u32 %v3307, 4294901760
      %3309 = vmatprep.subr.mxu0 %v3308
      %v3310 = vand.u32 %v257, 4294901760
      %v3311 = vsub.f32 %v257, %v3310
      %v3312 = vand.u32 %v3311, 4294901760
      %v3313 = vsub.f32 %v3311, %v3312
      %v3314 = vand.u32 %v3313, 4294901760
      %3315 = vmatpush1.xpose.msra.mxu0 %v3314
      %v3316 = vand.u32 %v266, 4294901760
      %v3317 = vsub.f32 %v266, %v3316
      %v3318 = vand.u32 %v3317, 4294901760
      %v3319 = vsub.f32 %v3317, %v3318
      %v3320 = vand.u32 %v3319, 4294901760
      %3321 = vmatprep.subr.mxu0 %v3320
      %v3322 = vand.u32 %v265, 4294901760
      %v3323 = vsub.f32 %v265, %v3322
      %v3324 = vand.u32 %v3323, 4294901760
      %v3325 = vsub.f32 %v3323, %v3324
      %v3326 = vand.u32 %v3325, 4294901760
      %3327 = vmatpush1.xpose.msra.mxu0 %v3326
      %v3328 = vand.u32 %v274, 4294901760
      %v3329 = vsub.f32 %v274, %v3328
      %v3330 = vand.u32 %v3329, 4294901760
      %v3331 = vsub.f32 %v3329, %v3330
      %v3332 = vand.u32 %v3331, 4294901760
      %3333 = vmatprep.subr.mxu0 %v3332
      %v3334 = vand.u32 %v273, 4294901760
      %v3335 = vsub.f32 %v273, %v3334
      %v3336 = vand.u32 %v3335, 4294901760
      %v3337 = vsub.f32 %v3335, %v3336
      %v3338 = vand.u32 %v3337, 4294901760
      %3339 = vmatpush1.xpose.msra.mxu0 %v3338
      %v3340 = vand.u32 %v282, 4294901760
      %v3341 = vsub.f32 %v282, %v3340
      %v3342 = vand.u32 %v3341, 4294901760
      %v3343 = vsub.f32 %v3341, %v3342
      %v3344 = vand.u32 %v3343, 4294901760
      %3345 = vmatprep.subr.mxu0 %v3344
      %v3346 = vand.u32 %v281, 4294901760
      %v3347 = vsub.f32 %v281, %v3346
      %v3348 = vand.u32 %v3347, 4294901760
      %v3349 = vsub.f32 %v3347, %v3348
      %v3350 = vand.u32 %v3349, 4294901760
      %3351 = vmatpush1.xpose.msra.mxu0 %v3350
      %v3352 = vand.u32 %v290, 4294901760
      %v3353 = vsub.f32 %v290, %v3352
      %v3354 = vand.u32 %v3353, 4294901760
      %v3355 = vsub.f32 %v3353, %v3354
      %v3356 = vand.u32 %v3355, 4294901760
      %3357 = vmatprep.subr.mxu0 %v3356
      %v3358 = vand.u32 %v289, 4294901760
      %v3359 = vsub.f32 %v289, %v3358
      %v3360 = vand.u32 %v3359, 4294901760
      %v3361 = vsub.f32 %v3359, %v3360
      %v3362 = vand.u32 %v3361, 4294901760
      %3363 = vmatpush1.xpose.msra.mxu0 %v3362
      %v3364 = vand.u32 %v298, 4294901760
      %v3365 = vsub.f32 %v298, %v3364
      %v3366 = vand.u32 %v3365, 4294901760
      %v3367 = vsub.f32 %v3365, %v3366
      %v3368 = vand.u32 %v3367, 4294901760
      %3369 = vmatprep.subr.mxu0 %v3368
      %v3370 = vand.u32 %v297, 4294901760
      %v3371 = vsub.f32 %v297, %v3370
      %v3372 = vand.u32 %v3371, 4294901760
      %v3373 = vsub.f32 %v3371, %v3372
      %v3374 = vand.u32 %v3373, 4294901760
      %3375 = vmatpush1.xpose.msra.mxu0 %v3374
      %v3376 = vand.u32 %v306, 4294901760
      %v3377 = vsub.f32 %v306, %v3376
      %v3378 = vand.u32 %v3377, 4294901760
      %v3379 = vsub.f32 %v3377, %v3378
      %v3380 = vand.u32 %v3379, 4294901760
      %3381 = vmatprep.subr.mxu0 %v3380
      %v3382 = vand.u32 %v305, 4294901760
      %v3383 = vsub.f32 %v305, %v3382
      %v3384 = vand.u32 %v3383, 4294901760
      %v3385 = vsub.f32 %v3383, %v3384
      %v3386 = vand.u32 %v3385, 4294901760
      %3387 = vmatpush1.xpose.msra.mxu0 %v3386
      %v3388 = vand.u32 %v314, 4294901760
      %v3389 = vsub.f32 %v314, %v3388
      %v3390 = vand.u32 %v3389, 4294901760
      %v3391 = vsub.f32 %v3389, %v3390
      %v3392 = vand.u32 %v3391, 4294901760
      %3393 = vmatprep.subr.mxu0 %v3392
      %v3394 = vand.u32 %v313, 4294901760
      %v3395 = vsub.f32 %v313, %v3394
      %v3396 = vand.u32 %v3395, 4294901760
      %v3397 = vsub.f32 %v3395, %v3396
      %v3398 = vand.u32 %v3397, 4294901760
      %3399 = vmatpush1.xpose.msra.mxu0 %v3398
      %v3400 = vand.u32 %v322, 4294901760
      %v3401 = vsub.f32 %v322, %v3400
      %v3402 = vand.u32 %v3401, 4294901760
      %v3403 = vsub.f32 %v3401, %v3402
      %v3404 = vand.u32 %v3403, 4294901760
      %3405 = vmatprep.subr.mxu0 %v3404
      %v3406 = vand.u32 %v321, 4294901760
      %v3407 = vsub.f32 %v321, %v3406
      %v3408 = vand.u32 %v3407, 4294901760
      %v3409 = vsub.f32 %v3407, %v3408
      %v3410 = vand.u32 %v3409, 4294901760
      %3411 = vmatpush1.xpose.msra.mxu0 %v3410
      %v3412 = vand.u32 %v330, 4294901760
      %v3413 = vsub.f32 %v330, %v3412
      %v3414 = vand.u32 %v3413, 4294901760
      %v3415 = vsub.f32 %v3413, %v3414
      %v3416 = vand.u32 %v3415, 4294901760
      %3417 = vmatprep.subr.mxu0 %v3416
      %v3418 = vand.u32 %v329, 4294901760
      %v3419 = vsub.f32 %v329, %v3418
      %v3420 = vand.u32 %v3419, 4294901760
      %v3421 = vsub.f32 %v3419, %v3420
      %v3422 = vand.u32 %v3421, 4294901760
      %3423 = vmatpush1.xpose.msra.mxu0 %v3422
      %v3424 = vand.u32 %v338, 4294901760
      %v3425 = vsub.f32 %v338, %v3424
      %v3426 = vand.u32 %v3425, 4294901760
      %v3427 = vsub.f32 %v3425, %v3426
      %v3428 = vand.u32 %v3427, 4294901760
      %3429 = vmatprep.subr.mxu0 %v3428
      %v3430 = vand.u32 %v337, 4294901760
      %v3431 = vsub.f32 %v337, %v3430
      %v3432 = vand.u32 %v3431, 4294901760
      %v3433 = vsub.f32 %v3431, %v3432
      %v3434 = vand.u32 %v3433, 4294901760
      %3435 = vmatpush1.xpose.msra.mxu0 %v3434
      %v3436 = vand.u32 %v346, 4294901760
      %v3437 = vsub.f32 %v346, %v3436
      %v3438 = vand.u32 %v3437, 4294901760
      %v3439 = vsub.f32 %v3437, %v3438
      %v3440 = vand.u32 %v3439, 4294901760
      %3441 = vmatprep.subr.mxu0 %v3440
      %v3442 = vand.u32 %v345, 4294901760
      %v3443 = vsub.f32 %v345, %v3442
      %v3444 = vand.u32 %v3443, 4294901760
      %v3445 = vsub.f32 %v3443, %v3444
      %v3446 = vand.u32 %v3445, 4294901760
      %3447 = vmatpush1.xpose.msra.mxu0 %v3446
      %v3448 = vand.u32 %v354, 4294901760
      %v3449 = vsub.f32 %v354, %v3448
      %v3450 = vand.u32 %v3449, 4294901760
      %v3451 = vsub.f32 %v3449, %v3450
      %v3452 = vand.u32 %v3451, 4294901760
      %3453 = vmatprep.subr.mxu0 %v3452
      %v3454 = vand.u32 %v353, 4294901760
      %v3455 = vsub.f32 %v353, %v3454
      %v3456 = vand.u32 %v3455, 4294901760
      %v3457 = vsub.f32 %v3455, %v3456
      %v3458 = vand.u32 %v3457, 4294901760
      %3459 = vmatpush1.xpose.msra.mxu0 %v3458
      %v3460 = vand.u32 %v362, 4294901760
      %v3461 = vsub.f32 %v362, %v3460
      %v3462 = vand.u32 %v3461, 4294901760
      %v3463 = vsub.f32 %v3461, %v3462
      %v3464 = vand.u32 %v3463, 4294901760
      %3465 = vmatprep.subr.mxu0 %v3464
      %v3466 = vand.u32 %v361, 4294901760
      %v3467 = vsub.f32 %v361, %v3466
      %v3468 = vand.u32 %v3467, 4294901760
      %v3469 = vsub.f32 %v3467, %v3468
      %v3470 = vand.u32 %v3469, 4294901760
      %3471 = vmatpush1.xpose.msra.mxu0 %v3470
      %v3472 = vand.u32 %v370, 4294901760
      %v3473 = vsub.f32 %v370, %v3472
      %v3474 = vand.u32 %v3473, 4294901760
      %v3475 = vsub.f32 %v3473, %v3474
      %v3476 = vand.u32 %v3475, 4294901760
      %3477 = vmatprep.subr.mxu0 %v3476
      %v3478 = vand.u32 %v369, 4294901760
      %v3479 = vsub.f32 %v369, %v3478
      %v3480 = vand.u32 %v3479, 4294901760
      %v3481 = vsub.f32 %v3479, %v3480
      %v3482 = vand.u32 %v3481, 4294901760
      %3483 = vmatpush1.xpose.msra.mxu0 %v3482
      %v3484 = vand.u32 %v378, 4294901760
      %v3485 = vsub.f32 %v378, %v3484
      %v3486 = vand.u32 %v3485, 4294901760
      %v3487 = vsub.f32 %v3485, %v3486
      %v3488 = vand.u32 %v3487, 4294901760
      %3489 = vmatprep.subr.mxu0 %v3488
      %v3490 = vand.u32 %v377, 4294901760
      %v3491 = vsub.f32 %v377, %v3490
      %v3492 = vand.u32 %v3491, 4294901760
      %v3493 = vsub.f32 %v3491, %v3492
      %v3494 = vand.u32 %v3493, 4294901760
      %3495 = vmatpush1.xpose.msra.mxu0 %v3494
      %v3496 = vand.u32 %v386, 4294901760
      %v3497 = vsub.f32 %v386, %v3496
      %v3498 = vand.u32 %v3497, 4294901760
      %v3499 = vsub.f32 %v3497, %v3498
      %v3500 = vand.u32 %v3499, 4294901760
      %3501 = vmatprep.subr.mxu0 %v3500
      %v3502 = vand.u32 %v385, 4294901760
      %v3503 = vsub.f32 %v385, %v3502
      %v3504 = vand.u32 %v3503, 4294901760
      %v3505 = vsub.f32 %v3503, %v3504
      %v3506 = vand.u32 %v3505, 4294901760
      %3507 = vmatpush1.xpose.msra.mxu0 %v3506
      %v3508 = vand.u32 %v394, 4294901760
      %v3509 = vsub.f32 %v394, %v3508
      %v3510 = vand.u32 %v3509, 4294901760
      %v3511 = vsub.f32 %v3509, %v3510
      %v3512 = vand.u32 %v3511, 4294901760
      %3513 = vmatprep.subr.mxu0 %v3512
      %v3514 = vand.u32 %v393, 4294901760
      %v3515 = vsub.f32 %v393, %v3514
      %v3516 = vand.u32 %v3515, 4294901760
      %v3517 = vsub.f32 %v3515, %v3516
      %v3518 = vand.u32 %v3517, 4294901760
      %3519 = vmatpush1.xpose.msra.mxu0 %v3518
      %v3520 = vand.u32 %v402, 4294901760
      %v3521 = vsub.f32 %v402, %v3520
      %v3522 = vand.u32 %v3521, 4294901760
      %v3523 = vsub.f32 %v3521, %v3522
      %v3524 = vand.u32 %v3523, 4294901760
      %3525 = vmatprep.subr.mxu0 %v3524
      %v3526 = vand.u32 %v401, 4294901760
      %v3527 = vsub.f32 %v401, %v3526
      %v3528 = vand.u32 %v3527, 4294901760
      %v3529 = vsub.f32 %v3527, %v3528
      %v3530 = vand.u32 %v3529, 4294901760
      %3531 = vmatpush1.xpose.msra.mxu0 %v3530
      %v3532 = vand.u32 %v410, 4294901760
      %v3533 = vsub.f32 %v410, %v3532
      %v3534 = vand.u32 %v3533, 4294901760
      %v3535 = vsub.f32 %v3533, %v3534
      %v3536 = vand.u32 %v3535, 4294901760
      %3537 = vmatprep.subr.mxu0 %v3536
      %v3538 = vand.u32 %v409, 4294901760
      %v3539 = vsub.f32 %v409, %v3538
      %v3540 = vand.u32 %v3539, 4294901760
      %v3541 = vsub.f32 %v3539, %v3540
      %v3542 = vand.u32 %v3541, 4294901760
      %3543 = vmatpush1.xpose.msra.mxu0 %v3542
      %v3544 = vand.u32 %v418, 4294901760
      %v3545 = vsub.f32 %v418, %v3544
      %v3546 = vand.u32 %v3545, 4294901760
      %v3547 = vsub.f32 %v3545, %v3546
      %v3548 = vand.u32 %v3547, 4294901760
      %3549 = vmatprep.subr.mxu0 %v3548
      %v3550 = vand.u32 %v417, 4294901760
      %v3551 = vsub.f32 %v417, %v3550
      %v3552 = vand.u32 %v3551, 4294901760
      %v3553 = vsub.f32 %v3551, %v3552
      %v3554 = vand.u32 %v3553, 4294901760
      %3555 = vmatpush1.xpose.msra.mxu0 %v3554
      %v3556 = vand.u32 %v426, 4294901760
      %v3557 = vsub.f32 %v426, %v3556
      %v3558 = vand.u32 %v3557, 4294901760
      %v3559 = vsub.f32 %v3557, %v3558
      %v3560 = vand.u32 %v3559, 4294901760
      %3561 = vmatprep.subr.mxu0 %v3560
      %v3562 = vand.u32 %v425, 4294901760
      %v3563 = vsub.f32 %v425, %v3562
      %v3564 = vand.u32 %v3563, 4294901760
      %v3565 = vsub.f32 %v3563, %v3564
      %v3566 = vand.u32 %v3565, 4294901760
      %3567 = vmatpush1.xpose.msra.mxu0 %v3566
      %v3568 = vand.u32 %v454, 4294901760
      %3569 = vmatprep.mubr.f32.mxu0 %v3568
      %v3570 = vand.u32 %v450, 4294901760
      %3571 = vmatmul.mubr.f32.gmra.mrb[0].mxu0 %v3570
      %v3572 = vpop.f32.mrb[0].mxu0
      %v3573 = vadd.f32 %v3180, %v3572
      %v3574 = vpop.f32.mrb[0].mxu0
      %v3575 = vadd.f32 %v3182, %v3574
      %3576 = vdwg.mxu0
      %v3577 = vand.u32 %v178, 4294901760
      %v3578 = vsub.f32 %v178, %v3577
      %3579 = vmatprep.subr.mxu0 %v3578
      %v3580 = vand.u32 %v177, 4294901760
      %v3581 = vsub.f32 %v177, %v3580
      %3582 = vmatpush1.xpose.msra.mxu0 %v3581
      %v3583 = vand.u32 %v186, 4294901760
      %v3584 = vsub.f32 %v186, %v3583
      %3585 = vmatprep.subr.mxu0 %v3584
      %v3586 = vand.u32 %v185, 4294901760
      %v3587 = vsub.f32 %v185, %v3586
      %3588 = vmatpush1.xpose.msra.mxu0 %v3587
      %v3589 = vand.u32 %v194, 4294901760
      %v3590 = vsub.f32 %v194, %v3589
      %3591 = vmatprep.subr.mxu0 %v3590
      %v3592 = vand.u32 %v193, 4294901760
      %v3593 = vsub.f32 %v193, %v3592
      %3594 = vmatpush1.xpose.msra.mxu0 %v3593
      %v3595 = vand.u32 %v202, 4294901760
      %v3596 = vsub.f32 %v202, %v3595
      %3597 = vmatprep.subr.mxu0 %v3596
      %v3598 = vand.u32 %v201, 4294901760
      %v3599 = vsub.f32 %v201, %v3598
      %3600 = vmatpush1.xpose.msra.mxu0 %v3599
      %v3601 = vand.u32 %v210, 4294901760
      %v3602 = vsub.f32 %v210, %v3601
      %3603 = vmatprep.subr.mxu0 %v3602
      %v3604 = vand.u32 %v209, 4294901760
      %v3605 = vsub.f32 %v209, %v3604
      %3606 = vmatpush1.xpose.msra.mxu0 %v3605
      %v3607 = vand.u32 %v218, 4294901760
      %v3608 = vsub.f32 %v218, %v3607
      %3609 = vmatprep.subr.mxu0 %v3608
      %v3610 = vand.u32 %v217, 4294901760
      %v3611 = vsub.f32 %v217, %v3610
      %3612 = vmatpush1.xpose.msra.mxu0 %v3611
      %v3613 = vand.u32 %v226, 4294901760
      %v3614 = vsub.f32 %v226, %v3613
      %3615 = vmatprep.subr.mxu0 %v3614
      %v3616 = vand.u32 %v225, 4294901760
      %v3617 = vsub.f32 %v225, %v3616
      %3618 = vmatpush1.xpose.msra.mxu0 %v3617
      %v3619 = vand.u32 %v234, 4294901760
      %v3620 = vsub.f32 %v234, %v3619
      %3621 = vmatprep.subr.mxu0 %v3620
      %v3622 = vand.u32 %v233, 4294901760
      %v3623 = vsub.f32 %v233, %v3622
      %3624 = vmatpush1.xpose.msra.mxu0 %v3623
      %v3625 = vand.u32 %v242, 4294901760
      %v3626 = vsub.f32 %v242, %v3625
      %3627 = vmatprep.subr.mxu0 %v3626
      %v3628 = vand.u32 %v241, 4294901760
      %v3629 = vsub.f32 %v241, %v3628
      %3630 = vmatpush1.xpose.msra.mxu0 %v3629
      %v3631 = vand.u32 %v250, 4294901760
      %v3632 = vsub.f32 %v250, %v3631
      %3633 = vmatprep.subr.mxu0 %v3632
      %v3634 = vand.u32 %v249, 4294901760
      %v3635 = vsub.f32 %v249, %v3634
      %3636 = vmatpush1.xpose.msra.mxu0 %v3635
      %v3637 = vand.u32 %v258, 4294901760
      %v3638 = vsub.f32 %v258, %v3637
      %3639 = vmatprep.subr.mxu0 %v3638
      %v3640 = vand.u32 %v257, 4294901760
      %v3641 = vsub.f32 %v257, %v3640
      %3642 = vmatpush1.xpose.msra.mxu0 %v3641
      %v3643 = vand.u32 %v266, 4294901760
      %v3644 = vsub.f32 %v266, %v3643
      %3645 = vmatprep.subr.mxu0 %v3644
      %v3646 = vand.u32 %v265, 4294901760
      %v3647 = vsub.f32 %v265, %v3646
      %3648 = vmatpush1.xpose.msra.mxu0 %v3647
      %v3649 = vand.u32 %v274, 4294901760
      %v3650 = vsub.f32 %v274, %v3649
      %3651 = vmatprep.subr.mxu0 %v3650
      %v3652 = vand.u32 %v273, 4294901760
      %v3653 = vsub.f32 %v273, %v3652
      %3654 = vmatpush1.xpose.msra.mxu0 %v3653
      %v3655 = vand.u32 %v282, 4294901760
      %v3656 = vsub.f32 %v282, %v3655
      %3657 = vmatprep.subr.mxu0 %v3656
      %v3658 = vand.u32 %v281, 4294901760
      %v3659 = vsub.f32 %v281, %v3658
      %3660 = vmatpush1.xpose.msra.mxu0 %v3659
      %v3661 = vand.u32 %v290, 4294901760
      %v3662 = vsub.f32 %v290, %v3661
      %3663 = vmatprep.subr.mxu0 %v3662
      %v3664 = vand.u32 %v289, 4294901760
      %v3665 = vsub.f32 %v289, %v3664
      %3666 = vmatpush1.xpose.msra.mxu0 %v3665
      %v3667 = vand.u32 %v298, 4294901760
      %v3668 = vsub.f32 %v298, %v3667
      %3669 = vmatprep.subr.mxu0 %v3668
      %v3670 = vand.u32 %v297, 4294901760
      %v3671 = vsub.f32 %v297, %v3670
      %3672 = vmatpush1.xpose.msra.mxu0 %v3671
      %v3673 = vand.u32 %v306, 4294901760
      %v3674 = vsub.f32 %v306, %v3673
      %3675 = vmatprep.subr.mxu0 %v3674
      %v3676 = vand.u32 %v305, 4294901760
      %v3677 = vsub.f32 %v305, %v3676
      %3678 = vmatpush1.xpose.msra.mxu0 %v3677
      %v3679 = vand.u32 %v314, 4294901760
      %v3680 = vsub.f32 %v314, %v3679
      %3681 = vmatprep.subr.mxu0 %v3680
      %v3682 = vand.u32 %v313, 4294901760
      %v3683 = vsub.f32 %v313, %v3682
      %3684 = vmatpush1.xpose.msra.mxu0 %v3683
      %v3685 = vand.u32 %v322, 4294901760
      %v3686 = vsub.f32 %v322, %v3685
      %3687 = vmatprep.subr.mxu0 %v3686
      %v3688 = vand.u32 %v321, 4294901760
      %v3689 = vsub.f32 %v321, %v3688
      %3690 = vmatpush1.xpose.msra.mxu0 %v3689
      %v3691 = vand.u32 %v330, 4294901760
      %v3692 = vsub.f32 %v330, %v3691
      %3693 = vmatprep.subr.mxu0 %v3692
      %v3694 = vand.u32 %v329, 4294901760
      %v3695 = vsub.f32 %v329, %v3694
      %3696 = vmatpush1.xpose.msra.mxu0 %v3695
      %v3697 = vand.u32 %v338, 4294901760
      %v3698 = vsub.f32 %v338, %v3697
      %3699 = vmatprep.subr.mxu0 %v3698
      %v3700 = vand.u32 %v337, 4294901760
      %v3701 = vsub.f32 %v337, %v3700
      %3702 = vmatpush1.xpose.msra.mxu0 %v3701
      %v3703 = vand.u32 %v346, 4294901760
      %v3704 = vsub.f32 %v346, %v3703
      %3705 = vmatprep.subr.mxu0 %v3704
      %v3706 = vand.u32 %v345, 4294901760
      %v3707 = vsub.f32 %v345, %v3706
      %3708 = vmatpush1.xpose.msra.mxu0 %v3707
      %v3709 = vand.u32 %v354, 4294901760
      %v3710 = vsub.f32 %v354, %v3709
      %3711 = vmatprep.subr.mxu0 %v3710
      %v3712 = vand.u32 %v353, 4294901760
      %v3713 = vsub.f32 %v353, %v3712
      %3714 = vmatpush1.xpose.msra.mxu0 %v3713
      %v3715 = vand.u32 %v362, 4294901760
      %v3716 = vsub.f32 %v362, %v3715
      %3717 = vmatprep.subr.mxu0 %v3716
      %v3718 = vand.u32 %v361, 4294901760
      %v3719 = vsub.f32 %v361, %v3718
      %3720 = vmatpush1.xpose.msra.mxu0 %v3719
      %v3721 = vand.u32 %v370, 4294901760
      %v3722 = vsub.f32 %v370, %v3721
      %3723 = vmatprep.subr.mxu0 %v3722
      %v3724 = vand.u32 %v369, 4294901760
      %v3725 = vsub.f32 %v369, %v3724
      %3726 = vmatpush1.xpose.msra.mxu0 %v3725
      %v3727 = vand.u32 %v378, 4294901760
      %v3728 = vsub.f32 %v378, %v3727
      %3729 = vmatprep.subr.mxu0 %v3728
      %v3730 = vand.u32 %v377, 4294901760
      %v3731 = vsub.f32 %v377, %v3730
      %3732 = vmatpush1.xpose.msra.mxu0 %v3731
      %v3733 = vand.u32 %v386, 4294901760
      %v3734 = vsub.f32 %v386, %v3733
      %3735 = vmatprep.subr.mxu0 %v3734
      %v3736 = vand.u32 %v385, 4294901760
      %v3737 = vsub.f32 %v385, %v3736
      %3738 = vmatpush1.xpose.msra.mxu0 %v3737
      %v3739 = vand.u32 %v394, 4294901760
      %v3740 = vsub.f32 %v394, %v3739
      %3741 = vmatprep.subr.mxu0 %v3740
      %v3742 = vand.u32 %v393, 4294901760
      %v3743 = vsub.f32 %v393, %v3742
      %3744 = vmatpush1.xpose.msra.mxu0 %v3743
      %v3745 = vand.u32 %v402, 4294901760
      %v3746 = vsub.f32 %v402, %v3745
      %3747 = vmatprep.subr.mxu0 %v3746
      %v3748 = vand.u32 %v401, 4294901760
      %v3749 = vsub.f32 %v401, %v3748
      %3750 = vmatpush1.xpose.msra.mxu0 %v3749
      %v3751 = vand.u32 %v410, 4294901760
      %v3752 = vsub.f32 %v410, %v3751
      %3753 = vmatprep.subr.mxu0 %v3752
      %v3754 = vand.u32 %v409, 4294901760
      %v3755 = vsub.f32 %v409, %v3754
      %3756 = vmatpush1.xpose.msra.mxu0 %v3755
      %v3757 = vand.u32 %v418, 4294901760
      %v3758 = vsub.f32 %v418, %v3757
      %3759 = vmatprep.subr.mxu0 %v3758
      %v3760 = vand.u32 %v417, 4294901760
      %v3761 = vsub.f32 %v417, %v3760
      %3762 = vmatpush1.xpose.msra.mxu0 %v3761
      %v3763 = vand.u32 %v426, 4294901760
      %v3764 = vsub.f32 %v426, %v3763
      %3765 = vmatprep.subr.mxu0 %v3764
      %v3766 = vand.u32 %v425, 4294901760
      %v3767 = vsub.f32 %v425, %v3766
      %3768 = vmatpush1.xpose.msra.mxu0 %v3767
      %v3769 = vand.u32 %v454, 4294901760
      %v3770 = vsub.f32 %v454, %v3769
      %3771 = vmatprep.mubr.f32.mxu0 %v3770
      %v3772 = vand.u32 %v450, 4294901760
      %v3773 = vsub.f32 %v450, %v3772
      %3774 = vmatmul.mubr.f32.gmra.mrb[0].mxu0 %v3773
      %v3775 = vpop.f32.mrb[0].mxu0
      %v3776 = vadd.f32 %v3573, %v3775
      %v3777 = vpop.f32.mrb[0].mxu0
      %v3778 = vadd.f32 %v3575, %v3777
      %3779 = vdwg.mxu0
      %v3780 = vand.u32 %v178, 4294901760
      %3781 = vmatprep.subr.mxu0 %v3780
      %v3782 = vand.u32 %v177, 4294901760
      %3783 = vmatpush1.xpose.msra.mxu0 %v3782
      %v3784 = vand.u32 %v186, 4294901760
      %3785 = vmatprep.subr.mxu0 %v3784
      %v3786 = vand.u32 %v185, 4294901760
      %3787 = vmatpush1.xpose.msra.mxu0 %v3786
      %v3788 = vand.u32 %v194, 4294901760
      %3789 = vmatprep.subr.mxu0 %v3788
      %v3790 = vand.u32 %v193, 4294901760
      %3791 = vmatpush1.xpose.msra.mxu0 %v3790
      %v3792 = vand.u32 %v202, 4294901760
      %3793 = vmatprep.subr.mxu0 %v3792
      %v3794 = vand.u32 %v201, 4294901760
      %3795 = vmatpush1.xpose.msra.mxu0 %v3794
      %v3796 = vand.u32 %v210, 4294901760
      %3797 = vmatprep.subr.mxu0 %v3796
      %v3798 = vand.u32 %v209, 4294901760
      %3799 = vmatpush1.xpose.msra.mxu0 %v3798
      %v3800 = vand.u32 %v218, 4294901760
      %3801 = vmatprep.subr.mxu0 %v3800
      %v3802 = vand.u32 %v217, 4294901760
      %3803 = vmatpush1.xpose.msra.mxu0 %v3802
      %v3804 = vand.u32 %v226, 4294901760
      %3805 = vmatprep.subr.mxu0 %v3804
      %v3806 = vand.u32 %v225, 4294901760
      %3807 = vmatpush1.xpose.msra.mxu0 %v3806
      %v3808 = vand.u32 %v234, 4294901760
      %3809 = vmatprep.subr.mxu0 %v3808
      %v3810 = vand.u32 %v233, 4294901760
      %3811 = vmatpush1.xpose.msra.mxu0 %v3810
      %v3812 = vand.u32 %v242, 4294901760
      %3813 = vmatprep.subr.mxu0 %v3812
      %v3814 = vand.u32 %v241, 4294901760
      %3815 = vmatpush1.xpose.msra.mxu0 %v3814
      %v3816 = vand.u32 %v250, 4294901760
      %3817 = vmatprep.subr.mxu0 %v3816
      %v3818 = vand.u32 %v249, 4294901760
      %3819 = vmatpush1.xpose.msra.mxu0 %v3818
      %v3820 = vand.u32 %v258, 4294901760
      %3821 = vmatprep.subr.mxu0 %v3820
      %v3822 = vand.u32 %v257, 4294901760
      %3823 = vmatpush1.xpose.msra.mxu0 %v3822
      %v3824 = vand.u32 %v266, 4294901760
      %3825 = vmatprep.subr.mxu0 %v3824
      %v3826 = vand.u32 %v265, 4294901760
      %3827 = vmatpush1.xpose.msra.mxu0 %v3826
      %v3828 = vand.u32 %v274, 4294901760
      %3829 = vmatprep.subr.mxu0 %v3828
      %v3830 = vand.u32 %v273, 4294901760
      %3831 = vmatpush1.xpose.msra.mxu0 %v3830
      %v3832 = vand.u32 %v282, 4294901760
      %3833 = vmatprep.subr.mxu0 %v3832
      %v3834 = vand.u32 %v281, 4294901760
      %3835 = vmatpush1.xpose.msra.mxu0 %v3834
      %v3836 = vand.u32 %v290, 4294901760
      %3837 = vmatprep.subr.mxu0 %v3836
      %v3838 = vand.u32 %v289, 4294901760
      %3839 = vmatpush1.xpose.msra.mxu0 %v3838
      %v3840 = vand.u32 %v298, 4294901760
      %3841 = vmatprep.subr.mxu0 %v3840
      %v3842 = vand.u32 %v297, 4294901760
      %3843 = vmatpush1.xpose.msra.mxu0 %v3842
      %v3844 = vand.u32 %v306, 4294901760
      %3845 = vmatprep.subr.mxu0 %v3844
      %v3846 = vand.u32 %v305, 4294901760
      %3847 = vmatpush1.xpose.msra.mxu0 %v3846
      %v3848 = vand.u32 %v314, 4294901760
      %3849 = vmatprep.subr.mxu0 %v3848
      %v3850 = vand.u32 %v313, 4294901760
      %3851 = vmatpush1.xpose.msra.mxu0 %v3850
      %v3852 = vand.u32 %v322, 4294901760
      %3853 = vmatprep.subr.mxu0 %v3852
      %v3854 = vand.u32 %v321, 4294901760
      %3855 = vmatpush1.xpose.msra.mxu0 %v3854
      %v3856 = vand.u32 %v330, 4294901760
      %3857 = vmatprep.subr.mxu0 %v3856
      %v3858 = vand.u32 %v329, 4294901760
      %3859 = vmatpush1.xpose.msra.mxu0 %v3858
      %v3860 = vand.u32 %v338, 4294901760
      %3861 = vmatprep.subr.mxu0 %v3860
      %v3862 = vand.u32 %v337, 4294901760
      %3863 = vmatpush1.xpose.msra.mxu0 %v3862
      %v3864 = vand.u32 %v346, 4294901760
      %3865 = vmatprep.subr.mxu0 %v3864
      %v3866 = vand.u32 %v345, 4294901760
      %3867 = vmatpush1.xpose.msra.mxu0 %v3866
      %v3868 = vand.u32 %v354, 4294901760
      %3869 = vmatprep.subr.mxu0 %v3868
      %v3870 = vand.u32 %v353, 4294901760
      %3871 = vmatpush1.xpose.msra.mxu0 %v3870
      %v3872 = vand.u32 %v362, 4294901760
      %3873 = vmatprep.subr.mxu0 %v3872
      %v3874 = vand.u32 %v361, 4294901760
      %3875 = vmatpush1.xpose.msra.mxu0 %v3874
      %v3876 = vand.u32 %v370, 4294901760
      %3877 = vmatprep.subr.mxu0 %v3876
      %v3878 = vand.u32 %v369, 4294901760
      %3879 = vmatpush1.xpose.msra.mxu0 %v3878
      %v3880 = vand.u32 %v378, 4294901760
      %3881 = vmatprep.subr.mxu0 %v3880
      %v3882 = vand.u32 %v377, 4294901760
      %3883 = vmatpush1.xpose.msra.mxu0 %v3882
      %v3884 = vand.u32 %v386, 4294901760
      %3885 = vmatprep.subr.mxu0 %v3884
      %v3886 = vand.u32 %v385, 4294901760
      %3887 = vmatpush1.xpose.msra.mxu0 %v3886
      %v3888 = vand.u32 %v394, 4294901760
      %3889 = vmatprep.subr.mxu0 %v3888
      %v3890 = vand.u32 %v393, 4294901760
      %3891 = vmatpush1.xpose.msra.mxu0 %v3890
      %v3892 = vand.u32 %v402, 4294901760
      %3893 = vmatprep.subr.mxu0 %v3892
      %v3894 = vand.u32 %v401, 4294901760
      %3895 = vmatpush1.xpose.msra.mxu0 %v3894
      %v3896 = vand.u32 %v410, 4294901760
      %3897 = vmatprep.subr.mxu0 %v3896
      %v3898 = vand.u32 %v409, 4294901760
      %3899 = vmatpush1.xpose.msra.mxu0 %v3898
      %v3900 = vand.u32 %v418, 4294901760
      %3901 = vmatprep.subr.mxu0 %v3900
      %v3902 = vand.u32 %v417, 4294901760
      %3903 = vmatpush1.xpose.msra.mxu0 %v3902
      %v3904 = vand.u32 %v426, 4294901760
      %3905 = vmatprep.subr.mxu0 %v3904
      %v3906 = vand.u32 %v425, 4294901760
      %3907 = vmatpush1.xpose.msra.mxu0 %v3906
      %v3908 = vand.u32 %v454, 4294901760
      %v3909 = vsub.f32 %v454, %v3908
      %v3910 = vand.u32 %v3909, 4294901760
      %3911 = vmatprep.mubr.f32.mxu0 %v3910
      %v3912 = vand.u32 %v450, 4294901760
      %v3913 = vsub.f32 %v450, %v3912
      %v3914 = vand.u32 %v3913, 4294901760
      %3915 = vmatmul.mubr.f32.gmra.mrb[0].mxu0 %v3914
      %v3916 = vpop.f32.mrb[0].mxu0
      %v3917 = vadd.f32 %v3776, %v3916
      %v3918 = vpop.f32.mrb[0].mxu0
      %v3919 = vadd.f32 %v3778, %v3918
      %3920 = vdwg.mxu0
      %v3921 = vand.u32 %v178, 4294901760
      %v3922 = vsub.f32 %v178, %v3921
      %v3923 = vand.u32 %v3922, 4294901760
      %3924 = vmatprep.subr.mxu0 %v3923
      %v3925 = vand.u32 %v177, 4294901760
      %v3926 = vsub.f32 %v177, %v3925
      %v3927 = vand.u32 %v3926, 4294901760
      %3928 = vmatpush1.xpose.msra.mxu0 %v3927
      %v3929 = vand.u32 %v186, 4294901760
      %v3930 = vsub.f32 %v186, %v3929
      %v3931 = vand.u32 %v3930, 4294901760
      %3932 = vmatprep.subr.mxu0 %v3931
      %v3933 = vand.u32 %v185, 4294901760
      %v3934 = vsub.f32 %v185, %v3933
      %v3935 = vand.u32 %v3934, 4294901760
      %3936 = vmatpush1.xpose.msra.mxu0 %v3935
      %v3937 = vand.u32 %v194, 4294901760
      %v3938 = vsub.f32 %v194, %v3937
      %v3939 = vand.u32 %v3938, 4294901760
      %3940 = vmatprep.subr.mxu0 %v3939
      %v3941 = vand.u32 %v193, 4294901760
      %v3942 = vsub.f32 %v193, %v3941
      %v3943 = vand.u32 %v3942, 4294901760
      %3944 = vmatpush1.xpose.msra.mxu0 %v3943
      %v3945 = vand.u32 %v202, 4294901760
      %v3946 = vsub.f32 %v202, %v3945
      %v3947 = vand.u32 %v3946, 4294901760
      %3948 = vmatprep.subr.mxu0 %v3947
      %v3949 = vand.u32 %v201, 4294901760
      %v3950 = vsub.f32 %v201, %v3949
      %v3951 = vand.u32 %v3950, 4294901760
      %3952 = vmatpush1.xpose.msra.mxu0 %v3951
      %v3953 = vand.u32 %v210, 4294901760
      %v3954 = vsub.f32 %v210, %v3953
      %v3955 = vand.u32 %v3954, 4294901760
      %3956 = vmatprep.subr.mxu0 %v3955
      %v3957 = vand.u32 %v209, 4294901760
      %v3958 = vsub.f32 %v209, %v3957
      %v3959 = vand.u32 %v3958, 4294901760
      %3960 = vmatpush1.xpose.msra.mxu0 %v3959
      %v3961 = vand.u32 %v218, 4294901760
      %v3962 = vsub.f32 %v218, %v3961
      %v3963 = vand.u32 %v3962, 4294901760
      %3964 = vmatprep.subr.mxu0 %v3963
      %v3965 = vand.u32 %v217, 4294901760
      %v3966 = vsub.f32 %v217, %v3965
      %v3967 = vand.u32 %v3966, 4294901760
      %3968 = vmatpush1.xpose.msra.mxu0 %v3967
      %v3969 = vand.u32 %v226, 4294901760
      %v3970 = vsub.f32 %v226, %v3969
      %v3971 = vand.u32 %v3970, 4294901760
      %3972 = vmatprep.subr.mxu0 %v3971
      %v3973 = vand.u32 %v225, 4294901760
      %v3974 = vsub.f32 %v225, %v3973
      %v3975 = vand.u32 %v3974, 4294901760
      %3976 = vmatpush1.xpose.msra.mxu0 %v3975
      %v3977 = vand.u32 %v234, 4294901760
      %v3978 = vsub.f32 %v234, %v3977
      %v3979 = vand.u32 %v3978, 4294901760
      %3980 = vmatprep.subr.mxu0 %v3979
      %v3981 = vand.u32 %v233, 4294901760
      %v3982 = vsub.f32 %v233, %v3981
      %v3983 = vand.u32 %v3982, 4294901760
      %3984 = vmatpush1.xpose.msra.mxu0 %v3983
      %v3985 = vand.u32 %v242, 4294901760
      %v3986 = vsub.f32 %v242, %v3985
      %v3987 = vand.u32 %v3986, 4294901760
      %3988 = vmatprep.subr.mxu0 %v3987
      %v3989 = vand.u32 %v241, 4294901760
      %v3990 = vsub.f32 %v241, %v3989
      %v3991 = vand.u32 %v3990, 4294901760
      %3992 = vmatpush1.xpose.msra.mxu0 %v3991
      %v3993 = vand.u32 %v250, 4294901760
      %v3994 = vsub.f32 %v250, %v3993
      %v3995 = vand.u32 %v3994, 4294901760
      %3996 = vmatprep.subr.mxu0 %v3995
      %v3997 = vand.u32 %v249, 4294901760
      %v3998 = vsub.f32 %v249, %v3997
      %v3999 = vand.u32 %v3998, 4294901760
      %4000 = vmatpush1.xpose.msra.mxu0 %v3999
      %v4001 = vand.u32 %v258, 4294901760
      %v4002 = vsub.f32 %v258, %v4001
      %v4003 = vand.u32 %v4002, 4294901760
      %4004 = vmatprep.subr.mxu0 %v4003
      %v4005 = vand.u32 %v257, 4294901760
      %v4006 = vsub.f32 %v257, %v4005
      %v4007 = vand.u32 %v4006, 4294901760
      %4008 = vmatpush1.xpose.msra.mxu0 %v4007
      %v4009 = vand.u32 %v266, 4294901760
      %v4010 = vsub.f32 %v266, %v4009
      %v4011 = vand.u32 %v4010, 4294901760
      %4012 = vmatprep.subr.mxu0 %v4011
      %v4013 = vand.u32 %v265, 4294901760
      %v4014 = vsub.f32 %v265, %v4013
      %v4015 = vand.u32 %v4014, 4294901760
      %4016 = vmatpush1.xpose.msra.mxu0 %v4015
      %v4017 = vand.u32 %v274, 4294901760
      %v4018 = vsub.f32 %v274, %v4017
      %v4019 = vand.u32 %v4018, 4294901760
      %4020 = vmatprep.subr.mxu0 %v4019
      %v4021 = vand.u32 %v273, 4294901760
      %v4022 = vsub.f32 %v273, %v4021
      %v4023 = vand.u32 %v4022, 4294901760
      %4024 = vmatpush1.xpose.msra.mxu0 %v4023
      %v4025 = vand.u32 %v282, 4294901760
      %v4026 = vsub.f32 %v282, %v4025
      %v4027 = vand.u32 %v4026, 4294901760
      %4028 = vmatprep.subr.mxu0 %v4027
      %v4029 = vand.u32 %v281, 4294901760
      %v4030 = vsub.f32 %v281, %v4029
      %v4031 = vand.u32 %v4030, 4294901760
      %4032 = vmatpush1.xpose.msra.mxu0 %v4031
      %v4033 = vand.u32 %v290, 4294901760
      %v4034 = vsub.f32 %v290, %v4033
      %v4035 = vand.u32 %v4034, 4294901760
      %4036 = vmatprep.subr.mxu0 %v4035
      %v4037 = vand.u32 %v289, 4294901760
      %v4038 = vsub.f32 %v289, %v4037
      %v4039 = vand.u32 %v4038, 4294901760
      %4040 = vmatpush1.xpose.msra.mxu0 %v4039
      %v4041 = vand.u32 %v298, 4294901760
      %v4042 = vsub.f32 %v298, %v4041
      %v4043 = vand.u32 %v4042, 4294901760
      %4044 = vmatprep.subr.mxu0 %v4043
      %v4045 = vand.u32 %v297, 4294901760
      %v4046 = vsub.f32 %v297, %v4045
      %v4047 = vand.u32 %v4046, 4294901760
      %4048 = vmatpush1.xpose.msra.mxu0 %v4047
      %v4049 = vand.u32 %v306, 4294901760
      %v4050 = vsub.f32 %v306, %v4049
      %v4051 = vand.u32 %v4050, 4294901760
      %4052 = vmatprep.subr.mxu0 %v4051
      %v4053 = vand.u32 %v305, 4294901760
      %v4054 = vsub.f32 %v305, %v4053
      %v4055 = vand.u32 %v4054, 4294901760
      %4056 = vmatpush1.xpose.msra.mxu0 %v4055
      %v4057 = vand.u32 %v314, 4294901760
      %v4058 = vsub.f32 %v314, %v4057
      %v4059 = vand.u32 %v4058, 4294901760
      %4060 = vmatprep.subr.mxu0 %v4059
      %v4061 = vand.u32 %v313, 4294901760
      %v4062 = vsub.f32 %v313, %v4061
      %v4063 = vand.u32 %v4062, 4294901760
      %4064 = vmatpush1.xpose.msra.mxu0 %v4063
      %v4065 = vand.u32 %v322, 4294901760
      %v4066 = vsub.f32 %v322, %v4065
      %v4067 = vand.u32 %v4066, 4294901760
      %4068 = vmatprep.subr.mxu0 %v4067
      %v4069 = vand.u32 %v321, 4294901760
      %v4070 = vsub.f32 %v321, %v4069
      %v4071 = vand.u32 %v4070, 4294901760
      %4072 = vmatpush1.xpose.msra.mxu0 %v4071
      %v4073 = vand.u32 %v330, 4294901760
      %v4074 = vsub.f32 %v330, %v4073
      %v4075 = vand.u32 %v4074, 4294901760
      %4076 = vmatprep.subr.mxu0 %v4075
      %v4077 = vand.u32 %v329, 4294901760
      %v4078 = vsub.f32 %v329, %v4077
      %v4079 = vand.u32 %v4078, 4294901760
      %4080 = vmatpush1.xpose.msra.mxu0 %v4079
      %v4081 = vand.u32 %v338, 4294901760
      %v4082 = vsub.f32 %v338, %v4081
      %v4083 = vand.u32 %v4082, 4294901760
      %4084 = vmatprep.subr.mxu0 %v4083
      %v4085 = vand.u32 %v337, 4294901760
      %v4086 = vsub.f32 %v337, %v4085
      %v4087 = vand.u32 %v4086, 4294901760
      %4088 = vmatpush1.xpose.msra.mxu0 %v4087
      %v4089 = vand.u32 %v346, 4294901760
      %v4090 = vsub.f32 %v346, %v4089
      %v4091 = vand.u32 %v4090, 4294901760
      %4092 = vmatprep.subr.mxu0 %v4091
      %v4093 = vand.u32 %v345, 4294901760
      %v4094 = vsub.f32 %v345, %v4093
      %v4095 = vand.u32 %v4094, 4294901760
      %4096 = vmatpush1.xpose.msra.mxu0 %v4095
      %v4097 = vand.u32 %v354, 4294901760
      %v4098 = vsub.f32 %v354, %v4097
      %v4099 = vand.u32 %v4098, 4294901760
      %4100 = vmatprep.subr.mxu0 %v4099
      %v4101 = vand.u32 %v353, 4294901760
      %v4102 = vsub.f32 %v353, %v4101
      %v4103 = vand.u32 %v4102, 4294901760
      %4104 = vmatpush1.xpose.msra.mxu0 %v4103
      %v4105 = vand.u32 %v362, 4294901760
      %v4106 = vsub.f32 %v362, %v4105
      %v4107 = vand.u32 %v4106, 4294901760
      %4108 = vmatprep.subr.mxu0 %v4107
      %v4109 = vand.u32 %v361, 4294901760
      %v4110 = vsub.f32 %v361, %v4109
      %v4111 = vand.u32 %v4110, 4294901760
      %4112 = vmatpush1.xpose.msra.mxu0 %v4111
      %v4113 = vand.u32 %v370, 4294901760
      %v4114 = vsub.f32 %v370, %v4113
      %v4115 = vand.u32 %v4114, 4294901760
      %4116 = vmatprep.subr.mxu0 %v4115
      %v4117 = vand.u32 %v369, 4294901760
      %v4118 = vsub.f32 %v369, %v4117
      %v4119 = vand.u32 %v4118, 4294901760
      %4120 = vmatpush1.xpose.msra.mxu0 %v4119
      %v4121 = vand.u32 %v378, 4294901760
      %v4122 = vsub.f32 %v378, %v4121
      %v4123 = vand.u32 %v4122, 4294901760
      %4124 = vmatprep.subr.mxu0 %v4123
      %v4125 = vand.u32 %v377, 4294901760
      %v4126 = vsub.f32 %v377, %v4125
      %v4127 = vand.u32 %v4126, 4294901760
      %4128 = vmatpush1.xpose.msra.mxu0 %v4127
      %v4129 = vand.u32 %v386, 4294901760
      %v4130 = vsub.f32 %v386, %v4129
      %v4131 = vand.u32 %v4130, 4294901760
      %4132 = vmatprep.subr.mxu0 %v4131
      %v4133 = vand.u32 %v385, 4294901760
      %v4134 = vsub.f32 %v385, %v4133
      %v4135 = vand.u32 %v4134, 4294901760
      %4136 = vmatpush1.xpose.msra.mxu0 %v4135
      %v4137 = vand.u32 %v394, 4294901760
      %v4138 = vsub.f32 %v394, %v4137
      %v4139 = vand.u32 %v4138, 4294901760
      %4140 = vmatprep.subr.mxu0 %v4139
      %v4141 = vand.u32 %v393, 4294901760
      %v4142 = vsub.f32 %v393, %v4141
      %v4143 = vand.u32 %v4142, 4294901760
      %4144 = vmatpush1.xpose.msra.mxu0 %v4143
      %v4145 = vand.u32 %v402, 4294901760
      %v4146 = vsub.f32 %v402, %v4145
      %v4147 = vand.u32 %v4146, 4294901760
      %4148 = vmatprep.subr.mxu0 %v4147
      %v4149 = vand.u32 %v401, 4294901760
      %v4150 = vsub.f32 %v401, %v4149
      %v4151 = vand.u32 %v4150, 4294901760
      %4152 = vmatpush1.xpose.msra.mxu0 %v4151
      %v4153 = vand.u32 %v410, 4294901760
      %v4154 = vsub.f32 %v410, %v4153
      %v4155 = vand.u32 %v4154, 4294901760
      %4156 = vmatprep.subr.mxu0 %v4155
      %v4157 = vand.u32 %v409, 4294901760
      %v4158 = vsub.f32 %v409, %v4157
      %v4159 = vand.u32 %v4158, 4294901760
      %4160 = vmatpush1.xpose.msra.mxu0 %v4159
      %v4161 = vand.u32 %v418, 4294901760
      %v4162 = vsub.f32 %v418, %v4161
      %v4163 = vand.u32 %v4162, 4294901760
      %4164 = vmatprep.subr.mxu0 %v4163
      %v4165 = vand.u32 %v417, 4294901760
      %v4166 = vsub.f32 %v417, %v4165
      %v4167 = vand.u32 %v4166, 4294901760
      %4168 = vmatpush1.xpose.msra.mxu0 %v4167
      %v4169 = vand.u32 %v426, 4294901760
      %v4170 = vsub.f32 %v426, %v4169
      %v4171 = vand.u32 %v4170, 4294901760
      %4172 = vmatprep.subr.mxu0 %v4171
      %v4173 = vand.u32 %v425, 4294901760
      %v4174 = vsub.f32 %v425, %v4173
      %v4175 = vand.u32 %v4174, 4294901760
      %4176 = vmatpush1.xpose.msra.mxu0 %v4175
      %v4177 = vand.u32 %v454, 4294901760
      %4178 = vmatprep.mubr.f32.mxu0 %v4177
      %v4179 = vand.u32 %v450, 4294901760
      %4180 = vmatmul.mubr.f32.gmra.mrb[0].mxu0 %v4179
      %v4181 = vpop.f32.mrb[0].mxu0
      %v4182 = vadd.f32 %v3917, %v4181
      %v4183 = vpop.f32.mrb[0].mxu0
      %v4184 = vadd.f32 %v3919, %v4183
      %4185 = vdwg.mxu0
      %v4186 = vand.u32 %v178, 4294901760
      %4187 = vmatprep.subr.mxu0 %v4186
      %v4188 = vand.u32 %v177, 4294901760
      %4189 = vmatpush1.xpose.msra.mxu0 %v4188
      %v4190 = vand.u32 %v186, 4294901760
      %4191 = vmatprep.subr.mxu0 %v4190
      %v4192 = vand.u32 %v185, 4294901760
      %4193 = vmatpush1.xpose.msra.mxu0 %v4192
      %v4194 = vand.u32 %v194, 4294901760
      %4195 = vmatprep.subr.mxu0 %v4194
      %v4196 = vand.u32 %v193, 4294901760
      %4197 = vmatpush1.xpose.msra.mxu0 %v4196
      %v4198 = vand.u32 %v202, 4294901760
      %4199 = vmatprep.subr.mxu0 %v4198
      %v4200 = vand.u32 %v201, 4294901760
      %4201 = vmatpush1.xpose.msra.mxu0 %v4200
      %v4202 = vand.u32 %v210, 4294901760
      %4203 = vmatprep.subr.mxu0 %v4202
      %v4204 = vand.u32 %v209, 4294901760
      %4205 = vmatpush1.xpose.msra.mxu0 %v4204
      %v4206 = vand.u32 %v218, 4294901760
      %4207 = vmatprep.subr.mxu0 %v4206
      %v4208 = vand.u32 %v217, 4294901760
      %4209 = vmatpush1.xpose.msra.mxu0 %v4208
      %v4210 = vand.u32 %v226, 4294901760
      %4211 = vmatprep.subr.mxu0 %v4210
      %v4212 = vand.u32 %v225, 4294901760
      %4213 = vmatpush1.xpose.msra.mxu0 %v4212
      %v4214 = vand.u32 %v234, 4294901760
      %4215 = vmatprep.subr.mxu0 %v4214
      %v4216 = vand.u32 %v233, 4294901760
      %4217 = vmatpush1.xpose.msra.mxu0 %v4216
      %v4218 = vand.u32 %v242, 4294901760
      %4219 = vmatprep.subr.mxu0 %v4218
      %v4220 = vand.u32 %v241, 4294901760
      %4221 = vmatpush1.xpose.msra.mxu0 %v4220
      %v4222 = vand.u32 %v250, 4294901760
      %4223 = vmatprep.subr.mxu0 %v4222
      %v4224 = vand.u32 %v249, 4294901760
      %4225 = vmatpush1.xpose.msra.mxu0 %v4224
      %v4226 = vand.u32 %v258, 4294901760
      %4227 = vmatprep.subr.mxu0 %v4226
      %v4228 = vand.u32 %v257, 4294901760
      %4229 = vmatpush1.xpose.msra.mxu0 %v4228
      %v4230 = vand.u32 %v266, 4294901760
      %4231 = vmatprep.subr.mxu0 %v4230
      %v4232 = vand.u32 %v265, 4294901760
      %4233 = vmatpush1.xpose.msra.mxu0 %v4232
      %v4234 = vand.u32 %v274, 4294901760
      %4235 = vmatprep.subr.mxu0 %v4234
      %v4236 = vand.u32 %v273, 4294901760
      %4237 = vmatpush1.xpose.msra.mxu0 %v4236
      %v4238 = vand.u32 %v282, 4294901760
      %4239 = vmatprep.subr.mxu0 %v4238
      %v4240 = vand.u32 %v281, 4294901760
      %4241 = vmatpush1.xpose.msra.mxu0 %v4240
      %v4242 = vand.u32 %v290, 4294901760
      %4243 = vmatprep.subr.mxu0 %v4242
      %v4244 = vand.u32 %v289, 4294901760
      %4245 = vmatpush1.xpose.msra.mxu0 %v4244
      %v4246 = vand.u32 %v298, 4294901760
      %4247 = vmatprep.subr.mxu0 %v4246
      %v4248 = vand.u32 %v297, 4294901760
      %4249 = vmatpush1.xpose.msra.mxu0 %v4248
      %v4250 = vand.u32 %v306, 4294901760
      %4251 = vmatprep.subr.mxu0 %v4250
      %v4252 = vand.u32 %v305, 4294901760
      %4253 = vmatpush1.xpose.msra.mxu0 %v4252
      %v4254 = vand.u32 %v314, 4294901760
      %4255 = vmatprep.subr.mxu0 %v4254
      %v4256 = vand.u32 %v313, 4294901760
      %4257 = vmatpush1.xpose.msra.mxu0 %v4256
      %v4258 = vand.u32 %v322, 4294901760
      %4259 = vmatprep.subr.mxu0 %v4258
      %v4260 = vand.u32 %v321, 4294901760
      %4261 = vmatpush1.xpose.msra.mxu0 %v4260
      %v4262 = vand.u32 %v330, 4294901760
      %4263 = vmatprep.subr.mxu0 %v4262
      %v4264 = vand.u32 %v329, 4294901760
      %4265 = vmatpush1.xpose.msra.mxu0 %v4264
      %v4266 = vand.u32 %v338, 4294901760
      %4267 = vmatprep.subr.mxu0 %v4266
      %v4268 = vand.u32 %v337, 4294901760
      %4269 = vmatpush1.xpose.msra.mxu0 %v4268
      %v4270 = vand.u32 %v346, 4294901760
      %4271 = vmatprep.subr.mxu0 %v4270
      %v4272 = vand.u32 %v345, 4294901760
      %4273 = vmatpush1.xpose.msra.mxu0 %v4272
      %v4274 = vand.u32 %v354, 4294901760
      %4275 = vmatprep.subr.mxu0 %v4274
      %v4276 = vand.u32 %v353, 4294901760
      %4277 = vmatpush1.xpose.msra.mxu0 %v4276
      %v4278 = vand.u32 %v362, 4294901760
      %4279 = vmatprep.subr.mxu0 %v4278
      %v4280 = vand.u32 %v361, 4294901760
      %4281 = vmatpush1.xpose.msra.mxu0 %v4280
      %v4282 = vand.u32 %v370, 4294901760
      %4283 = vmatprep.subr.mxu0 %v4282
      %v4284 = vand.u32 %v369, 4294901760
      %4285 = vmatpush1.xpose.msra.mxu0 %v4284
      %v4286 = vand.u32 %v378, 4294901760
      %4287 = vmatprep.subr.mxu0 %v4286
      %v4288 = vand.u32 %v377, 4294901760
      %4289 = vmatpush1.xpose.msra.mxu0 %v4288
      %v4290 = vand.u32 %v386, 4294901760
      %4291 = vmatprep.subr.mxu0 %v4290
      %v4292 = vand.u32 %v385, 4294901760
      %4293 = vmatpush1.xpose.msra.mxu0 %v4292
      %v4294 = vand.u32 %v394, 4294901760
      %4295 = vmatprep.subr.mxu0 %v4294
      %v4296 = vand.u32 %v393, 4294901760
      %4297 = vmatpush1.xpose.msra.mxu0 %v4296
      %v4298 = vand.u32 %v402, 4294901760
      %4299 = vmatprep.subr.mxu0 %v4298
      %v4300 = vand.u32 %v401, 4294901760
      %4301 = vmatpush1.xpose.msra.mxu0 %v4300
      %v4302 = vand.u32 %v410, 4294901760
      %4303 = vmatprep.subr.mxu0 %v4302
      %v4304 = vand.u32 %v409, 4294901760
      %4305 = vmatpush1.xpose.msra.mxu0 %v4304
      %v4306 = vand.u32 %v418, 4294901760
      %4307 = vmatprep.subr.mxu0 %v4306
      %v4308 = vand.u32 %v417, 4294901760
      %4309 = vmatpush1.xpose.msra.mxu0 %v4308
      %v4310 = vand.u32 %v426, 4294901760
      %4311 = vmatprep.subr.mxu0 %v4310
      %v4312 = vand.u32 %v425, 4294901760
      %4313 = vmatpush1.xpose.msra.mxu0 %v4312
      %v4314 = vand.u32 %v454, 4294901760
      %4315 = vmatprep.mubr.f32.mxu0 %v4314
      %v4316 = vand.u32 %v450, 4294901760
      %4317 = vmatmul.mubr.f32.gmra.mrb[0].mxu0 %v4316
      %v4318 = vpop.f32.mrb[0].mxu0
      %v4319 = vadd.f32 %v4182, %v4318
      %v4320 = vpop.f32.mrb[0].mxu0
      %v4321 = vadd.f32 %v4184, %v4320
      %4322 = vdwg.mxu0
      %v4323 = vand.u32 %v180, 4294901760
      %4324 = vmatprep.subr.mxu0 %v4323
      %v4325 = vand.u32 %v179, 4294901760
      %4326 = vmatpush1.xpose.msra.mxu0 %v4325
      %v4327 = vand.u32 %v188, 4294901760
      %4328 = vmatprep.subr.mxu0 %v4327
      %v4329 = vand.u32 %v187, 4294901760
      %4330 = vmatpush1.xpose.msra.mxu0 %v4329
      %v4331 = vand.u32 %v196, 4294901760
      %4332 = vmatprep.subr.mxu0 %v4331
      %v4333 = vand.u32 %v195, 4294901760
      %4334 = vmatpush1.xpose.msra.mxu0 %v4333
      %v4335 = vand.u32 %v204, 4294901760
      %4336 = vmatprep.subr.mxu0 %v4335
      %v4337 = vand.u32 %v203, 4294901760
      %4338 = vmatpush1.xpose.msra.mxu0 %v4337
      %v4339 = vand.u32 %v212, 4294901760
      %4340 = vmatprep.subr.mxu0 %v4339
      %v4341 = vand.u32 %v211, 4294901760
      %4342 = vmatpush1.xpose.msra.mxu0 %v4341
      %v4343 = vand.u32 %v220, 4294901760
      %4344 = vmatprep.subr.mxu0 %v4343
      %v4345 = vand.u32 %v219, 4294901760
      %4346 = vmatpush1.xpose.msra.mxu0 %v4345
      %v4347 = vand.u32 %v228, 4294901760
      %4348 = vmatprep.subr.mxu0 %v4347
      %v4349 = vand.u32 %v227, 4294901760
      %4350 = vmatpush1.xpose.msra.mxu0 %v4349
      %v4351 = vand.u32 %v236, 4294901760
      %4352 = vmatprep.subr.mxu0 %v4351
      %v4353 = vand.u32 %v235, 4294901760
      %4354 = vmatpush1.xpose.msra.mxu0 %v4353
      %v4355 = vand.u32 %v244, 4294901760
      %4356 = vmatprep.subr.mxu0 %v4355
      %v4357 = vand.u32 %v243, 4294901760
      %4358 = vmatpush1.xpose.msra.mxu0 %v4357
      %v4359 = vand.u32 %v252, 4294901760
      %4360 = vmatprep.subr.mxu0 %v4359
      %v4361 = vand.u32 %v251, 4294901760
      %4362 = vmatpush1.xpose.msra.mxu0 %v4361
      %v4363 = vand.u32 %v260, 4294901760
      %4364 = vmatprep.subr.mxu0 %v4363
      %v4365 = vand.u32 %v259, 4294901760
      %4366 = vmatpush1.xpose.msra.mxu0 %v4365
      %v4367 = vand.u32 %v268, 4294901760
      %4368 = vmatprep.subr.mxu0 %v4367
      %v4369 = vand.u32 %v267, 4294901760
      %4370 = vmatpush1.xpose.msra.mxu0 %v4369
      %v4371 = vand.u32 %v276, 4294901760
      %4372 = vmatprep.subr.mxu0 %v4371
      %v4373 = vand.u32 %v275, 4294901760
      %4374 = vmatpush1.xpose.msra.mxu0 %v4373
      %v4375 = vand.u32 %v284, 4294901760
      %4376 = vmatprep.subr.mxu0 %v4375
      %v4377 = vand.u32 %v283, 4294901760
      %4378 = vmatpush1.xpose.msra.mxu0 %v4377
      %v4379 = vand.u32 %v292, 4294901760
      %4380 = vmatprep.subr.mxu0 %v4379
      %v4381 = vand.u32 %v291, 4294901760
      %4382 = vmatpush1.xpose.msra.mxu0 %v4381
      %v4383 = vand.u32 %v300, 4294901760
      %4384 = vmatprep.subr.mxu0 %v4383
      %v4385 = vand.u32 %v299, 4294901760
      %4386 = vmatpush1.xpose.msra.mxu0 %v4385
      %v4387 = vand.u32 %v308, 4294901760
      %4388 = vmatprep.subr.mxu0 %v4387
      %v4389 = vand.u32 %v307, 4294901760
      %4390 = vmatpush1.xpose.msra.mxu0 %v4389
      %v4391 = vand.u32 %v316, 4294901760
      %4392 = vmatprep.subr.mxu0 %v4391
      %v4393 = vand.u32 %v315, 4294901760
      %4394 = vmatpush1.xpose.msra.mxu0 %v4393
      %v4395 = vand.u32 %v324, 4294901760
      %4396 = vmatprep.subr.mxu0 %v4395
      %v4397 = vand.u32 %v323, 4294901760
      %4398 = vmatpush1.xpose.msra.mxu0 %v4397
      %v4399 = vand.u32 %v332, 4294901760
      %4400 = vmatprep.subr.mxu0 %v4399
      %v4401 = vand.u32 %v331, 4294901760
      %4402 = vmatpush1.xpose.msra.mxu0 %v4401
      %v4403 = vand.u32 %v340, 4294901760
      %4404 = vmatprep.subr.mxu0 %v4403
      %v4405 = vand.u32 %v339, 4294901760
      %4406 = vmatpush1.xpose.msra.mxu0 %v4405
      %v4407 = vand.u32 %v348, 4294901760
      %4408 = vmatprep.subr.mxu0 %v4407
      %v4409 = vand.u32 %v347, 4294901760
      %4410 = vmatpush1.xpose.msra.mxu0 %v4409
      %v4411 = vand.u32 %v356, 4294901760
      %4412 = vmatprep.subr.mxu0 %v4411
      %v4413 = vand.u32 %v355, 4294901760
      %4414 = vmatpush1.xpose.msra.mxu0 %v4413
      %v4415 = vand.u32 %v364, 4294901760
      %4416 = vmatprep.subr.mxu0 %v4415
      %v4417 = vand.u32 %v363, 4294901760
      %4418 = vmatpush1.xpose.msra.mxu0 %v4417
      %v4419 = vand.u32 %v372, 4294901760
      %4420 = vmatprep.subr.mxu0 %v4419
      %v4421 = vand.u32 %v371, 4294901760
      %4422 = vmatpush1.xpose.msra.mxu0 %v4421
      %v4423 = vand.u32 %v380, 4294901760
      %4424 = vmatprep.subr.mxu0 %v4423
      %v4425 = vand.u32 %v379, 4294901760
      %4426 = vmatpush1.xpose.msra.mxu0 %v4425
      %v4427 = vand.u32 %v388, 4294901760
      %4428 = vmatprep.subr.mxu0 %v4427
      %v4429 = vand.u32 %v387, 4294901760
      %4430 = vmatpush1.xpose.msra.mxu0 %v4429
      %v4431 = vand.u32 %v396, 4294901760
      %4432 = vmatprep.subr.mxu0 %v4431
      %v4433 = vand.u32 %v395, 4294901760
      %4434 = vmatpush1.xpose.msra.mxu0 %v4433
      %v4435 = vand.u32 %v404, 4294901760
      %4436 = vmatprep.subr.mxu0 %v4435
      %v4437 = vand.u32 %v403, 4294901760
      %4438 = vmatpush1.xpose.msra.mxu0 %v4437
      %v4439 = vand.u32 %v412, 4294901760
      %4440 = vmatprep.subr.mxu0 %v4439
      %v4441 = vand.u32 %v411, 4294901760
      %4442 = vmatpush1.xpose.msra.mxu0 %v4441
      %v4443 = vand.u32 %v420, 4294901760
      %4444 = vmatprep.subr.mxu0 %v4443
      %v4445 = vand.u32 %v419, 4294901760
      %4446 = vmatpush1.xpose.msra.mxu0 %v4445
      %v4447 = vand.u32 %v428, 4294901760
      %4448 = vmatprep.subr.mxu0 %v4447
      %v4449 = vand.u32 %v427, 4294901760
      %4450 = vmatpush1.xpose.msra.mxu0 %v4449
      %v4451 = vand.u32 %v462, 4294901760
      %v4452 = vsub.f32 %v462, %v4451
      %v4453 = vand.u32 %v4452, 4294901760
      %v4454 = vsub.f32 %v4452, %v4453
      %v4455 = vand.u32 %v4454, 4294901760
      %4456 = vmatprep.mubr.f32.mxu0 %v4455
      %v4457 = vand.u32 %v458, 4294901760
      %v4458 = vsub.f32 %v458, %v4457
      %v4459 = vand.u32 %v4458, 4294901760
      %v4460 = vsub.f32 %v4458, %v4459
      %v4461 = vand.u32 %v4460, 4294901760
      %4462 = vmatmul.mubr.f32.gmra.mrb[0].mxu0 %v4461
      %v4463 = vpop.f32.mrb[0].mxu0
      %v4464 = vadd.f32 %v4319, %v4463
      %v4465 = vpop.f32.mrb[0].mxu0
      %v4466 = vadd.f32 %v4321, %v4465
      %4467 = vdwg.mxu0
      %v4468 = vand.u32 %v180, 4294901760
      %v4469 = vsub.f32 %v180, %v4468
      %v4470 = vand.u32 %v4469, 4294901760
      %v4471 = vsub.f32 %v4469, %v4470
      %v4472 = vand.u32 %v4471, 4294901760
      %4473 = vmatprep.subr.mxu0 %v4472
      %v4474 = vand.u32 %v179, 4294901760
      %v4475 = vsub.f32 %v179, %v4474
      %v4476 = vand.u32 %v4475, 4294901760
      %v4477 = vsub.f32 %v4475, %v4476
      %v4478 = vand.u32 %v4477, 4294901760
      %4479 = vmatpush1.xpose.msra.mxu0 %v4478
      %v4480 = vand.u32 %v188, 4294901760
      %v4481 = vsub.f32 %v188, %v4480
      %v4482 = vand.u32 %v4481, 4294901760
      %v4483 = vsub.f32 %v4481, %v4482
      %v4484 = vand.u32 %v4483, 4294901760
      %4485 = vmatprep.subr.mxu0 %v4484
      %v4486 = vand.u32 %v187, 4294901760
      %v4487 = vsub.f32 %v187, %v4486
      %v4488 = vand.u32 %v4487, 4294901760
      %v4489 = vsub.f32 %v4487, %v4488
      %v4490 = vand.u32 %v4489, 4294901760
      %4491 = vmatpush1.xpose.msra.mxu0 %v4490
      %v4492 = vand.u32 %v196, 4294901760
      %v4493 = vsub.f32 %v196, %v4492
      %v4494 = vand.u32 %v4493, 4294901760
      %v4495 = vsub.f32 %v4493, %v4494
      %v4496 = vand.u32 %v4495, 4294901760
      %4497 = vmatprep.subr.mxu0 %v4496
      %v4498 = vand.u32 %v195, 4294901760
      %v4499 = vsub.f32 %v195, %v4498
      %v4500 = vand.u32 %v4499, 4294901760
      %v4501 = vsub.f32 %v4499, %v4500
      %v4502 = vand.u32 %v4501, 4294901760
      %4503 = vmatpush1.xpose.msra.mxu0 %v4502
      %v4504 = vand.u32 %v204, 4294901760
      %v4505 = vsub.f32 %v204, %v4504
      %v4506 = vand.u32 %v4505, 4294901760
      %v4507 = vsub.f32 %v4505, %v4506
      %v4508 = vand.u32 %v4507, 4294901760
      %4509 = vmatprep.subr.mxu0 %v4508
      %v4510 = vand.u32 %v203, 4294901760
      %v4511 = vsub.f32 %v203, %v4510
      %v4512 = vand.u32 %v4511, 4294901760
      %v4513 = vsub.f32 %v4511, %v4512
      %v4514 = vand.u32 %v4513, 4294901760
      %4515 = vmatpush1.xpose.msra.mxu0 %v4514
      %v4516 = vand.u32 %v212, 4294901760
      %v4517 = vsub.f32 %v212, %v4516
      %v4518 = vand.u32 %v4517, 4294901760
      %v4519 = vsub.f32 %v4517, %v4518
      %v4520 = vand.u32 %v4519, 4294901760
      %4521 = vmatprep.subr.mxu0 %v4520
      %v4522 = vand.u32 %v211, 4294901760
      %v4523 = vsub.f32 %v211, %v4522
      %v4524 = vand.u32 %v4523, 4294901760
      %v4525 = vsub.f32 %v4523, %v4524
      %v4526 = vand.u32 %v4525, 4294901760
      %4527 = vmatpush1.xpose.msra.mxu0 %v4526
      %v4528 = vand.u32 %v220, 4294901760
      %v4529 = vsub.f32 %v220, %v4528
      %v4530 = vand.u32 %v4529, 4294901760
      %v4531 = vsub.f32 %v4529, %v4530
      %v4532 = vand.u32 %v4531, 4294901760
      %4533 = vmatprep.subr.mxu0 %v4532
      %v4534 = vand.u32 %v219, 4294901760
      %v4535 = vsub.f32 %v219, %v4534
      %v4536 = vand.u32 %v4535, 4294901760
      %v4537 = vsub.f32 %v4535, %v4536
      %v4538 = vand.u32 %v4537, 4294901760
      %4539 = vmatpush1.xpose.msra.mxu0 %v4538
      %v4540 = vand.u32 %v228, 4294901760
      %v4541 = vsub.f32 %v228, %v4540
      %v4542 = vand.u32 %v4541, 4294901760
      %v4543 = vsub.f32 %v4541, %v4542
      %v4544 = vand.u32 %v4543, 4294901760
      %4545 = vmatprep.subr.mxu0 %v4544
      %v4546 = vand.u32 %v227, 4294901760
      %v4547 = vsub.f32 %v227, %v4546
      %v4548 = vand.u32 %v4547, 4294901760
      %v4549 = vsub.f32 %v4547, %v4548
      %v4550 = vand.u32 %v4549, 4294901760
      %4551 = vmatpush1.xpose.msra.mxu0 %v4550
      %v4552 = vand.u32 %v236, 4294901760
      %v4553 = vsub.f32 %v236, %v4552
      %v4554 = vand.u32 %v4553, 4294901760
      %v4555 = vsub.f32 %v4553, %v4554
      %v4556 = vand.u32 %v4555, 4294901760
      %4557 = vmatprep.subr.mxu0 %v4556
      %v4558 = vand.u32 %v235, 4294901760
      %v4559 = vsub.f32 %v235, %v4558
      %v4560 = vand.u32 %v4559, 4294901760
      %v4561 = vsub.f32 %v4559, %v4560
      %v4562 = vand.u32 %v4561, 4294901760
      %4563 = vmatpush1.xpose.msra.mxu0 %v4562
      %v4564 = vand.u32 %v244, 4294901760
      %v4565 = vsub.f32 %v244, %v4564
      %v4566 = vand.u32 %v4565, 4294901760
      %v4567 = vsub.f32 %v4565, %v4566
      %v4568 = vand.u32 %v4567, 4294901760
      %4569 = vmatprep.subr.mxu0 %v4568
      %v4570 = vand.u32 %v243, 4294901760
      %v4571 = vsub.f32 %v243, %v4570
      %v4572 = vand.u32 %v4571, 4294901760
      %v4573 = vsub.f32 %v4571, %v4572
      %v4574 = vand.u32 %v4573, 4294901760
      %4575 = vmatpush1.xpose.msra.mxu0 %v4574
      %v4576 = vand.u32 %v252, 4294901760
      %v4577 = vsub.f32 %v252, %v4576
      %v4578 = vand.u32 %v4577, 4294901760
      %v4579 = vsub.f32 %v4577, %v4578
      %v4580 = vand.u32 %v4579, 4294901760
      %4581 = vmatprep.subr.mxu0 %v4580
      %v4582 = vand.u32 %v251, 4294901760
      %v4583 = vsub.f32 %v251, %v4582
      %v4584 = vand.u32 %v4583, 4294901760
      %v4585 = vsub.f32 %v4583, %v4584
      %v4586 = vand.u32 %v4585, 4294901760
      %4587 = vmatpush1.xpose.msra.mxu0 %v4586
      %v4588 = vand.u32 %v260, 4294901760
      %v4589 = vsub.f32 %v260, %v4588
      %v4590 = vand.u32 %v4589, 4294901760
      %v4591 = vsub.f32 %v4589, %v4590
      %v4592 = vand.u32 %v4591, 4294901760
      %4593 = vmatprep.subr.mxu0 %v4592
      %v4594 = vand.u32 %v259, 4294901760
      %v4595 = vsub.f32 %v259, %v4594
      %v4596 = vand.u32 %v4595, 4294901760
      %v4597 = vsub.f32 %v4595, %v4596
      %v4598 = vand.u32 %v4597, 4294901760
      %4599 = vmatpush1.xpose.msra.mxu0 %v4598
      %v4600 = vand.u32 %v268, 4294901760
      %v4601 = vsub.f32 %v268, %v4600
      %v4602 = vand.u32 %v4601, 4294901760
      %v4603 = vsub.f32 %v4601, %v4602
      %v4604 = vand.u32 %v4603, 4294901760
      %4605 = vmatprep.subr.mxu0 %v4604
      %v4606 = vand.u32 %v267, 4294901760
      %v4607 = vsub.f32 %v267, %v4606
      %v4608 = vand.u32 %v4607, 4294901760
      %v4609 = vsub.f32 %v4607, %v4608
      %v4610 = vand.u32 %v4609, 4294901760
      %4611 = vmatpush1.xpose.msra.mxu0 %v4610
      %v4612 = vand.u32 %v276, 4294901760
      %v4613 = vsub.f32 %v276, %v4612
      %v4614 = vand.u32 %v4613, 4294901760
      %v4615 = vsub.f32 %v4613, %v4614
      %v4616 = vand.u32 %v4615, 4294901760
      %4617 = vmatprep.subr.mxu0 %v4616
      %v4618 = vand.u32 %v275, 4294901760
      %v4619 = vsub.f32 %v275, %v4618
      %v4620 = vand.u32 %v4619, 4294901760
      %v4621 = vsub.f32 %v4619, %v4620
      %v4622 = vand.u32 %v4621, 4294901760
      %4623 = vmatpush1.xpose.msra.mxu0 %v4622
      %v4624 = vand.u32 %v284, 4294901760
      %v4625 = vsub.f32 %v284, %v4624
      %v4626 = vand.u32 %v4625, 4294901760
      %v4627 = vsub.f32 %v4625, %v4626
      %v4628 = vand.u32 %v4627, 4294901760
      %4629 = vmatprep.subr.mxu0 %v4628
      %v4630 = vand.u32 %v283, 4294901760
      %v4631 = vsub.f32 %v283, %v4630
      %v4632 = vand.u32 %v4631, 4294901760
      %v4633 = vsub.f32 %v4631, %v4632
      %v4634 = vand.u32 %v4633, 4294901760
      %4635 = vmatpush1.xpose.msra.mxu0 %v4634
      %v4636 = vand.u32 %v292, 4294901760
      %v4637 = vsub.f32 %v292, %v4636
      %v4638 = vand.u32 %v4637, 4294901760
      %v4639 = vsub.f32 %v4637, %v4638
      %v4640 = vand.u32 %v4639, 4294901760
      %4641 = vmatprep.subr.mxu0 %v4640
      %v4642 = vand.u32 %v291, 4294901760
      %v4643 = vsub.f32 %v291, %v4642
      %v4644 = vand.u32 %v4643, 4294901760
      %v4645 = vsub.f32 %v4643, %v4644
      %v4646 = vand.u32 %v4645, 4294901760
      %4647 = vmatpush1.xpose.msra.mxu0 %v4646
      %v4648 = vand.u32 %v300, 4294901760
      %v4649 = vsub.f32 %v300, %v4648
      %v4650 = vand.u32 %v4649, 4294901760
      %v4651 = vsub.f32 %v4649, %v4650
      %v4652 = vand.u32 %v4651, 4294901760
      %4653 = vmatprep.subr.mxu0 %v4652
      %v4654 = vand.u32 %v299, 4294901760
      %v4655 = vsub.f32 %v299, %v4654
      %v4656 = vand.u32 %v4655, 4294901760
      %v4657 = vsub.f32 %v4655, %v4656
      %v4658 = vand.u32 %v4657, 4294901760
      %4659 = vmatpush1.xpose.msra.mxu0 %v4658
      %v4660 = vand.u32 %v308, 4294901760
      %v4661 = vsub.f32 %v308, %v4660
      %v4662 = vand.u32 %v4661, 4294901760
      %v4663 = vsub.f32 %v4661, %v4662
      %v4664 = vand.u32 %v4663, 4294901760
      %4665 = vmatprep.subr.mxu0 %v4664
      %v4666 = vand.u32 %v307, 4294901760
      %v4667 = vsub.f32 %v307, %v4666
      %v4668 = vand.u32 %v4667, 4294901760
      %v4669 = vsub.f32 %v4667, %v4668
      %v4670 = vand.u32 %v4669, 4294901760
      %4671 = vmatpush1.xpose.msra.mxu0 %v4670
      %v4672 = vand.u32 %v316, 4294901760
      %v4673 = vsub.f32 %v316, %v4672
      %v4674 = vand.u32 %v4673, 4294901760
      %v4675 = vsub.f32 %v4673, %v4674
      %v4676 = vand.u32 %v4675, 4294901760
      %4677 = vmatprep.subr.mxu0 %v4676
      %v4678 = vand.u32 %v315, 4294901760
      %v4679 = vsub.f32 %v315, %v4678
      %v4680 = vand.u32 %v4679, 4294901760
      %v4681 = vsub.f32 %v4679, %v4680
      %v4682 = vand.u32 %v4681, 4294901760
      %4683 = vmatpush1.xpose.msra.mxu0 %v4682
      %v4684 = vand.u32 %v324, 4294901760
      %v4685 = vsub.f32 %v324, %v4684
      %v4686 = vand.u32 %v4685, 4294901760
      %v4687 = vsub.f32 %v4685, %v4686
      %v4688 = vand.u32 %v4687, 4294901760
      %4689 = vmatprep.subr.mxu0 %v4688
      %v4690 = vand.u32 %v323, 4294901760
      %v4691 = vsub.f32 %v323, %v4690
      %v4692 = vand.u32 %v4691, 4294901760
      %v4693 = vsub.f32 %v4691, %v4692
      %v4694 = vand.u32 %v4693, 4294901760
      %4695 = vmatpush1.xpose.msra.mxu0 %v4694
      %v4696 = vand.u32 %v332, 4294901760
      %v4697 = vsub.f32 %v332, %v4696
      %v4698 = vand.u32 %v4697, 4294901760
      %v4699 = vsub.f32 %v4697, %v4698
      %v4700 = vand.u32 %v4699, 4294901760
      %4701 = vmatprep.subr.mxu0 %v4700
      %v4702 = vand.u32 %v331, 4294901760
      %v4703 = vsub.f32 %v331, %v4702
      %v4704 = vand.u32 %v4703, 4294901760
      %v4705 = vsub.f32 %v4703, %v4704
      %v4706 = vand.u32 %v4705, 4294901760
      %4707 = vmatpush1.xpose.msra.mxu0 %v4706
      %v4708 = vand.u32 %v340, 4294901760
      %v4709 = vsub.f32 %v340, %v4708
      %v4710 = vand.u32 %v4709, 4294901760
      %v4711 = vsub.f32 %v4709, %v4710
      %v4712 = vand.u32 %v4711, 4294901760
      %4713 = vmatprep.subr.mxu0 %v4712
      %v4714 = vand.u32 %v339, 4294901760
      %v4715 = vsub.f32 %v339, %v4714
      %v4716 = vand.u32 %v4715, 4294901760
      %v4717 = vsub.f32 %v4715, %v4716
      %v4718 = vand.u32 %v4717, 4294901760
      %4719 = vmatpush1.xpose.msra.mxu0 %v4718
      %v4720 = vand.u32 %v348, 4294901760
      %v4721 = vsub.f32 %v348, %v4720
      %v4722 = vand.u32 %v4721, 4294901760
      %v4723 = vsub.f32 %v4721, %v4722
      %v4724 = vand.u32 %v4723, 4294901760
      %4725 = vmatprep.subr.mxu0 %v4724
      %v4726 = vand.u32 %v347, 4294901760
      %v4727 = vsub.f32 %v347, %v4726
      %v4728 = vand.u32 %v4727, 4294901760
      %v4729 = vsub.f32 %v4727, %v4728
      %v4730 = vand.u32 %v4729, 4294901760
      %4731 = vmatpush1.xpose.msra.mxu0 %v4730
      %v4732 = vand.u32 %v356, 4294901760
      %v4733 = vsub.f32 %v356, %v4732
      %v4734 = vand.u32 %v4733, 4294901760
      %v4735 = vsub.f32 %v4733, %v4734
      %v4736 = vand.u32 %v4735, 4294901760
      %4737 = vmatprep.subr.mxu0 %v4736
      %v4738 = vand.u32 %v355, 4294901760
      %v4739 = vsub.f32 %v355, %v4738
      %v4740 = vand.u32 %v4739, 4294901760
      %v4741 = vsub.f32 %v4739, %v4740
      %v4742 = vand.u32 %v4741, 4294901760
      %4743 = vmatpush1.xpose.msra.mxu0 %v4742
      %v4744 = vand.u32 %v364, 4294901760
      %v4745 = vsub.f32 %v364, %v4744
      %v4746 = vand.u32 %v4745, 4294901760
      %v4747 = vsub.f32 %v4745, %v4746
      %v4748 = vand.u32 %v4747, 4294901760
      %4749 = vmatprep.subr.mxu0 %v4748
      %v4750 = vand.u32 %v363, 4294901760
      %v4751 = vsub.f32 %v363, %v4750
      %v4752 = vand.u32 %v4751, 4294901760
      %v4753 = vsub.f32 %v4751, %v4752
      %v4754 = vand.u32 %v4753, 4294901760
      %4755 = vmatpush1.xpose.msra.mxu0 %v4754
      %v4756 = vand.u32 %v372, 4294901760
      %v4757 = vsub.f32 %v372, %v4756
      %v4758 = vand.u32 %v4757, 4294901760
      %v4759 = vsub.f32 %v4757, %v4758
      %v4760 = vand.u32 %v4759, 4294901760
      %4761 = vmatprep.subr.mxu0 %v4760
      %v4762 = vand.u32 %v371, 4294901760
      %v4763 = vsub.f32 %v371, %v4762
      %v4764 = vand.u32 %v4763, 4294901760
      %v4765 = vsub.f32 %v4763, %v4764
      %v4766 = vand.u32 %v4765, 4294901760
      %4767 = vmatpush1.xpose.msra.mxu0 %v4766
      %v4768 = vand.u32 %v380, 4294901760
      %v4769 = vsub.f32 %v380, %v4768
      %v4770 = vand.u32 %v4769, 4294901760
      %v4771 = vsub.f32 %v4769, %v4770
      %v4772 = vand.u32 %v4771, 4294901760
      %4773 = vmatprep.subr.mxu0 %v4772
      %v4774 = vand.u32 %v379, 4294901760
      %v4775 = vsub.f32 %v379, %v4774
      %v4776 = vand.u32 %v4775, 4294901760
      %v4777 = vsub.f32 %v4775, %v4776
      %v4778 = vand.u32 %v4777, 4294901760
      %4779 = vmatpush1.xpose.msra.mxu0 %v4778
      %v4780 = vand.u32 %v388, 4294901760
      %v4781 = vsub.f32 %v388, %v4780
      %v4782 = vand.u32 %v4781, 4294901760
      %v4783 = vsub.f32 %v4781, %v4782
      %v4784 = vand.u32 %v4783, 4294901760
      %4785 = vmatprep.subr.mxu0 %v4784
      %v4786 = vand.u32 %v387, 4294901760
      %v4787 = vsub.f32 %v387, %v4786
      %v4788 = vand.u32 %v4787, 4294901760
      %v4789 = vsub.f32 %v4787, %v4788
      %v4790 = vand.u32 %v4789, 4294901760
      %4791 = vmatpush1.xpose.msra.mxu0 %v4790
      %v4792 = vand.u32 %v396, 4294901760
      %v4793 = vsub.f32 %v396, %v4792
      %v4794 = vand.u32 %v4793, 4294901760
      %v4795 = vsub.f32 %v4793, %v4794
      %v4796 = vand.u32 %v4795, 4294901760
      %4797 = vmatprep.subr.mxu0 %v4796
      %v4798 = vand.u32 %v395, 4294901760
      %v4799 = vsub.f32 %v395, %v4798
      %v4800 = vand.u32 %v4799, 4294901760
      %v4801 = vsub.f32 %v4799, %v4800
      %v4802 = vand.u32 %v4801, 4294901760
      %4803 = vmatpush1.xpose.msra.mxu0 %v4802
      %v4804 = vand.u32 %v404, 4294901760
      %v4805 = vsub.f32 %v404, %v4804
      %v4806 = vand.u32 %v4805, 4294901760
      %v4807 = vsub.f32 %v4805, %v4806
      %v4808 = vand.u32 %v4807, 4294901760
      %4809 = vmatprep.subr.mxu0 %v4808
      %v4810 = vand.u32 %v403, 4294901760
      %v4811 = vsub.f32 %v403, %v4810
      %v4812 = vand.u32 %v4811, 4294901760
      %v4813 = vsub.f32 %v4811, %v4812
      %v4814 = vand.u32 %v4813, 4294901760
      %4815 = vmatpush1.xpose.msra.mxu0 %v4814
      %v4816 = vand.u32 %v412, 4294901760
      %v4817 = vsub.f32 %v412, %v4816
      %v4818 = vand.u32 %v4817, 4294901760
      %v4819 = vsub.f32 %v4817, %v4818
      %v4820 = vand.u32 %v4819, 4294901760
      %4821 = vmatprep.subr.mxu0 %v4820
      %v4822 = vand.u32 %v411, 4294901760
      %v4823 = vsub.f32 %v411, %v4822
      %v4824 = vand.u32 %v4823, 4294901760
      %v4825 = vsub.f32 %v4823, %v4824
      %v4826 = vand.u32 %v4825, 4294901760
      %4827 = vmatpush1.xpose.msra.mxu0 %v4826
      %v4828 = vand.u32 %v420, 4294901760
      %v4829 = vsub.f32 %v420, %v4828
      %v4830 = vand.u32 %v4829, 4294901760
      %v4831 = vsub.f32 %v4829, %v4830
      %v4832 = vand.u32 %v4831, 4294901760
      %4833 = vmatprep.subr.mxu0 %v4832
      %v4834 = vand.u32 %v419, 4294901760
      %v4835 = vsub.f32 %v419, %v4834
      %v4836 = vand.u32 %v4835, 4294901760
      %v4837 = vsub.f32 %v4835, %v4836
      %v4838 = vand.u32 %v4837, 4294901760
      %4839 = vmatpush1.xpose.msra.mxu0 %v4838
      %v4840 = vand.u32 %v428, 4294901760
      %v4841 = vsub.f32 %v428, %v4840
      %v4842 = vand.u32 %v4841, 4294901760
      %v4843 = vsub.f32 %v4841, %v4842
      %v4844 = vand.u32 %v4843, 4294901760
      %4845 = vmatprep.subr.mxu0 %v4844
      %v4846 = vand.u32 %v427, 4294901760
      %v4847 = vsub.f32 %v427, %v4846
      %v4848 = vand.u32 %v4847, 4294901760
      %v4849 = vsub.f32 %v4847, %v4848
      %v4850 = vand.u32 %v4849, 4294901760
      %4851 = vmatpush1.xpose.msra.mxu0 %v4850
      %v4852 = vand.u32 %v462, 4294901760
      %4853 = vmatprep.mubr.f32.mxu0 %v4852
      %v4854 = vand.u32 %v458, 4294901760
      %4855 = vmatmul.mubr.f32.gmra.mrb[0].mxu0 %v4854
      %v4856 = vpop.f32.mrb[0].mxu0
      %v4857 = vadd.f32 %v4464, %v4856
      %v4858 = vpop.f32.mrb[0].mxu0
      %v4859 = vadd.f32 %v4466, %v4858
      %4860 = vdwg.mxu0
      %v4861 = vand.u32 %v180, 4294901760
      %v4862 = vsub.f32 %v180, %v4861
      %4863 = vmatprep.subr.mxu0 %v4862
      %v4864 = vand.u32 %v179, 4294901760
      %v4865 = vsub.f32 %v179, %v4864
      %4866 = vmatpush1.xpose.msra.mxu0 %v4865
      %v4867 = vand.u32 %v188, 4294901760
      %v4868 = vsub.f32 %v188, %v4867
      %4869 = vmatprep.subr.mxu0 %v4868
      %v4870 = vand.u32 %v187, 4294901760
      %v4871 = vsub.f32 %v187, %v4870
      %4872 = vmatpush1.xpose.msra.mxu0 %v4871
      %v4873 = vand.u32 %v196, 4294901760
      %v4874 = vsub.f32 %v196, %v4873
      %4875 = vmatprep.subr.mxu0 %v4874
      %v4876 = vand.u32 %v195, 4294901760
      %v4877 = vsub.f32 %v195, %v4876
      %4878 = vmatpush1.xpose.msra.mxu0 %v4877
      %v4879 = vand.u32 %v204, 4294901760
      %v4880 = vsub.f32 %v204, %v4879
      %4881 = vmatprep.subr.mxu0 %v4880
      %v4882 = vand.u32 %v203, 4294901760
      %v4883 = vsub.f32 %v203, %v4882
      %4884 = vmatpush1.xpose.msra.mxu0 %v4883
      %v4885 = vand.u32 %v212, 4294901760
      %v4886 = vsub.f32 %v212, %v4885
      %4887 = vmatprep.subr.mxu0 %v4886
      %v4888 = vand.u32 %v211, 4294901760
      %v4889 = vsub.f32 %v211, %v4888
      %4890 = vmatpush1.xpose.msra.mxu0 %v4889
      %v4891 = vand.u32 %v220, 4294901760
      %v4892 = vsub.f32 %v220, %v4891
      %4893 = vmatprep.subr.mxu0 %v4892
      %v4894 = vand.u32 %v219, 4294901760
      %v4895 = vsub.f32 %v219, %v4894
      %4896 = vmatpush1.xpose.msra.mxu0 %v4895
      %v4897 = vand.u32 %v228, 4294901760
      %v4898 = vsub.f32 %v228, %v4897
      %4899 = vmatprep.subr.mxu0 %v4898
      %v4900 = vand.u32 %v227, 4294901760
      %v4901 = vsub.f32 %v227, %v4900
      %4902 = vmatpush1.xpose.msra.mxu0 %v4901
      %v4903 = vand.u32 %v236, 4294901760
      %v4904 = vsub.f32 %v236, %v4903
      %4905 = vmatprep.subr.mxu0 %v4904
      %v4906 = vand.u32 %v235, 4294901760
      %v4907 = vsub.f32 %v235, %v4906
      %4908 = vmatpush1.xpose.msra.mxu0 %v4907
      %v4909 = vand.u32 %v244, 4294901760
      %v4910 = vsub.f32 %v244, %v4909
      %4911 = vmatprep.subr.mxu0 %v4910
      %v4912 = vand.u32 %v243, 4294901760
      %v4913 = vsub.f32 %v243, %v4912
      %4914 = vmatpush1.xpose.msra.mxu0 %v4913
      %v4915 = vand.u32 %v252, 4294901760
      %v4916 = vsub.f32 %v252, %v4915
      %4917 = vmatprep.subr.mxu0 %v4916
      %v4918 = vand.u32 %v251, 4294901760
      %v4919 = vsub.f32 %v251, %v4918
      %4920 = vmatpush1.xpose.msra.mxu0 %v4919
      %v4921 = vand.u32 %v260, 4294901760
      %v4922 = vsub.f32 %v260, %v4921
      %4923 = vmatprep.subr.mxu0 %v4922
      %v4924 = vand.u32 %v259, 4294901760
      %v4925 = vsub.f32 %v259, %v4924
      %4926 = vmatpush1.xpose.msra.mxu0 %v4925
      %v4927 = vand.u32 %v268, 4294901760
      %v4928 = vsub.f32 %v268, %v4927
      %4929 = vmatprep.subr.mxu0 %v4928
      %v4930 = vand.u32 %v267, 4294901760
      %v4931 = vsub.f32 %v267, %v4930
      %4932 = vmatpush1.xpose.msra.mxu0 %v4931
      %v4933 = vand.u32 %v276, 4294901760
      %v4934 = vsub.f32 %v276, %v4933
      %4935 = vmatprep.subr.mxu0 %v4934
      %v4936 = vand.u32 %v275, 4294901760
      %v4937 = vsub.f32 %v275, %v4936
      %4938 = vmatpush1.xpose.msra.mxu0 %v4937
      %v4939 = vand.u32 %v284, 4294901760
      %v4940 = vsub.f32 %v284, %v4939
      %4941 = vmatprep.subr.mxu0 %v4940
      %v4942 = vand.u32 %v283, 4294901760
      %v4943 = vsub.f32 %v283, %v4942
      %4944 = vmatpush1.xpose.msra.mxu0 %v4943
      %v4945 = vand.u32 %v292, 4294901760
      %v4946 = vsub.f32 %v292, %v4945
      %4947 = vmatprep.subr.mxu0 %v4946
      %v4948 = vand.u32 %v291, 4294901760
      %v4949 = vsub.f32 %v291, %v4948
      %4950 = vmatpush1.xpose.msra.mxu0 %v4949
      %v4951 = vand.u32 %v300, 4294901760
      %v4952 = vsub.f32 %v300, %v4951
      %4953 = vmatprep.subr.mxu0 %v4952
      %v4954 = vand.u32 %v299, 4294901760
      %v4955 = vsub.f32 %v299, %v4954
      %4956 = vmatpush1.xpose.msra.mxu0 %v4955
      %v4957 = vand.u32 %v308, 4294901760
      %v4958 = vsub.f32 %v308, %v4957
      %4959 = vmatprep.subr.mxu0 %v4958
      %v4960 = vand.u32 %v307, 4294901760
      %v4961 = vsub.f32 %v307, %v4960
      %4962 = vmatpush1.xpose.msra.mxu0 %v4961
      %v4963 = vand.u32 %v316, 4294901760
      %v4964 = vsub.f32 %v316, %v4963
      %4965 = vmatprep.subr.mxu0 %v4964
      %v4966 = vand.u32 %v315, 4294901760
      %v4967 = vsub.f32 %v315, %v4966
      %4968 = vmatpush1.xpose.msra.mxu0 %v4967
      %v4969 = vand.u32 %v324, 4294901760
      %v4970 = vsub.f32 %v324, %v4969
      %4971 = vmatprep.subr.mxu0 %v4970
      %v4972 = vand.u32 %v323, 4294901760
      %v4973 = vsub.f32 %v323, %v4972
      %4974 = vmatpush1.xpose.msra.mxu0 %v4973
      %v4975 = vand.u32 %v332, 4294901760
      %v4976 = vsub.f32 %v332, %v4975
      %4977 = vmatprep.subr.mxu0 %v4976
      %v4978 = vand.u32 %v331, 4294901760
      %v4979 = vsub.f32 %v331, %v4978
      %4980 = vmatpush1.xpose.msra.mxu0 %v4979
      %v4981 = vand.u32 %v340, 4294901760
      %v4982 = vsub.f32 %v340, %v4981
      %4983 = vmatprep.subr.mxu0 %v4982
      %v4984 = vand.u32 %v339, 4294901760
      %v4985 = vsub.f32 %v339, %v4984
      %4986 = vmatpush1.xpose.msra.mxu0 %v4985
      %v4987 = vand.u32 %v348, 4294901760
      %v4988 = vsub.f32 %v348, %v4987
      %4989 = vmatprep.subr.mxu0 %v4988
      %v4990 = vand.u32 %v347, 4294901760
      %v4991 = vsub.f32 %v347, %v4990
      %4992 = vmatpush1.xpose.msra.mxu0 %v4991
      %v4993 = vand.u32 %v356, 4294901760
      %v4994 = vsub.f32 %v356, %v4993
      %4995 = vmatprep.subr.mxu0 %v4994
      %v4996 = vand.u32 %v355, 4294901760
      %v4997 = vsub.f32 %v355, %v4996
      %4998 = vmatpush1.xpose.msra.mxu0 %v4997
      %v4999 = vand.u32 %v364, 4294901760
      %v5000 = vsub.f32 %v364, %v4999
      %5001 = vmatprep.subr.mxu0 %v5000
      %v5002 = vand.u32 %v363, 4294901760
      %v5003 = vsub.f32 %v363, %v5002
      %5004 = vmatpush1.xpose.msra.mxu0 %v5003
      %v5005 = vand.u32 %v372, 4294901760
      %v5006 = vsub.f32 %v372, %v5005
      %5007 = vmatprep.subr.mxu0 %v5006
      %v5008 = vand.u32 %v371, 4294901760
      %v5009 = vsub.f32 %v371, %v5008
      %5010 = vmatpush1.xpose.msra.mxu0 %v5009
      %v5011 = vand.u32 %v380, 4294901760
      %v5012 = vsub.f32 %v380, %v5011
      %5013 = vmatprep.subr.mxu0 %v5012
      %v5014 = vand.u32 %v379, 4294901760
      %v5015 = vsub.f32 %v379, %v5014
      %5016 = vmatpush1.xpose.msra.mxu0 %v5015
      %v5017 = vand.u32 %v388, 4294901760
      %v5018 = vsub.f32 %v388, %v5017
      %5019 = vmatprep.subr.mxu0 %v5018
      %v5020 = vand.u32 %v387, 4294901760
      %v5021 = vsub.f32 %v387, %v5020
      %5022 = vmatpush1.xpose.msra.mxu0 %v5021
      %v5023 = vand.u32 %v396, 4294901760
      %v5024 = vsub.f32 %v396, %v5023
      %5025 = vmatprep.subr.mxu0 %v5024
      %v5026 = vand.u32 %v395, 4294901760
      %v5027 = vsub.f32 %v395, %v5026
      %5028 = vmatpush1.xpose.msra.mxu0 %v5027
      %v5029 = vand.u32 %v404, 4294901760
      %v5030 = vsub.f32 %v404, %v5029
      %5031 = vmatprep.subr.mxu0 %v5030
      %v5032 = vand.u32 %v403, 4294901760
      %v5033 = vsub.f32 %v403, %v5032
      %5034 = vmatpush1.xpose.msra.mxu0 %v5033
      %v5035 = vand.u32 %v412, 4294901760
      %v5036 = vsub.f32 %v412, %v5035
      %5037 = vmatprep.subr.mxu0 %v5036
      %v5038 = vand.u32 %v411, 4294901760
      %v5039 = vsub.f32 %v411, %v5038
      %5040 = vmatpush1.xpose.msra.mxu0 %v5039
      %v5041 = vand.u32 %v420, 4294901760
      %v5042 = vsub.f32 %v420, %v5041
      %5043 = vmatprep.subr.mxu0 %v5042
      %v5044 = vand.u32 %v419, 4294901760
      %v5045 = vsub.f32 %v419, %v5044
      %5046 = vmatpush1.xpose.msra.mxu0 %v5045
      %v5047 = vand.u32 %v428, 4294901760
      %v5048 = vsub.f32 %v428, %v5047
      %5049 = vmatprep.subr.mxu0 %v5048
      %v5050 = vand.u32 %v427, 4294901760
      %v5051 = vsub.f32 %v427, %v5050
      %5052 = vmatpush1.xpose.msra.mxu0 %v5051
      %v5053 = vand.u32 %v462, 4294901760
      %v5054 = vsub.f32 %v462, %v5053
      %5055 = vmatprep.mubr.f32.mxu0 %v5054
      %v5056 = vand.u32 %v458, 4294901760
      %v5057 = vsub.f32 %v458, %v5056
      %5058 = vmatmul.mubr.f32.gmra.mrb[0].mxu0 %v5057
      %v5059 = vpop.f32.mrb[0].mxu0
      %v5060 = vadd.f32 %v4857, %v5059
      %v5061 = vpop.f32.mrb[0].mxu0
      %v5062 = vadd.f32 %v4859, %v5061
      %5063 = vdwg.mxu0
      %v5064 = vand.u32 %v180, 4294901760
      %5065 = vmatprep.subr.mxu0 %v5064
      %v5066 = vand.u32 %v179, 4294901760
      %5067 = vmatpush1.xpose.msra.mxu0 %v5066
      %v5068 = vand.u32 %v188, 4294901760
      %5069 = vmatprep.subr.mxu0 %v5068
      %v5070 = vand.u32 %v187, 4294901760
      %5071 = vmatpush1.xpose.msra.mxu0 %v5070
      %v5072 = vand.u32 %v196, 4294901760
      %5073 = vmatprep.subr.mxu0 %v5072
      %v5074 = vand.u32 %v195, 4294901760
      %5075 = vmatpush1.xpose.msra.mxu0 %v5074
      %v5076 = vand.u32 %v204, 4294901760
      %5077 = vmatprep.subr.mxu0 %v5076
      %v5078 = vand.u32 %v203, 4294901760
      %5079 = vmatpush1.xpose.msra.mxu0 %v5078
      %v5080 = vand.u32 %v212, 4294901760
      %5081 = vmatprep.subr.mxu0 %v5080
      %v5082 = vand.u32 %v211, 4294901760
      %5083 = vmatpush1.xpose.msra.mxu0 %v5082
      %v5084 = vand.u32 %v220, 4294901760
      %5085 = vmatprep.subr.mxu0 %v5084
      %v5086 = vand.u32 %v219, 4294901760
      %5087 = vmatpush1.xpose.msra.mxu0 %v5086
      %v5088 = vand.u32 %v228, 4294901760
      %5089 = vmatprep.subr.mxu0 %v5088
      %v5090 = vand.u32 %v227, 4294901760
      %5091 = vmatpush1.xpose.msra.mxu0 %v5090
      %v5092 = vand.u32 %v236, 4294901760
      %5093 = vmatprep.subr.mxu0 %v5092
      %v5094 = vand.u32 %v235, 4294901760
      %5095 = vmatpush1.xpose.msra.mxu0 %v5094
      %v5096 = vand.u32 %v244, 4294901760
      %5097 = vmatprep.subr.mxu0 %v5096
      %v5098 = vand.u32 %v243, 4294901760
      %5099 = vmatpush1.xpose.msra.mxu0 %v5098
      %v5100 = vand.u32 %v252, 4294901760
      %5101 = vmatprep.subr.mxu0 %v5100
      %v5102 = vand.u32 %v251, 4294901760
      %5103 = vmatpush1.xpose.msra.mxu0 %v5102
      %v5104 = vand.u32 %v260, 4294901760
      %5105 = vmatprep.subr.mxu0 %v5104
      %v5106 = vand.u32 %v259, 4294901760
      %5107 = vmatpush1.xpose.msra.mxu0 %v5106
      %v5108 = vand.u32 %v268, 4294901760
      %5109 = vmatprep.subr.mxu0 %v5108
      %v5110 = vand.u32 %v267, 4294901760
      %5111 = vmatpush1.xpose.msra.mxu0 %v5110
      %v5112 = vand.u32 %v276, 4294901760
      %5113 = vmatprep.subr.mxu0 %v5112
      %v5114 = vand.u32 %v275, 4294901760
      %5115 = vmatpush1.xpose.msra.mxu0 %v5114
      %v5116 = vand.u32 %v284, 4294901760
      %5117 = vmatprep.subr.mxu0 %v5116
      %v5118 = vand.u32 %v283, 4294901760
      %5119 = vmatpush1.xpose.msra.mxu0 %v5118
      %v5120 = vand.u32 %v292, 4294901760
      %5121 = vmatprep.subr.mxu0 %v5120
      %v5122 = vand.u32 %v291, 4294901760
      %5123 = vmatpush1.xpose.msra.mxu0 %v5122
      %v5124 = vand.u32 %v300, 4294901760
      %5125 = vmatprep.subr.mxu0 %v5124
      %v5126 = vand.u32 %v299, 4294901760
      %5127 = vmatpush1.xpose.msra.mxu0 %v5126
      %v5128 = vand.u32 %v308, 4294901760
      %5129 = vmatprep.subr.mxu0 %v5128
      %v5130 = vand.u32 %v307, 4294901760
      %5131 = vmatpush1.xpose.msra.mxu0 %v5130
      %v5132 = vand.u32 %v316, 4294901760
      %5133 = vmatprep.subr.mxu0 %v5132
      %v5134 = vand.u32 %v315, 4294901760
      %5135 = vmatpush1.xpose.msra.mxu0 %v5134
      %v5136 = vand.u32 %v324, 4294901760
      %5137 = vmatprep.subr.mxu0 %v5136
      %v5138 = vand.u32 %v323, 4294901760
      %5139 = vmatpush1.xpose.msra.mxu0 %v5138
      %v5140 = vand.u32 %v332, 4294901760
      %5141 = vmatprep.subr.mxu0 %v5140
      %v5142 = vand.u32 %v331, 4294901760
      %5143 = vmatpush1.xpose.msra.mxu0 %v5142
      %v5144 = vand.u32 %v340, 4294901760
      %5145 = vmatprep.subr.mxu0 %v5144
      %v5146 = vand.u32 %v339, 4294901760
      %5147 = vmatpush1.xpose.msra.mxu0 %v5146
      %v5148 = vand.u32 %v348, 4294901760
      %5149 = vmatprep.subr.mxu0 %v5148
      %v5150 = vand.u32 %v347, 4294901760
      %5151 = vmatpush1.xpose.msra.mxu0 %v5150
      %v5152 = vand.u32 %v356, 4294901760
      %5153 = vmatprep.subr.mxu0 %v5152
      %v5154 = vand.u32 %v355, 4294901760
      %5155 = vmatpush1.xpose.msra.mxu0 %v5154
      %v5156 = vand.u32 %v364, 4294901760
      %5157 = vmatprep.subr.mxu0 %v5156
      %v5158 = vand.u32 %v363, 4294901760
      %5159 = vmatpush1.xpose.msra.mxu0 %v5158
      %v5160 = vand.u32 %v372, 4294901760
      %5161 = vmatprep.subr.mxu0 %v5160
      %v5162 = vand.u32 %v371, 4294901760
      %5163 = vmatpush1.xpose.msra.mxu0 %v5162
      %v5164 = vand.u32 %v380, 4294901760
      %5165 = vmatprep.subr.mxu0 %v5164
      %v5166 = vand.u32 %v379, 4294901760
      %5167 = vmatpush1.xpose.msra.mxu0 %v5166
      %v5168 = vand.u32 %v388, 4294901760
      %5169 = vmatprep.subr.mxu0 %v5168
      %v5170 = vand.u32 %v387, 4294901760
      %5171 = vmatpush1.xpose.msra.mxu0 %v5170
      %v5172 = vand.u32 %v396, 4294901760
      %5173 = vmatprep.subr.mxu0 %v5172
      %v5174 = vand.u32 %v395, 4294901760
      %5175 = vmatpush1.xpose.msra.mxu0 %v5174
      %v5176 = vand.u32 %v404, 4294901760
      %5177 = vmatprep.subr.mxu0 %v5176
      %v5178 = vand.u32 %v403, 4294901760
      %5179 = vmatpush1.xpose.msra.mxu0 %v5178
      %v5180 = vand.u32 %v412, 4294901760
      %5181 = vmatprep.subr.mxu0 %v5180
      %v5182 = vand.u32 %v411, 4294901760
      %5183 = vmatpush1.xpose.msra.mxu0 %v5182
      %v5184 = vand.u32 %v420, 4294901760
      %5185 = vmatprep.subr.mxu0 %v5184
      %v5186 = vand.u32 %v419, 4294901760
      %5187 = vmatpush1.xpose.msra.mxu0 %v5186
      %v5188 = vand.u32 %v428, 4294901760
      %5189 = vmatprep.subr.mxu0 %v5188
      %v5190 = vand.u32 %v427, 4294901760
      %5191 = vmatpush1.xpose.msra.mxu0 %v5190
      %v5192 = vand.u32 %v462, 4294901760
      %v5193 = vsub.f32 %v462, %v5192
      %v5194 = vand.u32 %v5193, 4294901760
      %5195 = vmatprep.mubr.f32.mxu0 %v5194
      %v5196 = vand.u32 %v458, 4294901760
      %v5197 = vsub.f32 %v458, %v5196
      %v5198 = vand.u32 %v5197, 4294901760
      %5199 = vmatmul.mubr.f32.gmra.mrb[0].mxu0 %v5198
      %v5200 = vpop.f32.mrb[0].mxu0
      %v5201 = vadd.f32 %v5060, %v5200
      %v5202 = vpop.f32.mrb[0].mxu0
      %v5203 = vadd.f32 %v5062, %v5202
      %5204 = vdwg.mxu0
      %v5205 = vand.u32 %v180, 4294901760
      %v5206 = vsub.f32 %v180, %v5205
      %v5207 = vand.u32 %v5206, 4294901760
      %5208 = vmatprep.subr.mxu0 %v5207
      %v5209 = vand.u32 %v179, 4294901760
      %v5210 = vsub.f32 %v179, %v5209
      %v5211 = vand.u32 %v5210, 4294901760
      %5212 = vmatpush1.xpose.msra.mxu0 %v5211
      %v5213 = vand.u32 %v188, 4294901760
      %v5214 = vsub.f32 %v188, %v5213
      %v5215 = vand.u32 %v5214, 4294901760
      %5216 = vmatprep.subr.mxu0 %v5215
      %v5217 = vand.u32 %v187, 4294901760
      %v5218 = vsub.f32 %v187, %v5217
      %v5219 = vand.u32 %v5218, 4294901760
      %5220 = vmatpush1.xpose.msra.mxu0 %v5219
      %v5221 = vand.u32 %v196, 4294901760
      %v5222 = vsub.f32 %v196, %v5221
      %v5223 = vand.u32 %v5222, 4294901760
      %5224 = vmatprep.subr.mxu0 %v5223
      %v5225 = vand.u32 %v195, 4294901760
      %v5226 = vsub.f32 %v195, %v5225
      %v5227 = vand.u32 %v5226, 4294901760
      %5228 = vmatpush1.xpose.msra.mxu0 %v5227
      %v5229 = vand.u32 %v204, 4294901760
      %v5230 = vsub.f32 %v204, %v5229
      %v5231 = vand.u32 %v5230, 4294901760
      %5232 = vmatprep.subr.mxu0 %v5231
      %v5233 = vand.u32 %v203, 4294901760
      %v5234 = vsub.f32 %v203, %v5233
      %v5235 = vand.u32 %v5234, 4294901760
      %5236 = vmatpush1.xpose.msra.mxu0 %v5235
      %v5237 = vand.u32 %v212, 4294901760
      %v5238 = vsub.f32 %v212, %v5237
      %v5239 = vand.u32 %v5238, 4294901760
      %5240 = vmatprep.subr.mxu0 %v5239
      %v5241 = vand.u32 %v211, 4294901760
      %v5242 = vsub.f32 %v211, %v5241
      %v5243 = vand.u32 %v5242, 4294901760
      %5244 = vmatpush1.xpose.msra.mxu0 %v5243
      %v5245 = vand.u32 %v220, 4294901760
      %v5246 = vsub.f32 %v220, %v5245
      %v5247 = vand.u32 %v5246, 4294901760
      %5248 = vmatprep.subr.mxu0 %v5247
      %v5249 = vand.u32 %v219, 4294901760
      %v5250 = vsub.f32 %v219, %v5249
      %v5251 = vand.u32 %v5250, 4294901760
      %5252 = vmatpush1.xpose.msra.mxu0 %v5251
      %v5253 = vand.u32 %v228, 4294901760
      %v5254 = vsub.f32 %v228, %v5253
      %v5255 = vand.u32 %v5254, 4294901760
      %5256 = vmatprep.subr.mxu0 %v5255
      %v5257 = vand.u32 %v227, 4294901760
      %v5258 = vsub.f32 %v227, %v5257
      %v5259 = vand.u32 %v5258, 4294901760
      %5260 = vmatpush1.xpose.msra.mxu0 %v5259
      %v5261 = vand.u32 %v236, 4294901760
      %v5262 = vsub.f32 %v236, %v5261
      %v5263 = vand.u32 %v5262, 4294901760
      %5264 = vmatprep.subr.mxu0 %v5263
      %v5265 = vand.u32 %v235, 4294901760
      %v5266 = vsub.f32 %v235, %v5265
      %v5267 = vand.u32 %v5266, 4294901760
      %5268 = vmatpush1.xpose.msra.mxu0 %v5267
      %v5269 = vand.u32 %v244, 4294901760
      %v5270 = vsub.f32 %v244, %v5269
      %v5271 = vand.u32 %v5270, 4294901760
      %5272 = vmatprep.subr.mxu0 %v5271
      %v5273 = vand.u32 %v243, 4294901760
      %v5274 = vsub.f32 %v243, %v5273
      %v5275 = vand.u32 %v5274, 4294901760
      %5276 = vmatpush1.xpose.msra.mxu0 %v5275
      %v5277 = vand.u32 %v252, 4294901760
      %v5278 = vsub.f32 %v252, %v5277
      %v5279 = vand.u32 %v5278, 4294901760
      %5280 = vmatprep.subr.mxu0 %v5279
      %v5281 = vand.u32 %v251, 4294901760
      %v5282 = vsub.f32 %v251, %v5281
      %v5283 = vand.u32 %v5282, 4294901760
      %5284 = vmatpush1.xpose.msra.mxu0 %v5283
      %v5285 = vand.u32 %v260, 4294901760
      %v5286 = vsub.f32 %v260, %v5285
      %v5287 = vand.u32 %v5286, 4294901760
      %5288 = vmatprep.subr.mxu0 %v5287
      %v5289 = vand.u32 %v259, 4294901760
      %v5290 = vsub.f32 %v259, %v5289
      %v5291 = vand.u32 %v5290, 4294901760
      %5292 = vmatpush1.xpose.msra.mxu0 %v5291
      %v5293 = vand.u32 %v268, 4294901760
      %v5294 = vsub.f32 %v268, %v5293
      %v5295 = vand.u32 %v5294, 4294901760
      %5296 = vmatprep.subr.mxu0 %v5295
      %v5297 = vand.u32 %v267, 4294901760
      %v5298 = vsub.f32 %v267, %v5297
      %v5299 = vand.u32 %v5298, 4294901760
      %5300 = vmatpush1.xpose.msra.mxu0 %v5299
      %v5301 = vand.u32 %v276, 4294901760
      %v5302 = vsub.f32 %v276, %v5301
      %v5303 = vand.u32 %v5302, 4294901760
      %5304 = vmatprep.subr.mxu0 %v5303
      %v5305 = vand.u32 %v275, 4294901760
      %v5306 = vsub.f32 %v275, %v5305
      %v5307 = vand.u32 %v5306, 4294901760
      %5308 = vmatpush1.xpose.msra.mxu0 %v5307
      %v5309 = vand.u32 %v284, 4294901760
      %v5310 = vsub.f32 %v284, %v5309
      %v5311 = vand.u32 %v5310, 4294901760
      %5312 = vmatprep.subr.mxu0 %v5311
      %v5313 = vand.u32 %v283, 4294901760
      %v5314 = vsub.f32 %v283, %v5313
      %v5315 = vand.u32 %v5314, 4294901760
      %5316 = vmatpush1.xpose.msra.mxu0 %v5315
      %v5317 = vand.u32 %v292, 4294901760
      %v5318 = vsub.f32 %v292, %v5317
      %v5319 = vand.u32 %v5318, 4294901760
      %5320 = vmatprep.subr.mxu0 %v5319
      %v5321 = vand.u32 %v291, 4294901760
      %v5322 = vsub.f32 %v291, %v5321
      %v5323 = vand.u32 %v5322, 4294901760
      %5324 = vmatpush1.xpose.msra.mxu0 %v5323
      %v5325 = vand.u32 %v300, 4294901760
      %v5326 = vsub.f32 %v300, %v5325
      %v5327 = vand.u32 %v5326, 4294901760
      %5328 = vmatprep.subr.mxu0 %v5327
      %v5329 = vand.u32 %v299, 4294901760
      %v5330 = vsub.f32 %v299, %v5329
      %v5331 = vand.u32 %v5330, 4294901760
      %5332 = vmatpush1.xpose.msra.mxu0 %v5331
      %v5333 = vand.u32 %v308, 4294901760
      %v5334 = vsub.f32 %v308, %v5333
      %v5335 = vand.u32 %v5334, 4294901760
      %5336 = vmatprep.subr.mxu0 %v5335
      %v5337 = vand.u32 %v307, 4294901760
      %v5338 = vsub.f32 %v307, %v5337
      %v5339 = vand.u32 %v5338, 4294901760
      %5340 = vmatpush1.xpose.msra.mxu0 %v5339
      %v5341 = vand.u32 %v316, 4294901760
      %v5342 = vsub.f32 %v316, %v5341
      %v5343 = vand.u32 %v5342, 4294901760
      %5344 = vmatprep.subr.mxu0 %v5343
      %v5345 = vand.u32 %v315, 4294901760
      %v5346 = vsub.f32 %v315, %v5345
      %v5347 = vand.u32 %v5346, 4294901760
      %5348 = vmatpush1.xpose.msra.mxu0 %v5347
      %v5349 = vand.u32 %v324, 4294901760
      %v5350 = vsub.f32 %v324, %v5349
      %v5351 = vand.u32 %v5350, 4294901760
      %5352 = vmatprep.subr.mxu0 %v5351
      %v5353 = vand.u32 %v323, 4294901760
      %v5354 = vsub.f32 %v323, %v5353
      %v5355 = vand.u32 %v5354, 4294901760
      %5356 = vmatpush1.xpose.msra.mxu0 %v5355
      %v5357 = vand.u32 %v332, 4294901760
      %v5358 = vsub.f32 %v332, %v5357
      %v5359 = vand.u32 %v5358, 4294901760
      %5360 = vmatprep.subr.mxu0 %v5359
      %v5361 = vand.u32 %v331, 4294901760
      %v5362 = vsub.f32 %v331, %v5361
      %v5363 = vand.u32 %v5362, 4294901760
      %5364 = vmatpush1.xpose.msra.mxu0 %v5363
      %v5365 = vand.u32 %v340, 4294901760
      %v5366 = vsub.f32 %v340, %v5365
      %v5367 = vand.u32 %v5366, 4294901760
      %5368 = vmatprep.subr.mxu0 %v5367
      %v5369 = vand.u32 %v339, 4294901760
      %v5370 = vsub.f32 %v339, %v5369
      %v5371 = vand.u32 %v5370, 4294901760
      %5372 = vmatpush1.xpose.msra.mxu0 %v5371
      %v5373 = vand.u32 %v348, 4294901760
      %v5374 = vsub.f32 %v348, %v5373
      %v5375 = vand.u32 %v5374, 4294901760
      %5376 = vmatprep.subr.mxu0 %v5375
      %v5377 = vand.u32 %v347, 4294901760
      %v5378 = vsub.f32 %v347, %v5377
      %v5379 = vand.u32 %v5378, 4294901760
      %5380 = vmatpush1.xpose.msra.mxu0 %v5379
      %v5381 = vand.u32 %v356, 4294901760
      %v5382 = vsub.f32 %v356, %v5381
      %v5383 = vand.u32 %v5382, 4294901760
      %5384 = vmatprep.subr.mxu0 %v5383
      %v5385 = vand.u32 %v355, 4294901760
      %v5386 = vsub.f32 %v355, %v5385
      %v5387 = vand.u32 %v5386, 4294901760
      %5388 = vmatpush1.xpose.msra.mxu0 %v5387
      %v5389 = vand.u32 %v364, 4294901760
      %v5390 = vsub.f32 %v364, %v5389
      %v5391 = vand.u32 %v5390, 4294901760
      %5392 = vmatprep.subr.mxu0 %v5391
      %v5393 = vand.u32 %v363, 4294901760
      %v5394 = vsub.f32 %v363, %v5393
      %v5395 = vand.u32 %v5394, 4294901760
      %5396 = vmatpush1.xpose.msra.mxu0 %v5395
      %v5397 = vand.u32 %v372, 4294901760
      %v5398 = vsub.f32 %v372, %v5397
      %v5399 = vand.u32 %v5398, 4294901760
      %5400 = vmatprep.subr.mxu0 %v5399
      %v5401 = vand.u32 %v371, 4294901760
      %v5402 = vsub.f32 %v371, %v5401
      %v5403 = vand.u32 %v5402, 4294901760
      %5404 = vmatpush1.xpose.msra.mxu0 %v5403
      %v5405 = vand.u32 %v380, 4294901760
      %v5406 = vsub.f32 %v380, %v5405
      %v5407 = vand.u32 %v5406, 4294901760
      %5408 = vmatprep.subr.mxu0 %v5407
      %v5409 = vand.u32 %v379, 4294901760
      %v5410 = vsub.f32 %v379, %v5409
      %v5411 = vand.u32 %v5410, 4294901760
      %5412 = vmatpush1.xpose.msra.mxu0 %v5411
      %v5413 = vand.u32 %v388, 4294901760
      %v5414 = vsub.f32 %v388, %v5413
      %v5415 = vand.u32 %v5414, 4294901760
      %5416 = vmatprep.subr.mxu0 %v5415
      %v5417 = vand.u32 %v387, 4294901760
      %v5418 = vsub.f32 %v387, %v5417
      %v5419 = vand.u32 %v5418, 4294901760
      %5420 = vmatpush1.xpose.msra.mxu0 %v5419
      %v5421 = vand.u32 %v396, 4294901760
      %v5422 = vsub.f32 %v396, %v5421
      %v5423 = vand.u32 %v5422, 4294901760
      %5424 = vmatprep.subr.mxu0 %v5423
      %v5425 = vand.u32 %v395, 4294901760
      %v5426 = vsub.f32 %v395, %v5425
      %v5427 = vand.u32 %v5426, 4294901760
      %5428 = vmatpush1.xpose.msra.mxu0 %v5427
      %v5429 = vand.u32 %v404, 4294901760
      %v5430 = vsub.f32 %v404, %v5429
      %v5431 = vand.u32 %v5430, 4294901760
      %5432 = vmatprep.subr.mxu0 %v5431
      %v5433 = vand.u32 %v403, 4294901760
      %v5434 = vsub.f32 %v403, %v5433
      %v5435 = vand.u32 %v5434, 4294901760
      %5436 = vmatpush1.xpose.msra.mxu0 %v5435
      %v5437 = vand.u32 %v412, 4294901760
      %v5438 = vsub.f32 %v412, %v5437
      %v5439 = vand.u32 %v5438, 4294901760
      %5440 = vmatprep.subr.mxu0 %v5439
      %v5441 = vand.u32 %v411, 4294901760
      %v5442 = vsub.f32 %v411, %v5441
      %v5443 = vand.u32 %v5442, 4294901760
      %5444 = vmatpush1.xpose.msra.mxu0 %v5443
      %v5445 = vand.u32 %v420, 4294901760
      %v5446 = vsub.f32 %v420, %v5445
      %v5447 = vand.u32 %v5446, 4294901760
      %5448 = vmatprep.subr.mxu0 %v5447
      %v5449 = vand.u32 %v419, 4294901760
      %v5450 = vsub.f32 %v419, %v5449
      %v5451 = vand.u32 %v5450, 4294901760
      %5452 = vmatpush1.xpose.msra.mxu0 %v5451
      %v5453 = vand.u32 %v428, 4294901760
      %v5454 = vsub.f32 %v428, %v5453
      %v5455 = vand.u32 %v5454, 4294901760
      %5456 = vmatprep.subr.mxu0 %v5455
      %v5457 = vand.u32 %v427, 4294901760
      %v5458 = vsub.f32 %v427, %v5457
      %v5459 = vand.u32 %v5458, 4294901760
      %5460 = vmatpush1.xpose.msra.mxu0 %v5459
      %v5461 = vand.u32 %v462, 4294901760
      %5462 = vmatprep.mubr.f32.mxu0 %v5461
      %v5463 = vand.u32 %v458, 4294901760
      %5464 = vmatmul.mubr.f32.gmra.mrb[0].mxu0 %v5463
      %v5465 = vpop.f32.mrb[0].mxu0
      %v5466 = vadd.f32 %v5201, %v5465
      %v5467 = vpop.f32.mrb[0].mxu0
      %v5468 = vadd.f32 %v5203, %v5467
      %5469 = vdwg.mxu0
      %v5470 = vand.u32 %v180, 4294901760
      %5471 = vmatprep.subr.mxu0 %v5470
      %v5472 = vand.u32 %v179, 4294901760
      %5473 = vmatpush1.xpose.msra.mxu0 %v5472
      %v5474 = vand.u32 %v188, 4294901760
      %5475 = vmatprep.subr.mxu0 %v5474
      %v5476 = vand.u32 %v187, 4294901760
      %5477 = vmatpush1.xpose.msra.mxu0 %v5476
      %v5478 = vand.u32 %v196, 4294901760
      %5479 = vmatprep.subr.mxu0 %v5478
      %v5480 = vand.u32 %v195, 4294901760
      %5481 = vmatpush1.xpose.msra.mxu0 %v5480
      %v5482 = vand.u32 %v204, 4294901760
      %5483 = vmatprep.subr.mxu0 %v5482
      %v5484 = vand.u32 %v203, 4294901760
      %5485 = vmatpush1.xpose.msra.mxu0 %v5484
      %v5486 = vand.u32 %v212, 4294901760
      %5487 = vmatprep.subr.mxu0 %v5486
      %v5488 = vand.u32 %v211, 4294901760
      %5489 = vmatpush1.xpose.msra.mxu0 %v5488
      %v5490 = vand.u32 %v220, 4294901760
      %5491 = vmatprep.subr.mxu0 %v5490
      %v5492 = vand.u32 %v219, 4294901760
      %5493 = vmatpush1.xpose.msra.mxu0 %v5492
      %v5494 = vand.u32 %v228, 4294901760
      %5495 = vmatprep.subr.mxu0 %v5494
      %v5496 = vand.u32 %v227, 4294901760
      %5497 = vmatpush1.xpose.msra.mxu0 %v5496
      %v5498 = vand.u32 %v236, 4294901760
      %5499 = vmatprep.subr.mxu0 %v5498
      %v5500 = vand.u32 %v235, 4294901760
      %5501 = vmatpush1.xpose.msra.mxu0 %v5500
      %v5502 = vand.u32 %v244, 4294901760
      %5503 = vmatprep.subr.mxu0 %v5502
      %v5504 = vand.u32 %v243, 4294901760
      %5505 = vmatpush1.xpose.msra.mxu0 %v5504
      %v5506 = vand.u32 %v252, 4294901760
      %5507 = vmatprep.subr.mxu0 %v5506
      %v5508 = vand.u32 %v251, 4294901760
      %5509 = vmatpush1.xpose.msra.mxu0 %v5508
      %v5510 = vand.u32 %v260, 4294901760
      %5511 = vmatprep.subr.mxu0 %v5510
      %v5512 = vand.u32 %v259, 4294901760
      %5513 = vmatpush1.xpose.msra.mxu0 %v5512
      %v5514 = vand.u32 %v268, 4294901760
      %5515 = vmatprep.subr.mxu0 %v5514
      %v5516 = vand.u32 %v267, 4294901760
      %5517 = vmatpush1.xpose.msra.mxu0 %v5516
      %v5518 = vand.u32 %v276, 4294901760
      %5519 = vmatprep.subr.mxu0 %v5518
      %v5520 = vand.u32 %v275, 4294901760
      %5521 = vmatpush1.xpose.msra.mxu0 %v5520
      %v5522 = vand.u32 %v284, 4294901760
      %5523 = vmatprep.subr.mxu0 %v5522
      %v5524 = vand.u32 %v283, 4294901760
      %5525 = vmatpush1.xpose.msra.mxu0 %v5524
      %v5526 = vand.u32 %v292, 4294901760
      %5527 = vmatprep.subr.mxu0 %v5526
      %v5528 = vand.u32 %v291, 4294901760
      %5529 = vmatpush1.xpose.msra.mxu0 %v5528
      %v5530 = vand.u32 %v300, 4294901760
      %5531 = vmatprep.subr.mxu0 %v5530
      %v5532 = vand.u32 %v299, 4294901760
      %5533 = vmatpush1.xpose.msra.mxu0 %v5532
      %v5534 = vand.u32 %v308, 4294901760
      %5535 = vmatprep.subr.mxu0 %v5534
      %v5536 = vand.u32 %v307, 4294901760
      %5537 = vmatpush1.xpose.msra.mxu0 %v5536
      %v5538 = vand.u32 %v316, 4294901760
      %5539 = vmatprep.subr.mxu0 %v5538
      %v5540 = vand.u32 %v315, 4294901760
      %5541 = vmatpush1.xpose.msra.mxu0 %v5540
      %v5542 = vand.u32 %v324, 4294901760
      %5543 = vmatprep.subr.mxu0 %v5542
      %v5544 = vand.u32 %v323, 4294901760
      %5545 = vmatpush1.xpose.msra.mxu0 %v5544
      %v5546 = vand.u32 %v332, 4294901760
      %5547 = vmatprep.subr.mxu0 %v5546
      %v5548 = vand.u32 %v331, 4294901760
      %5549 = vmatpush1.xpose.msra.mxu0 %v5548
      %v5550 = vand.u32 %v340, 4294901760
      %5551 = vmatprep.subr.mxu0 %v5550
      %v5552 = vand.u32 %v339, 4294901760
      %5553 = vmatpush1.xpose.msra.mxu0 %v5552
      %v5554 = vand.u32 %v348, 4294901760
      %5555 = vmatprep.subr.mxu0 %v5554
      %v5556 = vand.u32 %v347, 4294901760
      %5557 = vmatpush1.xpose.msra.mxu0 %v5556
      %v5558 = vand.u32 %v356, 4294901760
      %5559 = vmatprep.subr.mxu0 %v5558
      %v5560 = vand.u32 %v355, 4294901760
      %5561 = vmatpush1.xpose.msra.mxu0 %v5560
      %v5562 = vand.u32 %v364, 4294901760
      %5563 = vmatprep.subr.mxu0 %v5562
      %v5564 = vand.u32 %v363, 4294901760
      %5565 = vmatpush1.xpose.msra.mxu0 %v5564
      %v5566 = vand.u32 %v372, 4294901760
      %5567 = vmatprep.subr.mxu0 %v5566
      %v5568 = vand.u32 %v371, 4294901760
      %5569 = vmatpush1.xpose.msra.mxu0 %v5568
      %v5570 = vand.u32 %v380, 4294901760
      %5571 = vmatprep.subr.mxu0 %v5570
      %v5572 = vand.u32 %v379, 4294901760
      %5573 = vmatpush1.xpose.msra.mxu0 %v5572
      %v5574 = vand.u32 %v388, 4294901760
      %5575 = vmatprep.subr.mxu0 %v5574
      %v5576 = vand.u32 %v387, 4294901760
      %5577 = vmatpush1.xpose.msra.mxu0 %v5576
      %v5578 = vand.u32 %v396, 4294901760
      %5579 = vmatprep.subr.mxu0 %v5578
      %v5580 = vand.u32 %v395, 4294901760
      %5581 = vmatpush1.xpose.msra.mxu0 %v5580
      %v5582 = vand.u32 %v404, 4294901760
      %5583 = vmatprep.subr.mxu0 %v5582
      %v5584 = vand.u32 %v403, 4294901760
      %5585 = vmatpush1.xpose.msra.mxu0 %v5584
      %v5586 = vand.u32 %v412, 4294901760
      %5587 = vmatprep.subr.mxu0 %v5586
      %v5588 = vand.u32 %v411, 4294901760
      %5589 = vmatpush1.xpose.msra.mxu0 %v5588
      %v5590 = vand.u32 %v420, 4294901760
      %5591 = vmatprep.subr.mxu0 %v5590
      %v5592 = vand.u32 %v419, 4294901760
      %5593 = vmatpush1.xpose.msra.mxu0 %v5592
      %v5594 = vand.u32 %v428, 4294901760
      %5595 = vmatprep.subr.mxu0 %v5594
      %v5596 = vand.u32 %v427, 4294901760
      %5597 = vmatpush1.xpose.msra.mxu0 %v5596
      %v5598 = vand.u32 %v462, 4294901760
      %5599 = vmatprep.mubr.f32.mxu0 %v5598
      %v5600 = vand.u32 %v458, 4294901760
      %5601 = vmatmul.mubr.f32.gmra.mrb[0].mxu0 %v5600
      %v5602 = vpop.f32.mrb[0].mxu0
      %v5603 = vadd.f32 %v5466, %v5602
      %v5604 = vpop.f32.mrb[0].mxu0
      %v5605 = vadd.f32 %v5468, %v5604
      %5606 = vdwg.mxu0
      %v5609 = vcombine.low %v5603, %v5605
      %v5611 = vunpack.c.l.s4 1966171168
      %v5612 = vunpack.c.0.s8 %v5611
      %v5613 = vlaneseq
      %v5614 = vshrl.u32 %v5613, 7
      %v5615 = vsub.s32 %v5612, %v5614
      %v5616 = vrot.slane %v5609, %v5615
      %v5618 = vunpack.c.l.s4 1966171168
      %v5619 = vunpack.c.0.s8 %v5618
      %v5620 = vlaneseq
      %v5621 = vshrl.u32 %v5620, 7
      %v5622 = vsub.s32 %v5619, %v5621
      %v5623 = vrot.slane %v5616, %v5622
      %v5625 = vlaneseq
      %vm5626 = vcmp.ge.s32.totalorder %v5625, 0
      %vm5627 = vcmp.lt.s32.totalorder %v5625, 256
      %vm5628 = vmand %vm5626, %vm5627
      %5629 = vst.msk [vmem:[%s171] sm:$0x3] %vm5628, %v5623
      %s5630 = smul.u32 2, %s13
      %p5631 = scmp.lt.s32.totalorder %s5630, 3
      %s5632 = scalar_select %p5631, %s5630, 3
      %s5633 = scalar_lea.vmem %s2, %s5632
      // Predicated region
      $region29: #{matrix_sensing_forward.1} parent=27 // pred_check
        %p5634 = pneg %p78
      $region30: #{matrix_sensing_forward.1} parent=27 // pred_check_branch
        %5636 = sbr.rel (%p5634) target = $region32
      $region31: #{matrix_sensing_forward.1} parent=27 // pred_region
        %s5637 = smul.u32 2, %s13
      $region32: #{matrix_sensing_forward.1} parent=27 // pred_fallthru
        _
    $region28: #{matrix_sensing_forward.1} parent=5 // pred_fallthru
      _
    %p5638 = scmp.le.s32.totalorder 2, %s8
    // Predicated region
    $region33: #{matrix_sensing_forward.1} parent=5 // pred_check
      %p5639 = pneg %p5638
    $region34: #{matrix_sensing_forward.1} parent=5 // pred_check_branch
      %5641 = sbr.rel (%p5639) target = $region36
    $region35: #{matrix_sensing_forward.1} parent=5 // pred_region
      %s5642 = ssub.s32 %s8, 2
      // Predicated region
      $region37: #{matrix_sensing_forward.1} parent=35 // pred_check
        %p5643 = pneg %p84
      $region38: #{matrix_sensing_forward.1} parent=35 // pred_check_branch
        %5645 = sbr.rel (%p5643) target = $region40
      $region39: #{matrix_sensing_forward.1} parent=35 // pred_region
        %s5646 = smul.u32 2, %s14
        %p5647 = scmp.lt.s32.totalorder %s5646, 3
        %s5648 = scalar_select %p5647, %s5646, 3
        %s5649 = scalar_lea.vmem %s2, %s5648
      $region40: #{matrix_sensing_forward.1} parent=35 // pred_fallthru
        _
    $region36: #{matrix_sensing_forward.1} parent=5 // pred_fallthru
      _
  $region6: #{matrix_sensing_forward.1} parent=0 // loop_footer
    %s12 = sadd.s32 1, %s8
  $region7: #{matrix_sensing_forward.1} parent=0 // loop_footer_branch
    %7 = sbr.rel target = $region3
  $region8: #{matrix_sensing_forward.1} parent=0 // loop_exit
    _

</llo_original>
